<compile_context>
chip_gen: v6e
topology: v6e:2x2x1
jax: 0.10.0
libtpu: 0.0.40
codegen_flags: <defaults>
</compile_context>

<pallas_src>
import functools

import jax
import jax.numpy as jnp
import numpy as np
from jax.experimental import pallas as pl
from jax.experimental.pallas import tpu as pltpu

# Strict f32 matmul semantics for the reference / preprocessing (kernel dots
# request HIGHEST explicitly).
jax.config.update("jax_default_matmul_precision", "highest")

SMOOTH_D = 0.1
EPS = 0.001
_HP = jax.lax.Precision.HIGHEST


def _round_up(a, b):
    return -(-a // b) * b


def _smooth_relu(v, d):
    # (2*d*r^3 - r^4) / (2*d^3) == r^2 * (a*r - b*r^2), a = 1/d^2, b = 1/(2*d^3).
    # Compare on v (equivalent to r < d for d > 0) so the cmp/select decouples
    # from the max dependency chain.
    r = jnp.maximum(v, 0.0)
    r2 = r * r
    cubic = r2 * ((1.0 / d ** 2) * r - (1.0 / (2.0 * d ** 3)) * r2)
    return jnp.where(v < d, cubic, v - 0.5 * d)


def lyapunov_kernel(xt_ref, wf_ref, spu1_ref, g0_ref,
                    cw2_ref, cb2_ref, cw3_ref, cb3_ref,
                    out1_ref, out2_ref, *, d, eps):
    L = g0_ref.shape[0]          # ICNN layer size (64)
    H = cw2_ref.shape[0]         # control hidden dim
    D = xt_ref.shape[0] - 1      # state dim; last row of xt is the ones row

    xt_aug = xt_ref[...]         # (D+1, TN): [x^T ; 1], feature-major tile
    x = xt_aug[:D, :]            # (D, TN)

    # Fused first layer: [W0|b0 ; W1|b1 ; cW1|cb1] @ [x ; 1] -> one MXU pass;
    # the bias adds ride on the (idle) MXU instead of the saturated VALU slot.
    pre = jnp.dot(wf_ref[...], xt_aug, precision=_HP,
                  preferred_element_type=jnp.float32)        # (2L+H, TN)

    # ---- ICNN (feature-major, same orientation as torch).
    z0 = _smooth_relu(pre[:L, :], d)
    z1 = _smooth_relu(
        pre[L:2 * L, :] + jnp.dot(spu1_ref[...], z0, precision=_HP,
                                  preferred_element_type=jnp.float32), d)
    sumsq = jnp.sum(x * x, axis=0, keepdims=True)            # (1, TN)
    # g0 (= ICNN(0), batch independent) is precomputed in the wrapper.
    out1_ref[...] = _smooth_relu(z1 - g0_ref[...], d) + eps * sumsq

    # ---- ControlNet (layer 1 fused above): ReLU -> Linear -> ReLU -> Linear.
    h1 = jnp.maximum(pre[2 * L:, :], 0.0)                    # (H, TN)
    h2 = jnp.maximum(
        jnp.dot(cw2_ref[...], h1, precision=_HP,
                preferred_element_type=jnp.float32) + cb2_ref[...], 0.0)
    u = (jnp.dot(cw3_ref[...], h2, precision=_HP,
                 preferred_element_type=jnp.float32) + cb3_ref[...])
    out2_ref[...] = u * x                                     # (O, TN), O == D


def preprocess_params(params, *, d=SMOOTH_D):
    """Per-parameter-set preprocessing. Call once and cache (not per forward)."""
    (W0, b0, W1, b1, U1, cW1, cb1, cW2, cb2, cW3, cb3) = params
    assert d > 0.0, "smooth_relu threshold d must be > 0"
    L, D = W0.shape
    H = cW1.shape[0]
    O = cW3.shape[0]
    assert O == D, "u * x requires n_output == n_input"
    f32 = lambda a: jnp.asarray(a, jnp.float32)
    # Fused first-layer weight, biases folded in as an extra column (ones row
    # of x^T supplies the 1s):  rows = [W0 ; W1 ; cW1], cols = [D features | bias].
    WF = jnp.concatenate([
        jnp.concatenate([f32(W0), f32(b0)], axis=1),
        jnp.concatenate([f32(W1), f32(b1)], axis=1),
        jnp.concatenate([f32(cW1), f32(cb1).reshape(H, 1)], axis=1),
    ], axis=0)                                                # (2L+H, D+1)
    SPU1 = jax.nn.softplus(f32(U1))                           # (L, L)
    g0 = _smooth_relu(f32(b1) + SPU1 @ _smooth_relu(f32(b0), d), d)  # ICNN(0)
    return (WF, SPU1, g0, f32(cW2), f32(cb2).reshape(H, 1),
            f32(cW3), f32(cb3).reshape(O, 1))


@functools.partial(jax.jit, static_argnames=("d", "eps", "tn"))
def lyapunov_forward(x, prep, *, d=SMOOTH_D, eps=EPS, tn=4096):
    WF, SPU1, g0, cW2, cb2c, cW3, cb3c = prep
    N, D = x.shape
    L = g0.shape[0]
    H = cW2.shape[0]
    O = cW3.shape[0]

    # Batch tile on the 128-lane axis. Large tiles amortize the ~0.35 us/step
    # grid overhead; cap so the grid keeps >= 2 steps (v7x megacore needs both
    # TensorCores fed). tn=4096 stays well inside v5e's 16 MiB default scoped
    # VMEM; the explicit limit below gives headroom when sweeping tn upward.
    tn_cap = max(128, _round_up(-(-N // 2), 128))
    tn_eff = _round_up(max(128, min(tn, tn_cap)), 128)
    n_pad = _round_up(N, tn_eff)

    # Feature-major [x^T ; 1]: batch on the lane axis (lane-dense stores), the
    # ones row carries the fused bias column. Padded columns are zero and get
    # sliced off below.
    xt = jnp.concatenate(
        [x.astype(jnp.float32), jnp.ones((N, 1), jnp.float32)], axis=1).T
    if n_pad != N:
        xt = jnp.pad(xt, ((0, 0), (0, n_pad - N)))

    tile = lambda i: (0, i)       # batch-tiled arrays
    full = lambda i: (0, 0)       # weights: resident across all grid steps

    kernel = functools.partial(lyapunov_kernel, d=d, eps=eps)
    out1, out2t = pl.pallas_call(
        kernel,
        out_shape=(jax.ShapeDtypeStruct((L, n_pad), jnp.float32),
                   jax.ShapeDtypeStruct((O, n_pad), jnp.float32)),
        grid_spec=pltpu.PrefetchScalarGridSpec(
            num_scalar_prefetch=0,
            grid=(n_pad // tn_eff,),
            in_specs=[
                pl.BlockSpec((D + 1, tn_eff), tile),      # [x^T ; 1]
                pl.BlockSpec((2 * L + H, D + 1), full),   # [W0|b0; W1|b1; cW1|cb1]
                pl.BlockSpec((L, L), full),               # softplus(U1)
                pl.BlockSpec((L, 1), full),               # g0 = ICNN(0)
                pl.BlockSpec((H, H), full),               # cW2
                pl.BlockSpec((H, 1), full),               # cb2
                pl.BlockSpec((O, H), full),               # cW3
                pl.BlockSpec((O, 1), full),               # cb3
            ],
            out_specs=(pl.BlockSpec((L, tn_eff), tile),
                       pl.BlockSpec((O, tn_eff), tile)),
        ),
        compiler_params=pltpu.CompilerParams(
            dimension_semantics=("parallel",),
            vmem_limit_bytes=48 * 1024 * 1024),
    )(xt, WF, SPU1, g0, cW2, cb2c, cW3, cb3c)

    # out1 is already in torch's (layer_size, N) layout; out2 is kept
    # lane-dense (O, N) in-kernel -- drop the small .T below if the consumer
    # accepts feature-major u*x.
    return out1[:, :N], out2t[:, :N].T


# ------------------------- deterministic parameters -------------------------
def _xavier_normal(key, shape):
    fan_out, fan_in = shape[0], int(np.prod(shape[1:]))
    std = float(np.sqrt(2.0 / (fan_in + fan_out)))
    return std * jax.random.normal(key, shape, dtype=jnp.float32)


def _linear_init(key, out_f, in_f):
    kw, kb = jax.random.split(key)
    bound = 1.0 / float(np.sqrt(in_f))
    w = jax.random.uniform(kw, (out_f, in_f), jnp.float32, -bound, bound)
    b = jax.random.uniform(kb, (out_f,), jnp.float32, -bound, bound)
    return w, b


def make_params(key, n_input, n_hidden, n_output, input_shape, layer_sizes):
    keys = jax.random.split(key, 10)
    D = int(np.prod(input_shape))
    L0, L1 = layer_sizes
    W0 = _xavier_normal(keys[0], (L0, D))
    b0 = _xavier_normal(keys[1], (L0, 1))
    W1 = _xavier_normal(keys[2], (L1, D))
    b1 = _xavier_normal(keys[3], (L1, 1))
    U1 = _xavier_normal(keys[4], (L1, L0))
    cW1, cb1 = _linear_init(keys[5], n_hidden, n_input)
    cW2, cb2 = _linear_init(keys[6], n_hidden, n_hidden)
    cW3, cb3 = _linear_init(keys[7], n_output, n_hidden)
    return (W0, b0, W1, b1, U1, cW1, cb1, cW2, cb2, cW3, cb3)


# ------------------------------ pure-JAX reference ---------------------------
def reference_forward(x, params, *, d=SMOOTH_D, eps=EPS):
    W0, b0, W1, b1, U1, cW1, cb1, cW2, cb2, cW3, cb3 = params

    def sr(v):
        r = jnp.maximum(v, 0.0)
        sq = (2 * d * r ** 3 - r ** 4) / (2 * d ** 3)
        return jnp.where(r < d, sq, v - d / 2)

    def icnn(xx):
        xt = xx.T                                   # (D, N)
        z = sr(W0 @ xt + b0)
        z = sr(W1 @ xt + b1 + jax.nn.softplus(U1) @ z)
        return z                                    # (64, N)

    g, g0 = icnn(x), icnn(jnp.zeros_like(x))
    h1 = jax.nn.relu(x @ cW1.T + cb1)
    h2 = jax.nn.relu(h1 @ cW2.T + cb2)
    u = h2 @ cW3.T + cb3
    out1 = sr(g - g0) + eps * jnp.sum(x ** 2, axis=1)  # (64,N) + (N,) broadcast
    return out1, u * x


if __name__ == "__main__":
    # Small shapes consistent with the module: state dim 4, hidden 32,
    # layer_sizes [64, 64]. N=300 exercises a 2-step grid plus padding.
    N, D, H = 300, 4, 32
    n_input, n_hidden, n_output = D, H, D
    input_shape = (D,)
    layer_sizes = [64, 64]

    key = jax.random.PRNGKey(0)
    kx, kp = jax.random.split(key)
    x = jax.random.normal(kx, (N, D), dtype=jnp.float32)
    params = make_params(kp, n_input, n_hidden, n_output, input_shape,
                         layer_sizes)

    prep = preprocess_params(params)          # once per parameter set (cacheable)
    out1, out2 = lyapunov_forward(x, prep)
    out1, out2 = jax.block_until_ready((out1, out2))

    ref1, ref2 = reference_forward(x, params)
    assert out1.shape == (layer_sizes[-1], N) and out2.shape == (N, n_output)
    np.testing.assert_allclose(np.asarray(out1), np.asarray(ref1),
                               rtol=1e-4, atol=1e-5)
    np.testing.assert_allclose(np.asarray(out2), np.asarray(ref2),
                               rtol=1e-4, atol=1e-5)
    print("KERNEL_OK")
</pallas_src>

<mosaic_0001>
module attributes {stable_mosaic.version = 11 : i64} {
  func.func @lyapunov_kernel(%arg0: i32, %arg1: memref<5x256xf32, #tpu.memory_space<vmem>>, %arg2: memref<160x5xf32, #tpu.memory_space<vmem>>, %arg3: memref<64x64xf32, #tpu.memory_space<vmem>>, %arg4: memref<64x1xf32, #tpu.memory_space<vmem>>, %arg5: memref<32x32xf32, #tpu.memory_space<vmem>>, %arg6: memref<32x1xf32, #tpu.memory_space<vmem>>, %arg7: memref<4x32xf32, #tpu.memory_space<vmem>>, %arg8: memref<4x1xf32, #tpu.memory_space<vmem>>, %arg9: memref<64x256xf32, #tpu.memory_space<vmem>>, %arg10: memref<4x256xf32, #tpu.memory_space<vmem>>) attributes {dimension_semantics = [#tpu.dimension_semantics<parallel>], iteration_bounds = array<i64: 2>, scalar_prefetch = 0 : i64, scratch_operands = 0 : i64, tpu.core_type = #tpu.core_type<tc>, window_params = [{transform_indices = @transform_0, window_bounds = array<i64: 5, 256>}, {pipeline_mode = #tpu.pipeline_mode<synchronous>, transform_indices = @transform_1, window_bounds = array<i64: 160, 5>}, {pipeline_mode = #tpu.pipeline_mode<synchronous>, transform_indices = @transform_2, window_bounds = array<i64: 64, 64>}, {pipeline_mode = #tpu.pipeline_mode<synchronous>, transform_indices = @transform_3, window_bounds = array<i64: 64, 1>}, {pipeline_mode = #tpu.pipeline_mode<synchronous>, transform_indices = @transform_4, window_bounds = array<i64: 32, 32>}, {pipeline_mode = #tpu.pipeline_mode<synchronous>, transform_indices = @transform_5, window_bounds = array<i64: 32, 1>}, {pipeline_mode = #tpu.pipeline_mode<synchronous>, transform_indices = @transform_6, window_bounds = array<i64: 4, 32>}, {pipeline_mode = #tpu.pipeline_mode<synchronous>, transform_indices = @transform_7, window_bounds = array<i64: 4, 1>}, {transform_indices = @transform_8, window_bounds = array<i64: 64, 256>}, {transform_indices = @transform_9, window_bounds = array<i64: 4, 256>}]} {
    %c0 = arith.constant 0 : index
    %c0_0 = arith.constant 0 : index
    %0 = vector.load %arg1[%c0, %c0_0] : memref<5x256xf32, #tpu.memory_space<vmem>>, vector<5x256xf32>
    %1 = vector.extract_strided_slice %0 {offsets = [0, 0], sizes = [4, 256], strides = [1, 1]} : vector<5x256xf32> to vector<4x256xf32>
    %c0_1 = arith.constant 0 : index
    %c0_2 = arith.constant 0 : index
    %2 = vector.load %arg2[%c0_1, %c0_2] : memref<160x5xf32, #tpu.memory_space<vmem>>, vector<160x5xf32>
    %cst = arith.constant dense<0.000000e+00> : vector<160x256xf32>
    %3 = tpu.matmul %2, %0, %cst {dimension_numbers = #tpu.dot_dimension_numbers<[1], [0], [0], [1], [0, 0, 1, 1], [], []>, precision = #tpu.contract_precision<fp32>} : vector<160x5xf32>, vector<5x256xf32>, vector<160x256xf32> -> vector<160x256xf32>
    %4 = vector.extract_strided_slice %3 {offsets = [0, 0], sizes = [64, 256], strides = [1, 1]} : vector<160x256xf32> to vector<64x256xf32>
    %cst_3 = arith.constant 0.000000e+00 : f32
    %5 = vector.broadcast %cst_3 : f32 to vector<64x256xf32>
    %6 = arith.maximumf %4, %5 : vector<64x256xf32>
    %7 = arith.mulf %6, %6 : vector<64x256xf32>
    %cst_4 = arith.constant 1.000000e+02 : f32
    %8 = vector.broadcast %cst_4 : f32 to vector<64x256xf32>
    %9 = arith.mulf %8, %6 : vector<64x256xf32>
    %cst_5 = arith.constant 5.000000e+02 : f32
    %10 = vector.broadcast %cst_5 : f32 to vector<64x256xf32>
    %11 = arith.mulf %10, %7 : vector<64x256xf32>
    %12 = arith.subf %9, %11 : vector<64x256xf32>
    %13 = arith.mulf %7, %12 : vector<64x256xf32>
    %cst_6 = arith.constant 1.000000e-01 : f32
    %14 = vector.broadcast %cst_6 : f32 to vector<64x256xf32>
    %15 = arith.cmpf olt, %4, %14 : vector<64x256xf32>
    %cst_7 = arith.constant 5.000000e-02 : f32
    %16 = vector.broadcast %cst_7 : f32 to vector<64x256xf32>
    %17 = arith.subf %4, %16 : vector<64x256xf32>
    %18 = arith.select %15, %13, %17 : vector<64x256xi1>, vector<64x256xf32>
    %19 = vector.extract_strided_slice %3 {offsets = [64, 0], sizes = [64, 256], strides = [1, 1]} : vector<160x256xf32> to vector<64x256xf32>
    %c0_8 = arith.constant 0 : index
    %c0_9 = arith.constant 0 : index
    %20 = vector.load %arg3[%c0_8, %c0_9] : memref<64x64xf32, #tpu.memory_space<vmem>>, vector<64x64xf32>
    %cst_10 = arith.constant dense<0.000000e+00> : vector<64x256xf32>
    %21 = tpu.matmul %20, %18, %cst_10 {dimension_numbers = #tpu.dot_dimension_numbers<[1], [0], [0], [1], [0, 0, 1, 1], [], []>, precision = #tpu.contract_precision<fp32>} : vector<64x64xf32>, vector<64x256xf32>, vector<64x256xf32> -> vector<64x256xf32>
    %22 = arith.addf %19, %21 : vector<64x256xf32>
    %cst_11 = arith.constant 0.000000e+00 : f32
    %23 = vector.broadcast %cst_11 : f32 to vector<64x256xf32>
    %24 = arith.maximumf %22, %23 : vector<64x256xf32>
    %25 = arith.mulf %24, %24 : vector<64x256xf32>
    %cst_12 = arith.constant 1.000000e+02 : f32
    %26 = vector.broadcast %cst_12 : f32 to vector<64x256xf32>
    %27 = arith.mulf %26, %24 : vector<64x256xf32>
    %cst_13 = arith.constant 5.000000e+02 : f32
    %28 = vector.broadcast %cst_13 : f32 to vector<64x256xf32>
    %29 = arith.mulf %28, %25 : vector<64x256xf32>
    %30 = arith.subf %27, %29 : vector<64x256xf32>
    %31 = arith.mulf %25, %30 : vector<64x256xf32>
    %cst_14 = arith.constant 1.000000e-01 : f32
    %32 = vector.broadcast %cst_14 : f32 to vector<64x256xf32>
    %33 = arith.cmpf olt, %22, %32 : vector<64x256xf32>
    %cst_15 = arith.constant 5.000000e-02 : f32
    %34 = vector.broadcast %cst_15 : f32 to vector<64x256xf32>
    %35 = arith.subf %22, %34 : vector<64x256xf32>
    %36 = arith.select %33, %31, %35 : vector<64x256xi1>, vector<64x256xf32>
    %37 = arith.mulf %1, %1 : vector<4x256xf32>
    %cst_16 = arith.constant dense<0.000000e+00> : vector<256xf32>
    %38 = vector.multi_reduction <add>, %37, %cst_16 [0] : vector<4x256xf32> to vector<256xf32>
    %39 = vector.shape_cast %38 : vector<256xf32> to vector<1x256xf32>
    %c0_17 = arith.constant 0 : index
    %c0_18 = arith.constant 0 : index
    %40 = vector.load %arg4[%c0_17, %c0_18] : memref<64x1xf32, #tpu.memory_space<vmem>>, vector<64x1xf32>
    %41 = vector.broadcast %40 : vector<64x1xf32> to vector<64x256xf32>
    %42 = arith.subf %36, %41 : vector<64x256xf32>
    %cst_19 = arith.constant 0.000000e+00 : f32
    %43 = vector.broadcast %cst_19 : f32 to vector<64x256xf32>
    %44 = arith.maximumf %42, %43 : vector<64x256xf32>
    %45 = arith.mulf %44, %44 : vector<64x256xf32>
    %cst_20 = arith.constant 1.000000e+02 : f32
    %46 = vector.broadcast %cst_20 : f32 to vector<64x256xf32>
    %47 = arith.mulf %46, %44 : vector<64x256xf32>
    %cst_21 = arith.constant 5.000000e+02 : f32
    %48 = vector.broadcast %cst_21 : f32 to vector<64x256xf32>
    %49 = arith.mulf %48, %45 : vector<64x256xf32>
    %50 = arith.subf %47, %49 : vector<64x256xf32>
    %51 = arith.mulf %45, %50 : vector<64x256xf32>
    %cst_22 = arith.constant 1.000000e-01 : f32
    %52 = vector.broadcast %cst_22 : f32 to vector<64x256xf32>
    %53 = arith.cmpf olt, %42, %52 : vector<64x256xf32>
    %cst_23 = arith.constant 5.000000e-02 : f32
    %54 = vector.broadcast %cst_23 : f32 to vector<64x256xf32>
    %55 = arith.subf %42, %54 : vector<64x256xf32>
    %56 = arith.select %53, %51, %55 : vector<64x256xi1>, vector<64x256xf32>
    %cst_24 = arith.constant 1.000000e-03 : f32
    %57 = vector.broadcast %cst_24 : f32 to vector<1x256xf32>
    %58 = arith.mulf %57, %39 : vector<1x256xf32>
    %59 = vector.broadcast %58 : vector<1x256xf32> to vector<64x256xf32>
    %60 = arith.addf %56, %59 : vector<64x256xf32>
    %c0_25 = arith.constant 0 : index
    %c0_26 = arith.constant 0 : index
    %61 = vector.load %arg9[%c0_25, %c0_26] : memref<64x256xf32, #tpu.memory_space<vmem>>, vector<64x256xf32>
    tpu.vector_store %arg9[%c0_25, %c0_26], %60 {strides = array<i32>} : memref<64x256xf32, #tpu.memory_space<vmem>>, vector<64x256xf32>,
    %62 = vector.extract_strided_slice %3 {offsets = [128, 0], sizes = [32, 256], strides = [1, 1]} : vector<160x256xf32> to vector<32x256xf32>
    %cst_27 = arith.constant 0.000000e+00 : f32
    %63 = vector.broadcast %cst_27 : f32 to vector<32x256xf32>
    %64 = arith.maximumf %62, %63 : vector<32x256xf32>
    %c0_28 = arith.constant 0 : index
    %c0_29 = arith.constant 0 : index
    %65 = vector.load %arg5[%c0_28, %c0_29] : memref<32x32xf32, #tpu.memory_space<vmem>>, vector<32x32xf32>
    %cst_30 = arith.constant dense<0.000000e+00> : vector<32x256xf32>
    %66 = tpu.matmul %65, %64, %cst_30 {dimension_numbers = #tpu.dot_dimension_numbers<[1], [0], [0], [1], [0, 0, 1, 1], [], []>, precision = #tpu.contract_precision<fp32>} : vector<32x32xf32>, vector<32x256xf32>, vector<32x256xf32> -> vector<32x256xf32>
    %c0_31 = arith.constant 0 : index
    %c0_32 = arith.constant 0 : index
    %67 = vector.load %arg6[%c0_31, %c0_32] : memref<32x1xf32, #tpu.memory_space<vmem>>, vector<32x1xf32>
    %68 = vector.broadcast %67 : vector<32x1xf32> to vector<32x256xf32>
    %69 = arith.addf %66, %68 : vector<32x256xf32>
    %cst_33 = arith.constant 0.000000e+00 : f32
    %70 = vector.broadcast %cst_33 : f32 to vector<32x256xf32>
    %71 = arith.maximumf %69, %70 : vector<32x256xf32>
    %c0_34 = arith.constant 0 : index
    %c0_35 = arith.constant 0 : index
    %72 = vector.load %arg7[%c0_34, %c0_35] : memref<4x32xf32, #tpu.memory_space<vmem>>, vector<4x32xf32>
    %cst_36 = arith.constant dense<0.000000e+00> : vector<4x256xf32>
    %73 = tpu.matmul %72, %71, %cst_36 {dimension_numbers = #tpu.dot_dimension_numbers<[1], [0], [0], [1], [0, 0, 1, 1], [], []>, precision = #tpu.contract_precision<fp32>} : vector<4x32xf32>, vector<32x256xf32>, vector<4x256xf32> -> vector<4x256xf32>
    %c0_37 = arith.constant 0 : index
    %c0_38 = arith.constant 0 : index
    %74 = vector.load %arg8[%c0_37, %c0_38] : memref<4x1xf32, #tpu.memory_space<vmem>>, vector<4x1xf32>
    %75 = vector.broadcast %74 : vector<4x1xf32> to vector<4x256xf32>
    %76 = arith.addf %73, %75 : vector<4x256xf32>
    %77 = arith.mulf %76, %1 : vector<4x256xf32>
    %c0_39 = arith.constant 0 : index
    %c0_40 = arith.constant 0 : index
    %78 = vector.load %arg10[%c0_39, %c0_40] : memref<4x256xf32, #tpu.memory_space<vmem>>, vector<4x256xf32>
    tpu.vector_store %arg10[%c0_39, %c0_40], %77 {strides = array<i32>} : memref<4x256xf32, #tpu.memory_space<vmem>>, vector<4x256xf32>,
    return
  }
  func.func @transform_0(%arg0: i32) -> (i32, i32) {
    %c0_i32 = arith.constant 0 : i32
    %c0_i32_0 = arith.constant 0 : i32
    return %c0_i32, %arg0 : i32, i32
  }
  func.func @transform_1(%arg0: i32) -> (i32, i32) {
    %c0_i32 = arith.constant 0 : i32
    %c0_i32_0 = arith.constant 0 : i32
    %c0_i32_1 = arith.constant 0 : i32
    return %c0_i32, %c0_i32_0 : i32, i32
  }
  func.func @transform_2(%arg0: i32) -> (i32, i32) {
    %c0_i32 = arith.constant 0 : i32
    %c0_i32_0 = arith.constant 0 : i32
    %c0_i32_1 = arith.constant 0 : i32
    return %c0_i32, %c0_i32_0 : i32, i32
  }
  func.func @transform_3(%arg0: i32) -> (i32, i32) {
    %c0_i32 = arith.constant 0 : i32
    %c0_i32_0 = arith.constant 0 : i32
    %c0_i32_1 = arith.constant 0 : i32
    return %c0_i32, %c0_i32_0 : i32, i32
  }
  func.func @transform_4(%arg0: i32) -> (i32, i32) {
    %c0_i32 = arith.constant 0 : i32
    %c0_i32_0 = arith.constant 0 : i32
    %c0_i32_1 = arith.constant 0 : i32
    return %c0_i32, %c0_i32_0 : i32, i32
  }
  func.func @transform_5(%arg0: i32) -> (i32, i32) {
    %c0_i32 = arith.constant 0 : i32
    %c0_i32_0 = arith.constant 0 : i32
    %c0_i32_1 = arith.constant 0 : i32
    return %c0_i32, %c0_i32_0 : i32, i32
  }
  func.func @transform_6(%arg0: i32) -> (i32, i32) {
    %c0_i32 = arith.constant 0 : i32
    %c0_i32_0 = arith.constant 0 : i32
    %c0_i32_1 = arith.constant 0 : i32
    return %c0_i32, %c0_i32_0 : i32, i32
  }
  func.func @transform_7(%arg0: i32) -> (i32, i32) {
    %c0_i32 = arith.constant 0 : i32
    %c0_i32_0 = arith.constant 0 : i32
    %c0_i32_1 = arith.constant 0 : i32
    return %c0_i32, %c0_i32_0 : i32, i32
  }
  func.func @transform_8(%arg0: i32) -> (i32, i32) {
    %c0_i32 = arith.constant 0 : i32
    %c0_i32_0 = arith.constant 0 : i32
    return %c0_i32, %arg0 : i32, i32
  }
  func.func @transform_9(%arg0: i32) -> (i32, i32) {
    %c0_i32 = arith.constant 0 : i32
    %c0_i32_0 = arith.constant 0 : i32
    return %c0_i32, %arg0 : i32, i32
  }
}

</mosaic_0001>

<llo_original>
// kernel: lyapunov_forward.1
$region0: #{lyapunov_forward.1}
  #allocation0 [shape = 'u32[]', space=smem, size = 0x4, offset = 0x4, fixed_abs, tag = 'smem constant byte address 0x4 - core index']
  #allocation1 [shape = 'u32[144,128]{1,0:T(1,128)}', space=vmem, size = 0x12000, scoped, tag = 'internal scratch']
  %s0 = inlined_call_operand.vmem [shape: f32[5,512], index: 0, kind: input, shape index: {}]
  %s1 = inlined_call_operand.vmem [shape: f32[160,5], index: 1, kind: input, shape index: {}]
  %s2 = inlined_call_operand.vmem [shape: f32[64,64], index: 2, kind: input, shape index: {}]
  %s3 = inlined_call_operand.vmem [shape: f32[64,1], index: 3, kind: input, shape index: {}]
  %s4 = inlined_call_operand.vmem [shape: f32[32,32], index: 4, kind: input, shape index: {}]
  %s5 = inlined_call_operand.vmem [shape: f32[32,1], index: 5, kind: input, shape index: {}]
  %s6 = inlined_call_operand.vmem [shape: f32[4,32], index: 6, kind: input, shape index: {}]
  %s7 = inlined_call_operand.vmem [shape: f32[4,1], index: 7, kind: input, shape index: {}]
  %s8 = inlined_call_operand.vmem [shape: f32[64,512], index: 8, kind: output, shape index: {0}]
  %s9 = inlined_call_operand.vmem [shape: f32[4,512], index: 9, kind: output, shape index: {1}]
  %10 = xla_tuple %s8, %s9
  %s11 = sld [smem:[#allocation0]]
  $region92: #{lyapunov_forward.1} parent=0
    _
  %s13 = ssub.s32 1, %s11
  %s14 = scalar_select 0, %s13, %s11
  $region1: #{lyapunov_forward.1} parent=0
    #allocation2 [shape = 'u8[131072]{0}', space=vmem, size = 0x20000, scoped, tag = 'output window, operand 0']
    loop: start=0, step=1, limit=4
    $region2: #{lyapunov_forward.1} parent=1 // loop_pre_header
      _
    $region3: #{lyapunov_forward.1} parent=1 // loop_header
      %s16 = sphi 0, %s20
      %p17 = scmp.ge.s32.totalorder %s16, 4
      %s26 = sphi 0, %s28
      %s29 = sphi 0, %s26
      %s30 = sphi 0, %s29
      %s46 = sphi 0, %s30
      %s50 = sphi 0, %s50
      %s52 = sphi 0, %s50
      %s53 = sphi 0, %s52
      %s67 = sphi 0, %s53
      %s71 = sphi 0, %s71
      %s73 = sphi 0, %s71
      %s74 = sphi 0, %s73
      %s88 = sphi 0, %s74
      %s92 = sphi 0, %s92
      %s94 = sphi 0, %s92
      %s95 = sphi 0, %s94
      %s109 = sphi 0, %s95
      %s113 = sphi 0, %s113
      %s115 = sphi 0, %s113
      %s116 = sphi 0, %s115
      %s130 = sphi 0, %s116
      %s134 = sphi 0, %s134
      %s136 = sphi 0, %s134
      %s137 = sphi 0, %s136
      %s151 = sphi 0, %s137
      %s155 = sphi 0, %s155
      %s157 = sphi 0, %s155
      %s158 = sphi 0, %s157
      %s172 = sphi 0, %s158
      %s176 = sphi 0, %s176
      %s178 = sphi 0, %s176
      %s179 = sphi 0, %s178
      %s193 = sphi 0, %s179
      %s199 = sphi 0, %s201
      %s202 = sphi 0, %s199
      %s203 = sphi 0, %s202
      %s219 = sphi 0, %s203
      %s225 = sphi 0, %s227
      %s228 = sphi 0, %s225
      %s229 = sphi 0, %s228
      %s245 = sphi 0, %s229
    $region4: #{lyapunov_forward.1} parent=1 // loop_header_branch
      %19 = sbr.rel (%p17) target = $region8
    $region5: #{lyapunov_forward.1} parent=1 // loop_body
      %s21 = ssub.s32 %s16, 1
      %s22 = ssub.s32 %s16, 2
      %s23 = sadd.s32 %s16, 1
      %s24 = ssub.s32 %s16, %s23
      %p25 = scmp.eq.s32.totalorder %s24, 0
      %s27 = sadd.s32 %s26, 1
      %s28 = scalar_select %p25, %s26, %s27
      %p31 = pneg %p25
      %p32 = scmp.eq.s32.totalorder %s16, 1
      %p33 = por %p31, %p32
      %p34 = scmp.ne.s32.totalorder %s26, %s29
      %p35 = scmp.eq.s32.totalorder %s16, 0
      %p36 = por %p34, %p35
      %p37 = scmp.ne.s32.totalorder %s26, %s29
      %p38 = scmp.eq.s32.totalorder %s21, 1
      %p39 = por %p37, %p38
      %p40 = scmp.ne.s32.totalorder %s29, %s30
      %p41 = scmp.eq.s32.totalorder %s21, 0
      %p42 = por %p40, %p41
      %p43 = scmp.ne.s32.totalorder %s29, %s30
      %p44 = scmp.eq.s32.totalorder %s22, 1
      %p45 = por %p43, %p44
      %p47 = scmp.ne.s32.totalorder %s30, %s46
      %p48 = scmp.eq.s32.totalorder %s22, 0
      %p49 = por %p47, %p48
      %s51 = sadd.s32 %s50, 1
      %p54 = scmp.eq.s32.totalorder %s16, 1
      %p55 = scmp.ne.s32.totalorder %s50, %s52
      %p56 = scmp.eq.s32.totalorder %s16, 0
      %p57 = por %p55, %p56
      %p58 = scmp.ne.s32.totalorder %s50, %s52
      %p59 = scmp.eq.s32.totalorder %s21, 1
      %p60 = por %p58, %p59
      %p61 = scmp.ne.s32.totalorder %s52, %s53
      %p62 = scmp.eq.s32.totalorder %s21, 0
      %p63 = por %p61, %p62
      %p64 = scmp.ne.s32.totalorder %s52, %s53
      %p65 = scmp.eq.s32.totalorder %s22, 1
      %p66 = por %p64, %p65
      %p68 = scmp.ne.s32.totalorder %s53, %s67
      %p69 = scmp.eq.s32.totalorder %s22, 0
      %p70 = por %p68, %p69
      %s72 = sadd.s32 %s71, 1
      %p75 = scmp.eq.s32.totalorder %s16, 1
      %p76 = scmp.ne.s32.totalorder %s71, %s73
      %p77 = scmp.eq.s32.totalorder %s16, 0
      %p78 = por %p76, %p77
      %p79 = scmp.ne.s32.totalorder %s71, %s73
      %p80 = scmp.eq.s32.totalorder %s21, 1
      %p81 = por %p79, %p80
      %p82 = scmp.ne.s32.totalorder %s73, %s74
      %p83 = scmp.eq.s32.totalorder %s21, 0
      %p84 = por %p82, %p83
      %p85 = scmp.ne.s32.totalorder %s73, %s74
      %p86 = scmp.eq.s32.totalorder %s22, 1
      %p87 = por %p85, %p86
      %p89 = scmp.ne.s32.totalorder %s74, %s88
      %p90 = scmp.eq.s32.totalorder %s22, 0
      %p91 = por %p89, %p90
      %s93 = sadd.s32 %s92, 1
      %p96 = scmp.eq.s32.totalorder %s16, 1
      %p97 = scmp.ne.s32.totalorder %s92, %s94
      %p98 = scmp.eq.s32.totalorder %s16, 0
      %p99 = por %p97, %p98
      %p100 = scmp.ne.s32.totalorder %s92, %s94
      %p101 = scmp.eq.s32.totalorder %s21, 1
      %p102 = por %p100, %p101
      %p103 = scmp.ne.s32.totalorder %s94, %s95
      %p104 = scmp.eq.s32.totalorder %s21, 0
      %p105 = por %p103, %p104
      %p106 = scmp.ne.s32.totalorder %s94, %s95
      %p107 = scmp.eq.s32.totalorder %s22, 1
      %p108 = por %p106, %p107
      %p110 = scmp.ne.s32.totalorder %s95, %s109
      %p111 = scmp.eq.s32.totalorder %s22, 0
      %p112 = por %p110, %p111
      %s114 = sadd.s32 %s113, 1
      %p117 = scmp.eq.s32.totalorder %s16, 1
      %p118 = scmp.ne.s32.totalorder %s113, %s115
      %p119 = scmp.eq.s32.totalorder %s16, 0
      %p120 = por %p118, %p119
      %p121 = scmp.ne.s32.totalorder %s113, %s115
      %p122 = scmp.eq.s32.totalorder %s21, 1
      %p123 = por %p121, %p122
      %p124 = scmp.ne.s32.totalorder %s115, %s116
      %p125 = scmp.eq.s32.totalorder %s21, 0
      %p126 = por %p124, %p125
      %p127 = scmp.ne.s32.totalorder %s115, %s116
      %p128 = scmp.eq.s32.totalorder %s22, 1
      %p129 = por %p127, %p128
      %p131 = scmp.ne.s32.totalorder %s116, %s130
      %p132 = scmp.eq.s32.totalorder %s22, 0
      %p133 = por %p131, %p132
      %s135 = sadd.s32 %s134, 1
      %p138 = scmp.eq.s32.totalorder %s16, 1
      %p139 = scmp.ne.s32.totalorder %s134, %s136
      %p140 = scmp.eq.s32.totalorder %s16, 0
      %p141 = por %p139, %p140
      %p142 = scmp.ne.s32.totalorder %s134, %s136
      %p143 = scmp.eq.s32.totalorder %s21, 1
      %p144 = por %p142, %p143
      %p145 = scmp.ne.s32.totalorder %s136, %s137
      %p146 = scmp.eq.s32.totalorder %s21, 0
      %p147 = por %p145, %p146
      %p148 = scmp.ne.s32.totalorder %s136, %s137
      %p149 = scmp.eq.s32.totalorder %s22, 1
      %p150 = por %p148, %p149
      %p152 = scmp.ne.s32.totalorder %s137, %s151
      %p153 = scmp.eq.s32.totalorder %s22, 0
      %p154 = por %p152, %p153
      %s156 = sadd.s32 %s155, 1
      %p159 = scmp.eq.s32.totalorder %s16, 1
      %p160 = scmp.ne.s32.totalorder %s155, %s157
      %p161 = scmp.eq.s32.totalorder %s16, 0
      %p162 = por %p160, %p161
      %p163 = scmp.ne.s32.totalorder %s155, %s157
      %p164 = scmp.eq.s32.totalorder %s21, 1
      %p165 = por %p163, %p164
      %p166 = scmp.ne.s32.totalorder %s157, %s158
      %p167 = scmp.eq.s32.totalorder %s21, 0
      %p168 = por %p166, %p167
      %p169 = scmp.ne.s32.totalorder %s157, %s158
      %p170 = scmp.eq.s32.totalorder %s22, 1
      %p171 = por %p169, %p170
      %p173 = scmp.ne.s32.totalorder %s158, %s172
      %p174 = scmp.eq.s32.totalorder %s22, 0
      %p175 = por %p173, %p174
      %s177 = sadd.s32 %s176, 1
      %p180 = scmp.eq.s32.totalorder %s16, 1
      %p181 = scmp.ne.s32.totalorder %s176, %s178
      %p182 = scmp.eq.s32.totalorder %s16, 0
      %p183 = por %p181, %p182
      %p184 = scmp.ne.s32.totalorder %s176, %s178
      %p185 = scmp.eq.s32.totalorder %s21, 1
      %p186 = por %p184, %p185
      %p187 = scmp.ne.s32.totalorder %s178, %s179
      %p188 = scmp.eq.s32.totalorder %s21, 0
      %p189 = por %p187, %p188
      %p190 = scmp.ne.s32.totalorder %s178, %s179
      %p191 = scmp.eq.s32.totalorder %s22, 1
      %p192 = por %p190, %p191
      %p194 = scmp.ne.s32.totalorder %s179, %s193
      %p195 = scmp.eq.s32.totalorder %s22, 0
      %p196 = por %p194, %p195
      %s197 = ssub.s32 %s16, %s23
      %p198 = scmp.eq.s32.totalorder %s197, 0
      %s200 = sadd.s32 %s199, 1
      %s201 = scalar_select %p198, %s199, %s200
      %p204 = pneg %p198
      %p205 = scmp.eq.s32.totalorder %s16, 1
      %p206 = por %p204, %p205
      %p207 = scmp.ne.s32.totalorder %s199, %s202
      %p208 = scmp.eq.s32.totalorder %s16, 0
      %p209 = por %p207, %p208
      %p210 = scmp.ne.s32.totalorder %s199, %s202
      %p211 = scmp.eq.s32.totalorder %s21, 1
      %p212 = por %p210, %p211
      %p213 = scmp.ne.s32.totalorder %s202, %s203
      %p214 = scmp.eq.s32.totalorder %s21, 0
      %p215 = por %p213, %p214
      %p216 = scmp.ne.s32.totalorder %s202, %s203
      %p217 = scmp.eq.s32.totalorder %s22, 1
      %p218 = por %p216, %p217
      %p220 = scmp.ne.s32.totalorder %s203, %s219
      %p221 = scmp.eq.s32.totalorder %s22, 0
      %p222 = por %p220, %p221
      %s223 = ssub.s32 %s16, %s23
      %p224 = scmp.eq.s32.totalorder %s223, 0
      %s226 = sadd.s32 %s225, 1
      %s227 = scalar_select %p224, %s225, %s226
      %p230 = pneg %p224
      %p231 = scmp.eq.s32.totalorder %s16, 1
      %p232 = por %p230, %p231
      %p233 = scmp.ne.s32.totalorder %s225, %s228
      %p234 = scmp.eq.s32.totalorder %s16, 0
      %p235 = por %p233, %p234
      %p236 = scmp.ne.s32.totalorder %s225, %s228
      %p237 = scmp.eq.s32.totalorder %s21, 1
      %p238 = por %p236, %p237
      %p239 = scmp.ne.s32.totalorder %s228, %s229
      %p240 = scmp.eq.s32.totalorder %s21, 0
      %p241 = por %p239, %p240
      %p242 = scmp.ne.s32.totalorder %s228, %s229
      %p243 = scmp.eq.s32.totalorder %s22, 1
      %p244 = por %p242, %p243
      %p246 = scmp.ne.s32.totalorder %s229, %s245
      %p247 = scmp.eq.s32.totalorder %s22, 0
      %p248 = por %p246, %p247
      %p249 = scmp.le.s32.totalorder 1, %s16
      %p250 = scmp.lt.s32.totalorder %s16, 3
      %p251 = pnand %p249, %p250
      %p252 = pneg %p251
      // Predicated region
      $region9: #{lyapunov_forward.1} parent=5 // pred_check
        _
      $region10: #{lyapunov_forward.1} parent=5 // pred_check_branch
        %254 = sbr.rel (%p251) target = $region12
      $region11: #{lyapunov_forward.1} parent=5 // pred_region
        %s255 = ssub.s32 %s16, 1
        // Predicated region
        $region13: #{lyapunov_forward.1} parent=11 // pred_check
          %p256 = pneg %p63
        $region14: #{lyapunov_forward.1} parent=11 // pred_check_branch
          %258 = sbr.rel (%p256) target = $region16
        $region15: #{lyapunov_forward.1} parent=11 // pred_region
          _
        $region16: #{lyapunov_forward.1} parent=11 // pred_fallthru
          _
        // Predicated region
        $region17: #{lyapunov_forward.1} parent=11 // pred_check
          %p259 = pneg %p84
        $region18: #{lyapunov_forward.1} parent=11 // pred_check_branch
          %261 = sbr.rel (%p259) target = $region20
        $region19: #{lyapunov_forward.1} parent=11 // pred_region
          _
        $region20: #{lyapunov_forward.1} parent=11 // pred_fallthru
          _
        // Predicated region
        $region21: #{lyapunov_forward.1} parent=11 // pred_check
          %p262 = pneg %p105
        $region22: #{lyapunov_forward.1} parent=11 // pred_check_branch
          %264 = sbr.rel (%p262) target = $region24
        $region23: #{lyapunov_forward.1} parent=11 // pred_region
          _
        $region24: #{lyapunov_forward.1} parent=11 // pred_fallthru
          _
        // Predicated region
        $region25: #{lyapunov_forward.1} parent=11 // pred_check
          %p265 = pneg %p126
        $region26: #{lyapunov_forward.1} parent=11 // pred_check_branch
          %267 = sbr.rel (%p265) target = $region28
        $region27: #{lyapunov_forward.1} parent=11 // pred_region
          _
        $region28: #{lyapunov_forward.1} parent=11 // pred_fallthru
          _
        // Predicated region
        $region29: #{lyapunov_forward.1} parent=11 // pred_check
          %p268 = pneg %p147
        $region30: #{lyapunov_forward.1} parent=11 // pred_check_branch
          %270 = sbr.rel (%p268) target = $region32
        $region31: #{lyapunov_forward.1} parent=11 // pred_region
          _
        $region32: #{lyapunov_forward.1} parent=11 // pred_fallthru
          _
        // Predicated region
        $region33: #{lyapunov_forward.1} parent=11 // pred_check
          %p271 = pneg %p168
        $region34: #{lyapunov_forward.1} parent=11 // pred_check_branch
          %273 = sbr.rel (%p271) target = $region36
        $region35: #{lyapunov_forward.1} parent=11 // pred_region
          _
        $region36: #{lyapunov_forward.1} parent=11 // pred_fallthru
          _
        // Predicated region
        $region37: #{lyapunov_forward.1} parent=11 // pred_check
          %p274 = pneg %p189
        $region38: #{lyapunov_forward.1} parent=11 // pred_check_branch
          %276 = sbr.rel (%p274) target = $region40
        $region39: #{lyapunov_forward.1} parent=11 // pred_region
          _
        $region40: #{lyapunov_forward.1} parent=11 // pred_fallthru
          _
      $region12: #{lyapunov_forward.1} parent=5 // pred_fallthru
        _
      %p277 = scmp.lt.s32.totalorder %s16, 2
      // Predicated region
      $region41: #{lyapunov_forward.1} parent=5 // pred_check
        %p278 = pneg %p277
      $region42: #{lyapunov_forward.1} parent=5 // pred_check_branch
        %280 = sbr.rel (%p278) target = $region44
      $region43: #{lyapunov_forward.1} parent=5 // pred_region
        // Predicated region
        $region45: #{lyapunov_forward.1} parent=43 // pred_check
          %p281 = pneg %p36
        $region46: #{lyapunov_forward.1} parent=43 // pred_check_branch
          %283 = sbr.rel (%p281) target = $region48
        $region47: #{lyapunov_forward.1} parent=43 // pred_region
          %s284 = smul.u32 2, %s16
          %p285 = scmp.lt.s32.totalorder %s284, 3
          %s286 = scalar_select %p285, %s284, 3
          %s287 = smul.addr %s286, 8
          %s288 = scalar_lea.vmem %s0, %s287
          %s289 = smul.u32 2, %s16
        $region48: #{lyapunov_forward.1} parent=43 // pred_fallthru
          _
      $region44: #{lyapunov_forward.1} parent=5 // pred_fallthru
        _
      %p290 = scmp.le.s32.totalorder 1, %s16
      %p291 = scmp.lt.s32.totalorder %s16, 3
      %p292 = pnand %p290, %p291
      %p293 = pneg %p292
      // Predicated region
      $region49: #{lyapunov_forward.1} parent=5 // pred_check
        _
      $region50: #{lyapunov_forward.1} parent=5 // pred_check_branch
        %295 = sbr.rel (%p292) target = $region52
      $region51: #{lyapunov_forward.1} parent=5 // pred_region
        %s296 = ssub.s32 %s16, 1
        %s297 = smul.u32 2, %s21
        %p298 = scmp.lt.s32.totalorder %s297, 3
        %s299 = scalar_select %p298, %s297, 3
        %s300 = smul.addr %s299, 8
        %s301 = scalar_lea.vmem %s0, %s300
        %p302 = pneg %p42
        %p303 = pneg %p39
        %p304 = pneg %p63
        %p305 = pneg %p60
        %p306 = pneg %p84
        %p307 = pneg %p81
        %p308 = pneg %p105
        %p309 = pneg %p102
        %p310 = pneg %p126
        %p311 = pneg %p123
        %p312 = pneg %p147
        %p313 = pneg %p144
        %p314 = pneg %p168
        %p315 = pneg %p165
        %p316 = pneg %p189
        %p317 = pneg %p186
        %p318 = pneg %p215
        %p319 = pneg %p212
        %s320 = sand.u32 %s202, 1
        %s321 = sand.u32 %s202, 1
        %s322 = smul.addr %s321, 128
        %s323 = scalar_lea.vmem [#allocation2], %s322
        %p324 = pneg %p241
        %p325 = pneg %p238
        %s326 = smul.u32 2, %s21
        %p327 = scmp.lt.s32.totalorder %s326, 3
        %s328 = scalar_select %p327, %s326, 3
        %s329 = smul.addr %s328, 4
        %s330 = scalar_lea.vmem %s9, %s329
        %s331 = smul.u32 2, %s21
        %p332 = scmp.lt.s32.totalorder %s331, 3
        %s333 = scalar_select %p332, %s331, 3
        %s334 = smul.addr %s333, 8
        %s335 = scalar_lea.vmem %s0, %s334
        %s336 = smul.u32 2, %s21
        %s337 = smul.u32 2, %s21
        %s338 = smul.u32 2, %s21
        %p339 = scmp.lt.s32.totalorder %s338, 3
        %s340 = scalar_select %p339, %s338, 3
        %s341 = smul.addr %s340, 4
        %s342 = scalar_lea.vmem %s9, %s341
        %s343 = smul.u32 2, %s21
        %v344 = vld [vmem:[%s335] sm:$0x1f]
        %v345 = vld [vmem:[%s335 + $0x8] sm:$0x1f]
        %v346 = vld [vmem:[%s1] sm:$0xff]
        %v347 = vld [vmem:[%s1 + $0x8] sm:$0xff]
        %v348 = vld [vmem:[%s1 + $0x10] sm:$0xff]
        %v349 = vld [vmem:[%s1 + $0x18] sm:$0xff]
        %v350 = vld [vmem:[%s1 + $0x20] sm:$0xff]
        %v351 = vld [vmem:[%s1 + $0x28] sm:$0xff]
        %v352 = vld [vmem:[%s1 + $0x30] sm:$0xff]
        %v353 = vld [vmem:[%s1 + $0x38] sm:$0xff]
        %v354 = vld [vmem:[%s1 + $0x40] sm:$0xff]
        %v355 = vld [vmem:[%s1 + $0x48] sm:$0xff]
        %v356 = vld [vmem:[%s1 + $0x50] sm:$0xff]
        %v357 = vld [vmem:[%s1 + $0x58] sm:$0xff]
        %v358 = vld [vmem:[%s1 + $0x60] sm:$0xff]
        %v359 = vld [vmem:[%s1 + $0x68] sm:$0xff]
        %v360 = vld [vmem:[%s1 + $0x70] sm:$0xff]
        %v361 = vld [vmem:[%s1 + $0x78] sm:$0xff]
        %v362 = vld [vmem:[%s1 + $0x80] sm:$0xff]
        %v363 = vld [vmem:[%s1 + $0x88] sm:$0xff]
        %v364 = vld [vmem:[%s1 + $0x90] sm:$0xff]
        %v365 = vld [vmem:[%s1 + $0x98] sm:$0xff]
        %vm366 = vcmask 39936
        %v368 = vsel %vm366, %v346, 0
        %v371 = vsel %vm366, %v347, 0
        %v374 = vsel %vm366, %v348, 0
        %v377 = vsel %vm366, %v349, 0
        %v380 = vsel %vm366, %v350, 0
        %v383 = vsel %vm366, %v351, 0
        %v386 = vsel %vm366, %v352, 0
        %v389 = vsel %vm366, %v353, 0
        %v392 = vsel %vm366, %v354, 0
        %v395 = vsel %vm366, %v355, 0
        %v398 = vsel %vm366, %v356, 0
        %v401 = vsel %vm366, %v357, 0
        %v404 = vsel %vm366, %v358, 0
        %v407 = vsel %vm366, %v359, 0
        %v410 = vsel %vm366, %v360, 0
        %v413 = vsel %vm366, %v361, 0
        %v416 = vsel %vm366, %v362, 0
        %v419 = vsel %vm366, %v363, 0
        %v422 = vsel %vm366, %v364, 0
        %v425 = vsel %vm366, %v365, 0
        %vm427 = vcmask 1044480
        %v429 = vsel %vm427, %v344, 0
        %v432 = vsel %vm427, %v345, 0
        %434 = vmatprep.subr.mxu0 0.0
        %435 = vmatpush1.msra.mxu0 0.0
        %436 = vmatprep.subr.mxu0 0.0
        %437 = vmatpush1.msra.mxu0 0.0
        %438 = vmatprep.subr.mxu0 0.0
        %439 = vmatpush1.msra.mxu0 0.0
        %440 = vmatprep.subr.mxu0 0.0
        %441 = vmatpush1.msra.mxu0 0.0
        %442 = vmatprep.subr.mxu0 0.0
        %443 = vmatpush1.msra.mxu0 0.0
        %444 = vmatprep.subr.mxu0 0.0
        %445 = vmatpush1.msra.mxu0 0.0
        %446 = vmatprep.subr.mxu0 0.0
        %447 = vmatpush1.msra.mxu0 0.0
        %448 = vmatprep.subr.mxu0 0.0
        %449 = vmatpush1.msra.mxu0 0.0
        %450 = vmatprep.subr.mxu0 0.0
        %451 = vmatpush1.msra.mxu0 0.0
        %452 = vmatprep.subr.mxu0 0.0
        %453 = vmatpush1.msra.mxu0 0.0
        %454 = vmatprep.subr.mxu0 0.0
        %455 = vmatpush1.msra.mxu0 0.0
        %456 = vmatprep.subr.mxu0 0.0
        %457 = vmatpush1.msra.mxu0 0.0
        %458 = vmatprep.subr.mxu0 0.0
        %459 = vmatpush1.msra.mxu0 0.0
        %460 = vmatprep.subr.mxu0 0.0
        %461 = vmatpush1.msra.mxu0 0.0
        %462 = vmatprep.subr.mxu0 0.0
        %463 = vmatpush1.msra.mxu0 0.0
        %v464 = vand.u32 %v432, 4294901760
        %465 = vmatprep.subr.mxu0 %v464
        %v466 = vand.u32 %v429, 4294901760
        %467 = vmatpush1.msra.mxu0 %v466
        %468 = vmatprep.subr.mxu0 0.0
        %469 = vmatpush2.msra.mxu0 0.0
        %470 = vmatprep.subr.mxu0 0.0
        %471 = vmatpush2.msra.mxu0 0.0
        %472 = vmatprep.subr.mxu0 0.0
        %473 = vmatpush2.msra.mxu0 0.0
        %474 = vmatprep.subr.mxu0 0.0
        %475 = vmatpush2.msra.mxu0 0.0
        %476 = vmatprep.subr.mxu0 0.0
        %477 = vmatpush2.msra.mxu0 0.0
        %478 = vmatprep.subr.mxu0 0.0
        %479 = vmatpush2.msra.mxu0 0.0
        %480 = vmatprep.subr.mxu0 0.0
        %481 = vmatpush2.msra.mxu0 0.0
        %482 = vmatprep.subr.mxu0 0.0
        %483 = vmatpush2.msra.mxu0 0.0
        %484 = vmatprep.subr.mxu0 0.0
        %485 = vmatpush2.msra.mxu0 0.0
        %486 = vmatprep.subr.mxu0 0.0
        %487 = vmatpush2.msra.mxu0 0.0
        %488 = vmatprep.subr.mxu0 0.0
        %489 = vmatpush2.msra.mxu0 0.0
        %490 = vmatprep.subr.mxu0 0.0
        %491 = vmatpush2.msra.mxu0 0.0
        %492 = vmatprep.subr.mxu0 0.0
        %493 = vmatpush2.msra.mxu0 0.0
        %494 = vmatprep.subr.mxu0 0.0
        %495 = vmatpush2.msra.mxu0 0.0
        %496 = vmatprep.subr.mxu0 0.0
        %497 = vmatpush2.msra.mxu0 0.0
        %498 = vmatprep.subr.mxu0 0.0
        %499 = vmatpush2.msra.mxu0 0.0
        %500 = vmatprep.mubr.f32.mxu0 0.0
        %v501 = vand.u32 %v368, 4294901760
        %v502 = vsub.f32 %v368, %v501
        %v503 = vand.u32 %v502, 4294901760
        %v504 = vsub.f32 %v502, %v503
        %v505 = vand.u32 %v504, 4294901760
        %506 = vmatmul.mubr.f32.gmra.mxu0 %v505
        %v507 = vpop.f32.mrf.mxu0
        %v508 = vadd.f32 0.0, %v507
        %v509 = vpop.f32.mrf.mxu0
        %v510 = vadd.f32 0.0, %v509
        %511 = vmatprep.mubr.f32.mxu0 0.0
        %v512 = vand.u32 %v371, 4294901760
        %v513 = vsub.f32 %v371, %v512
        %v514 = vand.u32 %v513, 4294901760
        %v515 = vsub.f32 %v513, %v514
        %v516 = vand.u32 %v515, 4294901760
        %517 = vmatmul.mubr.f32.gmra.mxu0 %v516
        %v518 = vpop.f32.mrf.mxu0
        %v519 = vadd.f32 0.0, %v518
        %v520 = vpop.f32.mrf.mxu0
        %v521 = vadd.f32 0.0, %v520
        %522 = vmatprep.mubr.f32.mxu0 0.0
        %v523 = vand.u32 %v374, 4294901760
        %v524 = vsub.f32 %v374, %v523
        %v525 = vand.u32 %v524, 4294901760
        %v526 = vsub.f32 %v524, %v525
        %v527 = vand.u32 %v526, 4294901760
        %528 = vmatmul.mubr.f32.gmra.mxu0 %v527
        %v529 = vpop.f32.mrf.mxu0
        %v530 = vadd.f32 0.0, %v529
        %v531 = vpop.f32.mrf.mxu0
        %v532 = vadd.f32 0.0, %v531
        %533 = vmatprep.mubr.f32.mxu0 0.0
        %v534 = vand.u32 %v377, 4294901760
        %v535 = vsub.f32 %v377, %v534
        %v536 = vand.u32 %v535, 4294901760
        %v537 = vsub.f32 %v535, %v536
        %v538 = vand.u32 %v537, 4294901760
        %539 = vmatmul.mubr.f32.gmra.mxu0 %v538
        %v540 = vpop.f32.mrf.mxu0
        %v541 = vadd.f32 0.0, %v540
        %v542 = vpop.f32.mrf.mxu0
        %v543 = vadd.f32 0.0, %v542
        %544 = vmatprep.mubr.f32.mxu0 0.0
        %v545 = vand.u32 %v380, 4294901760
        %v546 = vsub.f32 %v380, %v545
        %v547 = vand.u32 %v546, 4294901760
        %v548 = vsub.f32 %v546, %v547
        %v549 = vand.u32 %v548, 4294901760
        %550 = vmatmul.mubr.f32.gmra.mxu0 %v549
        %v551 = vpop.f32.mrf.mxu0
        %v552 = vadd.f32 0.0, %v551
        %v553 = vpop.f32.mrf.mxu0
        %v554 = vadd.f32 0.0, %v553
        %555 = vmatprep.mubr.f32.mxu0 0.0
        %v556 = vand.u32 %v383, 4294901760
        %v557 = vsub.f32 %v383, %v556
        %v558 = vand.u32 %v557, 4294901760
        %v559 = vsub.f32 %v557, %v558
        %v560 = vand.u32 %v559, 4294901760
        %561 = vmatmul.mubr.f32.gmra.mxu0 %v560
        %v562 = vpop.f32.mrf.mxu0
        %v563 = vadd.f32 0.0, %v562
        %v564 = vpop.f32.mrf.mxu0
        %v565 = vadd.f32 0.0, %v564
        %566 = vmatprep.mubr.f32.mxu0 0.0
        %v567 = vand.u32 %v386, 4294901760
        %v568 = vsub.f32 %v386, %v567
        %v569 = vand.u32 %v568, 4294901760
        %v570 = vsub.f32 %v568, %v569
        %v571 = vand.u32 %v570, 4294901760
        %572 = vmatmul.mubr.f32.gmra.mxu0 %v571
        %v573 = vpop.f32.mrf.mxu0
        %v574 = vadd.f32 0.0, %v573
        %v575 = vpop.f32.mrf.mxu0
        %v576 = vadd.f32 0.0, %v575
        %577 = vmatprep.mubr.f32.mxu0 0.0
        %v578 = vand.u32 %v389, 4294901760
        %v579 = vsub.f32 %v389, %v578
        %v580 = vand.u32 %v579, 4294901760
        %v581 = vsub.f32 %v579, %v580
        %v582 = vand.u32 %v581, 4294901760
        %583 = vmatmul.mubr.f32.gmra.mxu0 %v582
        %v584 = vpop.f32.mrf.mxu0
        %v585 = vadd.f32 0.0, %v584
        %v586 = vpop.f32.mrf.mxu0
        %v587 = vadd.f32 0.0, %v586
        %588 = vmatprep.mubr.f32.mxu0 0.0
        %v589 = vand.u32 %v392, 4294901760
        %v590 = vsub.f32 %v392, %v589
        %v591 = vand.u32 %v590, 4294901760
        %v592 = vsub.f32 %v590, %v591
        %v593 = vand.u32 %v592, 4294901760
        %594 = vmatmul.mubr.f32.gmra.mxu0 %v593
        %v595 = vpop.f32.mrf.mxu0
        %v596 = vadd.f32 0.0, %v595
        %v597 = vpop.f32.mrf.mxu0
        %v598 = vadd.f32 0.0, %v597
        %599 = vmatprep.mubr.f32.mxu0 0.0
        %v600 = vand.u32 %v395, 4294901760
        %v601 = vsub.f32 %v395, %v600
        %v602 = vand.u32 %v601, 4294901760
        %v603 = vsub.f32 %v601, %v602
        %v604 = vand.u32 %v603, 4294901760
        %605 = vmatmul.mubr.f32.gmra.mxu0 %v604
        %v606 = vpop.f32.mrf.mxu0
        %v607 = vadd.f32 0.0, %v606
        %v608 = vpop.f32.mrf.mxu0
        %v609 = vadd.f32 0.0, %v608
        %610 = vmatprep.mubr.f32.mxu0 0.0
        %v611 = vand.u32 %v398, 4294901760
        %v612 = vsub.f32 %v398, %v611
        %v613 = vand.u32 %v612, 4294901760
        %v614 = vsub.f32 %v612, %v613
        %v615 = vand.u32 %v614, 4294901760
        %616 = vmatmul.mubr.f32.gmra.mxu0 %v615
        %v617 = vpop.f32.mrf.mxu0
        %v618 = vadd.f32 0.0, %v617
        %v619 = vpop.f32.mrf.mxu0
        %v620 = vadd.f32 0.0, %v619
        %621 = vmatprep.mubr.f32.mxu0 0.0
        %v622 = vand.u32 %v401, 4294901760
        %v623 = vsub.f32 %v401, %v622
        %v624 = vand.u32 %v623, 4294901760
        %v625 = vsub.f32 %v623, %v624
        %v626 = vand.u32 %v625, 4294901760
        %627 = vmatmul.mubr.f32.gmra.mxu0 %v626
        %v628 = vpop.f32.mrf.mxu0
        %v629 = vadd.f32 0.0, %v628
        %v630 = vpop.f32.mrf.mxu0
        %v631 = vadd.f32 0.0, %v630
        %632 = vmatprep.mubr.f32.mxu0 0.0
        %v633 = vand.u32 %v404, 4294901760
        %v634 = vsub.f32 %v404, %v633
        %v635 = vand.u32 %v634, 4294901760
        %v636 = vsub.f32 %v634, %v635
        %v637 = vand.u32 %v636, 4294901760
        %638 = vmatmul.mubr.f32.gmra.mxu0 %v637
        %v639 = vpop.f32.mrf.mxu0
        %v640 = vadd.f32 0.0, %v639
        %v641 = vpop.f32.mrf.mxu0
        %v642 = vadd.f32 0.0, %v641
        %643 = vmatprep.mubr.f32.mxu0 0.0
        %v644 = vand.u32 %v407, 4294901760
        %v645 = vsub.f32 %v407, %v644
        %v646 = vand.u32 %v645, 4294901760
        %v647 = vsub.f32 %v645, %v646
        %v648 = vand.u32 %v647, 4294901760
        %649 = vmatmul.mubr.f32.gmra.mxu0 %v648
        %v650 = vpop.f32.mrf.mxu0
        %v651 = vadd.f32 0.0, %v650
        %v652 = vpop.f32.mrf.mxu0
        %v653 = vadd.f32 0.0, %v652
        %654 = vmatprep.mubr.f32.mxu0 0.0
        %v655 = vand.u32 %v410, 4294901760
        %v656 = vsub.f32 %v410, %v655
        %v657 = vand.u32 %v656, 4294901760
        %v658 = vsub.f32 %v656, %v657
        %v659 = vand.u32 %v658, 4294901760
        %660 = vmatmul.mubr.f32.gmra.mxu0 %v659
        %v661 = vpop.f32.mrf.mxu0
        %v662 = vadd.f32 0.0, %v661
        %v663 = vpop.f32.mrf.mxu0
        %v664 = vadd.f32 0.0, %v663
        %665 = vmatprep.mubr.f32.mxu0 0.0
        %v666 = vand.u32 %v413, 4294901760
        %v667 = vsub.f32 %v413, %v666
        %v668 = vand.u32 %v667, 4294901760
        %v669 = vsub.f32 %v667, %v668
        %v670 = vand.u32 %v669, 4294901760
        %671 = vmatmul.mubr.f32.gmra.mxu0 %v670
        %v672 = vpop.f32.mrf.mxu0
        %v673 = vadd.f32 0.0, %v672
        %v674 = vpop.f32.mrf.mxu0
        %v675 = vadd.f32 0.0, %v674
        %676 = vmatprep.mubr.f32.mxu0 0.0
        %v677 = vand.u32 %v416, 4294901760
        %v678 = vsub.f32 %v416, %v677
        %v679 = vand.u32 %v678, 4294901760
        %v680 = vsub.f32 %v678, %v679
        %v681 = vand.u32 %v680, 4294901760
        %682 = vmatmul.mubr.f32.gmra.mxu0 %v681
        %v683 = vpop.f32.mrf.mxu0
        %v684 = vadd.f32 0.0, %v683
        %v685 = vpop.f32.mrf.mxu0
        %v686 = vadd.f32 0.0, %v685
        %687 = vmatprep.mubr.f32.mxu0 0.0
        %v688 = vand.u32 %v419, 4294901760
        %v689 = vsub.f32 %v419, %v688
        %v690 = vand.u32 %v689, 4294901760
        %v691 = vsub.f32 %v689, %v690
        %v692 = vand.u32 %v691, 4294901760
        %693 = vmatmul.mubr.f32.gmra.mxu0 %v692
        %v694 = vpop.f32.mrf.mxu0
        %v695 = vadd.f32 0.0, %v694
        %v696 = vpop.f32.mrf.mxu0
        %v697 = vadd.f32 0.0, %v696
        %698 = vmatprep.mubr.f32.mxu0 0.0
        %v699 = vand.u32 %v422, 4294901760
        %v700 = vsub.f32 %v422, %v699
        %v701 = vand.u32 %v700, 4294901760
        %v702 = vsub.f32 %v700, %v701
        %v703 = vand.u32 %v702, 4294901760
        %704 = vmatmul.mubr.f32.gmra.mxu0 %v703
        %v705 = vpop.f32.mrf.mxu0
        %v706 = vadd.f32 0.0, %v705
        %v707 = vpop.f32.mrf.mxu0
        %v708 = vadd.f32 0.0, %v707
        %709 = vmatprep.mubr.f32.mxu0 0.0
        %v710 = vand.u32 %v425, 4294901760
        %v711 = vsub.f32 %v425, %v710
        %v712 = vand.u32 %v711, 4294901760
        %v713 = vsub.f32 %v711, %v712
        %v714 = vand.u32 %v713, 4294901760
        %715 = vmatmul.mubr.f32.gmra.mxu0 %v714
        %v716 = vpop.f32.mrf.mxu0
        %v717 = vadd.f32 0.0, %v716
        %v718 = vpop.f32.mrf.mxu0
        %v719 = vadd.f32 0.0, %v718
        %720 = vdwg.mxu0
        %721 = vmatprep.subr.mxu0 0.0
        %722 = vmatpush1.msra.mxu0 0.0
        %723 = vmatprep.subr.mxu0 0.0
        %724 = vmatpush1.msra.mxu0 0.0
        %725 = vmatprep.subr.mxu0 0.0
        %726 = vmatpush1.msra.mxu0 0.0
        %727 = vmatprep.subr.mxu0 0.0
        %728 = vmatpush1.msra.mxu0 0.0
        %729 = vmatprep.subr.mxu0 0.0
        %730 = vmatpush1.msra.mxu0 0.0
        %731 = vmatprep.subr.mxu0 0.0
        %732 = vmatpush1.msra.mxu0 0.0
        %733 = vmatprep.subr.mxu0 0.0
        %734 = vmatpush1.msra.mxu0 0.0
        %735 = vmatprep.subr.mxu0 0.0
        %736 = vmatpush1.msra.mxu0 0.0
        %737 = vmatprep.subr.mxu0 0.0
        %738 = vmatpush1.msra.mxu0 0.0
        %739 = vmatprep.subr.mxu0 0.0
        %740 = vmatpush1.msra.mxu0 0.0
        %741 = vmatprep.subr.mxu0 0.0
        %742 = vmatpush1.msra.mxu0 0.0
        %743 = vmatprep.subr.mxu0 0.0
        %744 = vmatpush1.msra.mxu0 0.0
        %745 = vmatprep.subr.mxu0 0.0
        %746 = vmatpush1.msra.mxu0 0.0
        %747 = vmatprep.subr.mxu0 0.0
        %748 = vmatpush1.msra.mxu0 0.0
        %749 = vmatprep.subr.mxu0 0.0
        %750 = vmatpush1.msra.mxu0 0.0
        %v751 = vand.u32 %v432, 4294901760
        %v752 = vsub.f32 %v432, %v751
        %v753 = vand.u32 %v752, 4294901760
        %v754 = vsub.f32 %v752, %v753
        %v755 = vand.u32 %v754, 4294901760
        %756 = vmatprep.subr.mxu0 %v755
        %v757 = vand.u32 %v429, 4294901760
        %v758 = vsub.f32 %v429, %v757
        %v759 = vand.u32 %v758, 4294901760
        %v760 = vsub.f32 %v758, %v759
        %v761 = vand.u32 %v760, 4294901760
        %762 = vmatpush1.msra.mxu0 %v761
        %763 = vmatprep.subr.mxu0 0.0
        %764 = vmatpush2.msra.mxu0 0.0
        %765 = vmatprep.subr.mxu0 0.0
        %766 = vmatpush2.msra.mxu0 0.0
        %767 = vmatprep.subr.mxu0 0.0
        %768 = vmatpush2.msra.mxu0 0.0
        %769 = vmatprep.subr.mxu0 0.0
        %770 = vmatpush2.msra.mxu0 0.0
        %771 = vmatprep.subr.mxu0 0.0
        %772 = vmatpush2.msra.mxu0 0.0
        %773 = vmatprep.subr.mxu0 0.0
        %774 = vmatpush2.msra.mxu0 0.0
        %775 = vmatprep.subr.mxu0 0.0
        %776 = vmatpush2.msra.mxu0 0.0
        %777 = vmatprep.subr.mxu0 0.0
        %778 = vmatpush2.msra.mxu0 0.0
        %779 = vmatprep.subr.mxu0 0.0
        %780 = vmatpush2.msra.mxu0 0.0
        %781 = vmatprep.subr.mxu0 0.0
        %782 = vmatpush2.msra.mxu0 0.0
        %783 = vmatprep.subr.mxu0 0.0
        %784 = vmatpush2.msra.mxu0 0.0
        %785 = vmatprep.subr.mxu0 0.0
        %786 = vmatpush2.msra.mxu0 0.0
        %787 = vmatprep.subr.mxu0 0.0
        %788 = vmatpush2.msra.mxu0 0.0
        %789 = vmatprep.subr.mxu0 0.0
        %790 = vmatpush2.msra.mxu0 0.0
        %791 = vmatprep.subr.mxu0 0.0
        %792 = vmatpush2.msra.mxu0 0.0
        %793 = vmatprep.subr.mxu0 0.0
        %794 = vmatpush2.msra.mxu0 0.0
        %795 = vmatprep.mubr.f32.mxu0 0.0
        %v796 = vand.u32 %v368, 4294901760
        %797 = vmatmul.mubr.f32.gmra.mxu0 %v796
        %v798 = vpop.f32.mrf.mxu0
        %v799 = vadd.f32 %v508, %v798
        %v800 = vpop.f32.mrf.mxu0
        %v801 = vadd.f32 %v510, %v800
        %802 = vmatprep.mubr.f32.mxu0 0.0
        %v803 = vand.u32 %v371, 4294901760
        %804 = vmatmul.mubr.f32.gmra.mxu0 %v803
        %v805 = vpop.f32.mrf.mxu0
        %v806 = vadd.f32 %v519, %v805
        %v807 = vpop.f32.mrf.mxu0
        %v808 = vadd.f32 %v521, %v807
        %809 = vmatprep.mubr.f32.mxu0 0.0
        %v810 = vand.u32 %v374, 4294901760
        %811 = vmatmul.mubr.f32.gmra.mxu0 %v810
        %v812 = vpop.f32.mrf.mxu0
        %v813 = vadd.f32 %v530, %v812
        %v814 = vpop.f32.mrf.mxu0
        %v815 = vadd.f32 %v532, %v814
        %816 = vmatprep.mubr.f32.mxu0 0.0
        %v817 = vand.u32 %v377, 4294901760
        %818 = vmatmul.mubr.f32.gmra.mxu0 %v817
        %v819 = vpop.f32.mrf.mxu0
        %v820 = vadd.f32 %v541, %v819
        %v821 = vpop.f32.mrf.mxu0
        %v822 = vadd.f32 %v543, %v821
        %823 = vmatprep.mubr.f32.mxu0 0.0
        %v824 = vand.u32 %v380, 4294901760
        %825 = vmatmul.mubr.f32.gmra.mxu0 %v824
        %v826 = vpop.f32.mrf.mxu0
        %v827 = vadd.f32 %v552, %v826
        %v828 = vpop.f32.mrf.mxu0
        %v829 = vadd.f32 %v554, %v828
        %830 = vmatprep.mubr.f32.mxu0 0.0
        %v831 = vand.u32 %v383, 4294901760
        %832 = vmatmul.mubr.f32.gmra.mxu0 %v831
        %v833 = vpop.f32.mrf.mxu0
        %v834 = vadd.f32 %v563, %v833
        %v835 = vpop.f32.mrf.mxu0
        %v836 = vadd.f32 %v565, %v835
        %837 = vmatprep.mubr.f32.mxu0 0.0
        %v838 = vand.u32 %v386, 4294901760
        %839 = vmatmul.mubr.f32.gmra.mxu0 %v838
        %v840 = vpop.f32.mrf.mxu0
        %v841 = vadd.f32 %v574, %v840
        %v842 = vpop.f32.mrf.mxu0
        %v843 = vadd.f32 %v576, %v842
        %844 = vmatprep.mubr.f32.mxu0 0.0
        %v845 = vand.u32 %v389, 4294901760
        %846 = vmatmul.mubr.f32.gmra.mxu0 %v845
        %v847 = vpop.f32.mrf.mxu0
        %v848 = vadd.f32 %v585, %v847
        %v849 = vpop.f32.mrf.mxu0
        %v850 = vadd.f32 %v587, %v849
        %851 = vmatprep.mubr.f32.mxu0 0.0
        %v852 = vand.u32 %v392, 4294901760
        %853 = vmatmul.mubr.f32.gmra.mxu0 %v852
        %v854 = vpop.f32.mrf.mxu0
        %v855 = vadd.f32 %v596, %v854
        %v856 = vpop.f32.mrf.mxu0
        %v857 = vadd.f32 %v598, %v856
        %858 = vmatprep.mubr.f32.mxu0 0.0
        %v859 = vand.u32 %v395, 4294901760
        %860 = vmatmul.mubr.f32.gmra.mxu0 %v859
        %v861 = vpop.f32.mrf.mxu0
        %v862 = vadd.f32 %v607, %v861
        %v863 = vpop.f32.mrf.mxu0
        %v864 = vadd.f32 %v609, %v863
        %865 = vmatprep.mubr.f32.mxu0 0.0
        %v866 = vand.u32 %v398, 4294901760
        %867 = vmatmul.mubr.f32.gmra.mxu0 %v866
        %v868 = vpop.f32.mrf.mxu0
        %v869 = vadd.f32 %v618, %v868
        %v870 = vpop.f32.mrf.mxu0
        %v871 = vadd.f32 %v620, %v870
        %872 = vmatprep.mubr.f32.mxu0 0.0
        %v873 = vand.u32 %v401, 4294901760
        %874 = vmatmul.mubr.f32.gmra.mxu0 %v873
        %v875 = vpop.f32.mrf.mxu0
        %v876 = vadd.f32 %v629, %v875
        %v877 = vpop.f32.mrf.mxu0
        %v878 = vadd.f32 %v631, %v877
        %879 = vmatprep.mubr.f32.mxu0 0.0
        %v880 = vand.u32 %v404, 4294901760
        %881 = vmatmul.mubr.f32.gmra.mxu0 %v880
        %v882 = vpop.f32.mrf.mxu0
        %v883 = vadd.f32 %v640, %v882
        %v884 = vpop.f32.mrf.mxu0
        %v885 = vadd.f32 %v642, %v884
        %886 = vmatprep.mubr.f32.mxu0 0.0
        %v887 = vand.u32 %v407, 4294901760
        %888 = vmatmul.mubr.f32.gmra.mxu0 %v887
        %v889 = vpop.f32.mrf.mxu0
        %v890 = vadd.f32 %v651, %v889
        %v891 = vpop.f32.mrf.mxu0
        %v892 = vadd.f32 %v653, %v891
        %893 = vmatprep.mubr.f32.mxu0 0.0
        %v894 = vand.u32 %v410, 4294901760
        %895 = vmatmul.mubr.f32.gmra.mxu0 %v894
        %v896 = vpop.f32.mrf.mxu0
        %v897 = vadd.f32 %v662, %v896
        %v898 = vpop.f32.mrf.mxu0
        %v899 = vadd.f32 %v664, %v898
        %900 = vmatprep.mubr.f32.mxu0 0.0
        %v901 = vand.u32 %v413, 4294901760
        %902 = vmatmul.mubr.f32.gmra.mxu0 %v901
        %v903 = vpop.f32.mrf.mxu0
        %v904 = vadd.f32 %v673, %v903
        %v905 = vpop.f32.mrf.mxu0
        %v906 = vadd.f32 %v675, %v905
        %907 = vmatprep.mubr.f32.mxu0 0.0
        %v908 = vand.u32 %v416, 4294901760
        %909 = vmatmul.mubr.f32.gmra.mxu0 %v908
        %v910 = vpop.f32.mrf.mxu0
        %v911 = vadd.f32 %v684, %v910
        %v912 = vpop.f32.mrf.mxu0
        %v913 = vadd.f32 %v686, %v912
        %914 = vmatprep.mubr.f32.mxu0 0.0
        %v915 = vand.u32 %v419, 4294901760
        %916 = vmatmul.mubr.f32.gmra.mxu0 %v915
        %v917 = vpop.f32.mrf.mxu0
        %v918 = vadd.f32 %v695, %v917
        %v919 = vpop.f32.mrf.mxu0
        %v920 = vadd.f32 %v697, %v919
        %921 = vmatprep.mubr.f32.mxu0 0.0
        %v922 = vand.u32 %v422, 4294901760
        %923 = vmatmul.mubr.f32.gmra.mxu0 %v922
        %v924 = vpop.f32.mrf.mxu0
        %v925 = vadd.f32 %v706, %v924
        %v926 = vpop.f32.mrf.mxu0
        %v927 = vadd.f32 %v708, %v926
        %928 = vmatprep.mubr.f32.mxu0 0.0
        %v929 = vand.u32 %v425, 4294901760
        %930 = vmatmul.mubr.f32.gmra.mxu0 %v929
        %v931 = vpop.f32.mrf.mxu0
        %v932 = vadd.f32 %v717, %v931
        %v933 = vpop.f32.mrf.mxu0
        %v934 = vadd.f32 %v719, %v933
        %935 = vdwg.mxu0
        %936 = vmatprep.subr.mxu0 0.0
        %937 = vmatpush1.msra.mxu0 0.0
        %938 = vmatprep.subr.mxu0 0.0
        %939 = vmatpush1.msra.mxu0 0.0
        %940 = vmatprep.subr.mxu0 0.0
        %941 = vmatpush1.msra.mxu0 0.0
        %942 = vmatprep.subr.mxu0 0.0
        %943 = vmatpush1.msra.mxu0 0.0
        %944 = vmatprep.subr.mxu0 0.0
        %945 = vmatpush1.msra.mxu0 0.0
        %946 = vmatprep.subr.mxu0 0.0
        %947 = vmatpush1.msra.mxu0 0.0
        %948 = vmatprep.subr.mxu0 0.0
        %949 = vmatpush1.msra.mxu0 0.0
        %950 = vmatprep.subr.mxu0 0.0
        %951 = vmatpush1.msra.mxu0 0.0
        %952 = vmatprep.subr.mxu0 0.0
        %953 = vmatpush1.msra.mxu0 0.0
        %954 = vmatprep.subr.mxu0 0.0
        %955 = vmatpush1.msra.mxu0 0.0
        %956 = vmatprep.subr.mxu0 0.0
        %957 = vmatpush1.msra.mxu0 0.0
        %958 = vmatprep.subr.mxu0 0.0
        %959 = vmatpush1.msra.mxu0 0.0
        %960 = vmatprep.subr.mxu0 0.0
        %961 = vmatpush1.msra.mxu0 0.0
        %962 = vmatprep.subr.mxu0 0.0
        %963 = vmatpush1.msra.mxu0 0.0
        %964 = vmatprep.subr.mxu0 0.0
        %965 = vmatpush1.msra.mxu0 0.0
        %v966 = vand.u32 %v432, 4294901760
        %v967 = vsub.f32 %v432, %v966
        %968 = vmatprep.subr.mxu0 %v967
        %v969 = vand.u32 %v429, 4294901760
        %v970 = vsub.f32 %v429, %v969
        %971 = vmatpush1.msra.mxu0 %v970
        %972 = vmatprep.subr.mxu0 0.0
        %973 = vmatpush2.msra.mxu0 0.0
        %974 = vmatprep.subr.mxu0 0.0
        %975 = vmatpush2.msra.mxu0 0.0
        %976 = vmatprep.subr.mxu0 0.0
        %977 = vmatpush2.msra.mxu0 0.0
        %978 = vmatprep.subr.mxu0 0.0
        %979 = vmatpush2.msra.mxu0 0.0
        %980 = vmatprep.subr.mxu0 0.0
        %981 = vmatpush2.msra.mxu0 0.0
        %982 = vmatprep.subr.mxu0 0.0
        %983 = vmatpush2.msra.mxu0 0.0
        %984 = vmatprep.subr.mxu0 0.0
        %985 = vmatpush2.msra.mxu0 0.0
        %986 = vmatprep.subr.mxu0 0.0
        %987 = vmatpush2.msra.mxu0 0.0
        %988 = vmatprep.subr.mxu0 0.0
        %989 = vmatpush2.msra.mxu0 0.0
        %990 = vmatprep.subr.mxu0 0.0
        %991 = vmatpush2.msra.mxu0 0.0
        %992 = vmatprep.subr.mxu0 0.0
        %993 = vmatpush2.msra.mxu0 0.0
        %994 = vmatprep.subr.mxu0 0.0
        %995 = vmatpush2.msra.mxu0 0.0
        %996 = vmatprep.subr.mxu0 0.0
        %997 = vmatpush2.msra.mxu0 0.0
        %998 = vmatprep.subr.mxu0 0.0
        %999 = vmatpush2.msra.mxu0 0.0
        %1000 = vmatprep.subr.mxu0 0.0
        %1001 = vmatpush2.msra.mxu0 0.0
        %1002 = vmatprep.subr.mxu0 0.0
        %1003 = vmatpush2.msra.mxu0 0.0
        %1004 = vmatprep.mubr.f32.mxu0 0.0
        %v1005 = vand.u32 %v368, 4294901760
        %v1006 = vsub.f32 %v368, %v1005
        %1007 = vmatmul.mubr.f32.gmra.mxu0 %v1006
        %v1008 = vpop.f32.mrf.mxu0
        %v1009 = vadd.f32 %v799, %v1008
        %v1010 = vpop.f32.mrf.mxu0
        %v1011 = vadd.f32 %v801, %v1010
        %1012 = vmatprep.mubr.f32.mxu0 0.0
        %v1013 = vand.u32 %v371, 4294901760
        %v1014 = vsub.f32 %v371, %v1013
        %1015 = vmatmul.mubr.f32.gmra.mxu0 %v1014
        %v1016 = vpop.f32.mrf.mxu0
        %v1017 = vadd.f32 %v806, %v1016
        %v1018 = vpop.f32.mrf.mxu0
        %v1019 = vadd.f32 %v808, %v1018
        %1020 = vmatprep.mubr.f32.mxu0 0.0
        %v1021 = vand.u32 %v374, 4294901760
        %v1022 = vsub.f32 %v374, %v1021
        %1023 = vmatmul.mubr.f32.gmra.mxu0 %v1022
        %v1024 = vpop.f32.mrf.mxu0
        %v1025 = vadd.f32 %v813, %v1024
        %v1026 = vpop.f32.mrf.mxu0
        %v1027 = vadd.f32 %v815, %v1026
        %1028 = vmatprep.mubr.f32.mxu0 0.0
        %v1029 = vand.u32 %v377, 4294901760
        %v1030 = vsub.f32 %v377, %v1029
        %1031 = vmatmul.mubr.f32.gmra.mxu0 %v1030
        %v1032 = vpop.f32.mrf.mxu0
        %v1033 = vadd.f32 %v820, %v1032
        %v1034 = vpop.f32.mrf.mxu0
        %v1035 = vadd.f32 %v822, %v1034
        %1036 = vmatprep.mubr.f32.mxu0 0.0
        %v1037 = vand.u32 %v380, 4294901760
        %v1038 = vsub.f32 %v380, %v1037
        %1039 = vmatmul.mubr.f32.gmra.mxu0 %v1038
        %v1040 = vpop.f32.mrf.mxu0
        %v1041 = vadd.f32 %v827, %v1040
        %v1042 = vpop.f32.mrf.mxu0
        %v1043 = vadd.f32 %v829, %v1042
        %1044 = vmatprep.mubr.f32.mxu0 0.0
        %v1045 = vand.u32 %v383, 4294901760
        %v1046 = vsub.f32 %v383, %v1045
        %1047 = vmatmul.mubr.f32.gmra.mxu0 %v1046
        %v1048 = vpop.f32.mrf.mxu0
        %v1049 = vadd.f32 %v834, %v1048
        %v1050 = vpop.f32.mrf.mxu0
        %v1051 = vadd.f32 %v836, %v1050
        %1052 = vmatprep.mubr.f32.mxu0 0.0
        %v1053 = vand.u32 %v386, 4294901760
        %v1054 = vsub.f32 %v386, %v1053
        %1055 = vmatmul.mubr.f32.gmra.mxu0 %v1054
        %v1056 = vpop.f32.mrf.mxu0
        %v1057 = vadd.f32 %v841, %v1056
        %v1058 = vpop.f32.mrf.mxu0
        %v1059 = vadd.f32 %v843, %v1058
        %1060 = vmatprep.mubr.f32.mxu0 0.0
        %v1061 = vand.u32 %v389, 4294901760
        %v1062 = vsub.f32 %v389, %v1061
        %1063 = vmatmul.mubr.f32.gmra.mxu0 %v1062
        %v1064 = vpop.f32.mrf.mxu0
        %v1065 = vadd.f32 %v848, %v1064
        %v1066 = vpop.f32.mrf.mxu0
        %v1067 = vadd.f32 %v850, %v1066
        %1068 = vmatprep.mubr.f32.mxu0 0.0
        %v1069 = vand.u32 %v392, 4294901760
        %v1070 = vsub.f32 %v392, %v1069
        %1071 = vmatmul.mubr.f32.gmra.mxu0 %v1070
        %v1072 = vpop.f32.mrf.mxu0
        %v1073 = vadd.f32 %v855, %v1072
        %v1074 = vpop.f32.mrf.mxu0
        %v1075 = vadd.f32 %v857, %v1074
        %1076 = vmatprep.mubr.f32.mxu0 0.0
        %v1077 = vand.u32 %v395, 4294901760
        %v1078 = vsub.f32 %v395, %v1077
        %1079 = vmatmul.mubr.f32.gmra.mxu0 %v1078
        %v1080 = vpop.f32.mrf.mxu0
        %v1081 = vadd.f32 %v862, %v1080
        %v1082 = vpop.f32.mrf.mxu0
        %v1083 = vadd.f32 %v864, %v1082
        %1084 = vmatprep.mubr.f32.mxu0 0.0
        %v1085 = vand.u32 %v398, 4294901760
        %v1086 = vsub.f32 %v398, %v1085
        %1087 = vmatmul.mubr.f32.gmra.mxu0 %v1086
        %v1088 = vpop.f32.mrf.mxu0
        %v1089 = vadd.f32 %v869, %v1088
        %v1090 = vpop.f32.mrf.mxu0
        %v1091 = vadd.f32 %v871, %v1090
        %1092 = vmatprep.mubr.f32.mxu0 0.0
        %v1093 = vand.u32 %v401, 4294901760
        %v1094 = vsub.f32 %v401, %v1093
        %1095 = vmatmul.mubr.f32.gmra.mxu0 %v1094
        %v1096 = vpop.f32.mrf.mxu0
        %v1097 = vadd.f32 %v876, %v1096
        %v1098 = vpop.f32.mrf.mxu0
        %v1099 = vadd.f32 %v878, %v1098
        %1100 = vmatprep.mubr.f32.mxu0 0.0
        %v1101 = vand.u32 %v404, 4294901760
        %v1102 = vsub.f32 %v404, %v1101
        %1103 = vmatmul.mubr.f32.gmra.mxu0 %v1102
        %v1104 = vpop.f32.mrf.mxu0
        %v1105 = vadd.f32 %v883, %v1104
        %v1106 = vpop.f32.mrf.mxu0
        %v1107 = vadd.f32 %v885, %v1106
        %1108 = vmatprep.mubr.f32.mxu0 0.0
        %v1109 = vand.u32 %v407, 4294901760
        %v1110 = vsub.f32 %v407, %v1109
        %1111 = vmatmul.mubr.f32.gmra.mxu0 %v1110
        %v1112 = vpop.f32.mrf.mxu0
        %v1113 = vadd.f32 %v890, %v1112
        %v1114 = vpop.f32.mrf.mxu0
        %v1115 = vadd.f32 %v892, %v1114
        %1116 = vmatprep.mubr.f32.mxu0 0.0
        %v1117 = vand.u32 %v410, 4294901760
        %v1118 = vsub.f32 %v410, %v1117
        %1119 = vmatmul.mubr.f32.gmra.mxu0 %v1118
        %v1120 = vpop.f32.mrf.mxu0
        %v1121 = vadd.f32 %v897, %v1120
        %v1122 = vpop.f32.mrf.mxu0
        %v1123 = vadd.f32 %v899, %v1122
        %1124 = vmatprep.mubr.f32.mxu0 0.0
        %v1125 = vand.u32 %v413, 4294901760
        %v1126 = vsub.f32 %v413, %v1125
        %1127 = vmatmul.mubr.f32.gmra.mxu0 %v1126
        %v1128 = vpop.f32.mrf.mxu0
        %v1129 = vadd.f32 %v904, %v1128
        %v1130 = vpop.f32.mrf.mxu0
        %v1131 = vadd.f32 %v906, %v1130
        %1132 = vmatprep.mubr.f32.mxu0 0.0
        %v1133 = vand.u32 %v416, 4294901760
        %v1134 = vsub.f32 %v416, %v1133
        %1135 = vmatmul.mubr.f32.gmra.mxu0 %v1134
        %v1136 = vpop.f32.mrf.mxu0
        %v1137 = vadd.f32 %v911, %v1136
        %v1138 = vpop.f32.mrf.mxu0
        %v1139 = vadd.f32 %v913, %v1138
        %1140 = vmatprep.mubr.f32.mxu0 0.0
        %v1141 = vand.u32 %v419, 4294901760
        %v1142 = vsub.f32 %v419, %v1141
        %1143 = vmatmul.mubr.f32.gmra.mxu0 %v1142
        %v1144 = vpop.f32.mrf.mxu0
        %v1145 = vadd.f32 %v918, %v1144
        %v1146 = vpop.f32.mrf.mxu0
        %v1147 = vadd.f32 %v920, %v1146
        %1148 = vmatprep.mubr.f32.mxu0 0.0
        %v1149 = vand.u32 %v422, 4294901760
        %v1150 = vsub.f32 %v422, %v1149
        %1151 = vmatmul.mubr.f32.gmra.mxu0 %v1150
        %v1152 = vpop.f32.mrf.mxu0
        %v1153 = vadd.f32 %v925, %v1152
        %v1154 = vpop.f32.mrf.mxu0
        %v1155 = vadd.f32 %v927, %v1154
        %1156 = vmatprep.mubr.f32.mxu0 0.0
        %v1157 = vand.u32 %v425, 4294901760
        %v1158 = vsub.f32 %v425, %v1157
        %1159 = vmatmul.mubr.f32.gmra.mxu0 %v1158
        %v1160 = vpop.f32.mrf.mxu0
        %v1161 = vadd.f32 %v932, %v1160
        %v1162 = vpop.f32.mrf.mxu0
        %v1163 = vadd.f32 %v934, %v1162
        %1164 = vdwg.mxu0
        %1165 = vmatprep.subr.mxu0 0.0
        %1166 = vmatpush1.msra.mxu0 0.0
        %1167 = vmatprep.subr.mxu0 0.0
        %1168 = vmatpush1.msra.mxu0 0.0
        %1169 = vmatprep.subr.mxu0 0.0
        %1170 = vmatpush1.msra.mxu0 0.0
        %1171 = vmatprep.subr.mxu0 0.0
        %1172 = vmatpush1.msra.mxu0 0.0
        %1173 = vmatprep.subr.mxu0 0.0
        %1174 = vmatpush1.msra.mxu0 0.0
        %1175 = vmatprep.subr.mxu0 0.0
        %1176 = vmatpush1.msra.mxu0 0.0
        %1177 = vmatprep.subr.mxu0 0.0
        %1178 = vmatpush1.msra.mxu0 0.0
        %1179 = vmatprep.subr.mxu0 0.0
        %1180 = vmatpush1.msra.mxu0 0.0
        %1181 = vmatprep.subr.mxu0 0.0
        %1182 = vmatpush1.msra.mxu0 0.0
        %1183 = vmatprep.subr.mxu0 0.0
        %1184 = vmatpush1.msra.mxu0 0.0
        %1185 = vmatprep.subr.mxu0 0.0
        %1186 = vmatpush1.msra.mxu0 0.0
        %1187 = vmatprep.subr.mxu0 0.0
        %1188 = vmatpush1.msra.mxu0 0.0
        %1189 = vmatprep.subr.mxu0 0.0
        %1190 = vmatpush1.msra.mxu0 0.0
        %1191 = vmatprep.subr.mxu0 0.0
        %1192 = vmatpush1.msra.mxu0 0.0
        %1193 = vmatprep.subr.mxu0 0.0
        %1194 = vmatpush1.msra.mxu0 0.0
        %v1195 = vand.u32 %v432, 4294901760
        %1196 = vmatprep.subr.mxu0 %v1195
        %v1197 = vand.u32 %v429, 4294901760
        %1198 = vmatpush1.msra.mxu0 %v1197
        %1199 = vmatprep.subr.mxu0 0.0
        %1200 = vmatpush2.msra.mxu0 0.0
        %1201 = vmatprep.subr.mxu0 0.0
        %1202 = vmatpush2.msra.mxu0 0.0
        %1203 = vmatprep.subr.mxu0 0.0
        %1204 = vmatpush2.msra.mxu0 0.0
        %1205 = vmatprep.subr.mxu0 0.0
        %1206 = vmatpush2.msra.mxu0 0.0
        %1207 = vmatprep.subr.mxu0 0.0
        %1208 = vmatpush2.msra.mxu0 0.0
        %1209 = vmatprep.subr.mxu0 0.0
        %1210 = vmatpush2.msra.mxu0 0.0
        %1211 = vmatprep.subr.mxu0 0.0
        %1212 = vmatpush2.msra.mxu0 0.0
        %1213 = vmatprep.subr.mxu0 0.0
        %1214 = vmatpush2.msra.mxu0 0.0
        %1215 = vmatprep.subr.mxu0 0.0
        %1216 = vmatpush2.msra.mxu0 0.0
        %1217 = vmatprep.subr.mxu0 0.0
        %1218 = vmatpush2.msra.mxu0 0.0
        %1219 = vmatprep.subr.mxu0 0.0
        %1220 = vmatpush2.msra.mxu0 0.0
        %1221 = vmatprep.subr.mxu0 0.0
        %1222 = vmatpush2.msra.mxu0 0.0
        %1223 = vmatprep.subr.mxu0 0.0
        %1224 = vmatpush2.msra.mxu0 0.0
        %1225 = vmatprep.subr.mxu0 0.0
        %1226 = vmatpush2.msra.mxu0 0.0
        %1227 = vmatprep.subr.mxu0 0.0
        %1228 = vmatpush2.msra.mxu0 0.0
        %1229 = vmatprep.subr.mxu0 0.0
        %1230 = vmatpush2.msra.mxu0 0.0
        %1231 = vmatprep.mubr.f32.mxu0 0.0
        %v1232 = vand.u32 %v368, 4294901760
        %v1233 = vsub.f32 %v368, %v1232
        %v1234 = vand.u32 %v1233, 4294901760
        %1235 = vmatmul.mubr.f32.gmra.mxu0 %v1234
        %v1236 = vpop.f32.mrf.mxu0
        %v1237 = vadd.f32 %v1009, %v1236
        %v1238 = vpop.f32.mrf.mxu0
        %v1239 = vadd.f32 %v1011, %v1238
        %1240 = vmatprep.mubr.f32.mxu0 0.0
        %v1241 = vand.u32 %v371, 4294901760
        %v1242 = vsub.f32 %v371, %v1241
        %v1243 = vand.u32 %v1242, 4294901760
        %1244 = vmatmul.mubr.f32.gmra.mxu0 %v1243
        %v1245 = vpop.f32.mrf.mxu0
        %v1246 = vadd.f32 %v1017, %v1245
        %v1247 = vpop.f32.mrf.mxu0
        %v1248 = vadd.f32 %v1019, %v1247
        %1249 = vmatprep.mubr.f32.mxu0 0.0
        %v1250 = vand.u32 %v374, 4294901760
        %v1251 = vsub.f32 %v374, %v1250
        %v1252 = vand.u32 %v1251, 4294901760
        %1253 = vmatmul.mubr.f32.gmra.mxu0 %v1252
        %v1254 = vpop.f32.mrf.mxu0
        %v1255 = vadd.f32 %v1025, %v1254
        %v1256 = vpop.f32.mrf.mxu0
        %v1257 = vadd.f32 %v1027, %v1256
        %1258 = vmatprep.mubr.f32.mxu0 0.0
        %v1259 = vand.u32 %v377, 4294901760
        %v1260 = vsub.f32 %v377, %v1259
        %v1261 = vand.u32 %v1260, 4294901760
        %1262 = vmatmul.mubr.f32.gmra.mxu0 %v1261
        %v1263 = vpop.f32.mrf.mxu0
        %v1264 = vadd.f32 %v1033, %v1263
        %v1265 = vpop.f32.mrf.mxu0
        %v1266 = vadd.f32 %v1035, %v1265
        %1267 = vmatprep.mubr.f32.mxu0 0.0
        %v1268 = vand.u32 %v380, 4294901760
        %v1269 = vsub.f32 %v380, %v1268
        %v1270 = vand.u32 %v1269, 4294901760
        %1271 = vmatmul.mubr.f32.gmra.mxu0 %v1270
        %v1272 = vpop.f32.mrf.mxu0
        %v1273 = vadd.f32 %v1041, %v1272
        %v1274 = vpop.f32.mrf.mxu0
        %v1275 = vadd.f32 %v1043, %v1274
        %1276 = vmatprep.mubr.f32.mxu0 0.0
        %v1277 = vand.u32 %v383, 4294901760
        %v1278 = vsub.f32 %v383, %v1277
        %v1279 = vand.u32 %v1278, 4294901760
        %1280 = vmatmul.mubr.f32.gmra.mxu0 %v1279
        %v1281 = vpop.f32.mrf.mxu0
        %v1282 = vadd.f32 %v1049, %v1281
        %v1283 = vpop.f32.mrf.mxu0
        %v1284 = vadd.f32 %v1051, %v1283
        %1285 = vmatprep.mubr.f32.mxu0 0.0
        %v1286 = vand.u32 %v386, 4294901760
        %v1287 = vsub.f32 %v386, %v1286
        %v1288 = vand.u32 %v1287, 4294901760
        %1289 = vmatmul.mubr.f32.gmra.mxu0 %v1288
        %v1290 = vpop.f32.mrf.mxu0
        %v1291 = vadd.f32 %v1057, %v1290
        %v1292 = vpop.f32.mrf.mxu0
        %v1293 = vadd.f32 %v1059, %v1292
        %1294 = vmatprep.mubr.f32.mxu0 0.0
        %v1295 = vand.u32 %v389, 4294901760
        %v1296 = vsub.f32 %v389, %v1295
        %v1297 = vand.u32 %v1296, 4294901760
        %1298 = vmatmul.mubr.f32.gmra.mxu0 %v1297
        %v1299 = vpop.f32.mrf.mxu0
        %v1300 = vadd.f32 %v1065, %v1299
        %v1301 = vpop.f32.mrf.mxu0
        %v1302 = vadd.f32 %v1067, %v1301
        %1303 = vmatprep.mubr.f32.mxu0 0.0
        %v1304 = vand.u32 %v392, 4294901760
        %v1305 = vsub.f32 %v392, %v1304
        %v1306 = vand.u32 %v1305, 4294901760
        %1307 = vmatmul.mubr.f32.gmra.mxu0 %v1306
        %v1308 = vpop.f32.mrf.mxu0
        %v1309 = vadd.f32 %v1073, %v1308
        %v1310 = vpop.f32.mrf.mxu0
        %v1311 = vadd.f32 %v1075, %v1310
        %1312 = vmatprep.mubr.f32.mxu0 0.0
        %v1313 = vand.u32 %v395, 4294901760
        %v1314 = vsub.f32 %v395, %v1313
        %v1315 = vand.u32 %v1314, 4294901760
        %1316 = vmatmul.mubr.f32.gmra.mxu0 %v1315
        %v1317 = vpop.f32.mrf.mxu0
        %v1318 = vadd.f32 %v1081, %v1317
        %v1319 = vpop.f32.mrf.mxu0
        %v1320 = vadd.f32 %v1083, %v1319
        %1321 = vmatprep.mubr.f32.mxu0 0.0
        %v1322 = vand.u32 %v398, 4294901760
        %v1323 = vsub.f32 %v398, %v1322
        %v1324 = vand.u32 %v1323, 4294901760
        %1325 = vmatmul.mubr.f32.gmra.mxu0 %v1324
        %v1326 = vpop.f32.mrf.mxu0
        %v1327 = vadd.f32 %v1089, %v1326
        %v1328 = vpop.f32.mrf.mxu0
        %v1329 = vadd.f32 %v1091, %v1328
        %1330 = vmatprep.mubr.f32.mxu0 0.0
        %v1331 = vand.u32 %v401, 4294901760
        %v1332 = vsub.f32 %v401, %v1331
        %v1333 = vand.u32 %v1332, 4294901760
        %1334 = vmatmul.mubr.f32.gmra.mxu0 %v1333
        %v1335 = vpop.f32.mrf.mxu0
        %v1336 = vadd.f32 %v1097, %v1335
        %v1337 = vpop.f32.mrf.mxu0
        %v1338 = vadd.f32 %v1099, %v1337
        %1339 = vmatprep.mubr.f32.mxu0 0.0
        %v1340 = vand.u32 %v404, 4294901760
        %v1341 = vsub.f32 %v404, %v1340
        %v1342 = vand.u32 %v1341, 4294901760
        %1343 = vmatmul.mubr.f32.gmra.mxu0 %v1342
        %v1344 = vpop.f32.mrf.mxu0
        %v1345 = vadd.f32 %v1105, %v1344
        %v1346 = vpop.f32.mrf.mxu0
        %v1347 = vadd.f32 %v1107, %v1346
        %1348 = vmatprep.mubr.f32.mxu0 0.0
        %v1349 = vand.u32 %v407, 4294901760
        %v1350 = vsub.f32 %v407, %v1349
        %v1351 = vand.u32 %v1350, 4294901760
        %1352 = vmatmul.mubr.f32.gmra.mxu0 %v1351
        %v1353 = vpop.f32.mrf.mxu0
        %v1354 = vadd.f32 %v1113, %v1353
        %v1355 = vpop.f32.mrf.mxu0
        %v1356 = vadd.f32 %v1115, %v1355
        %1357 = vmatprep.mubr.f32.mxu0 0.0
        %v1358 = vand.u32 %v410, 4294901760
        %v1359 = vsub.f32 %v410, %v1358
        %v1360 = vand.u32 %v1359, 4294901760
        %1361 = vmatmul.mubr.f32.gmra.mxu0 %v1360
        %v1362 = vpop.f32.mrf.mxu0
        %v1363 = vadd.f32 %v1121, %v1362
        %v1364 = vpop.f32.mrf.mxu0
        %v1365 = vadd.f32 %v1123, %v1364
        %1366 = vmatprep.mubr.f32.mxu0 0.0
        %v1367 = vand.u32 %v413, 4294901760
        %v1368 = vsub.f32 %v413, %v1367
        %v1369 = vand.u32 %v1368, 4294901760
        %1370 = vmatmul.mubr.f32.gmra.mxu0 %v1369
        %v1371 = vpop.f32.mrf.mxu0
        %v1372 = vadd.f32 %v1129, %v1371
        %v1373 = vpop.f32.mrf.mxu0
        %v1374 = vadd.f32 %v1131, %v1373
        %1375 = vmatprep.mubr.f32.mxu0 0.0
        %v1376 = vand.u32 %v416, 4294901760
        %v1377 = vsub.f32 %v416, %v1376
        %v1378 = vand.u32 %v1377, 4294901760
        %1379 = vmatmul.mubr.f32.gmra.mxu0 %v1378
        %v1380 = vpop.f32.mrf.mxu0
        %v1381 = vadd.f32 %v1137, %v1380
        %v1382 = vpop.f32.mrf.mxu0
        %v1383 = vadd.f32 %v1139, %v1382
        %1384 = vmatprep.mubr.f32.mxu0 0.0
        %v1385 = vand.u32 %v419, 4294901760
        %v1386 = vsub.f32 %v419, %v1385
        %v1387 = vand.u32 %v1386, 4294901760
        %1388 = vmatmul.mubr.f32.gmra.mxu0 %v1387
        %v1389 = vpop.f32.mrf.mxu0
        %v1390 = vadd.f32 %v1145, %v1389
        %v1391 = vpop.f32.mrf.mxu0
        %v1392 = vadd.f32 %v1147, %v1391
        %1393 = vmatprep.mubr.f32.mxu0 0.0
        %v1394 = vand.u32 %v422, 4294901760
        %v1395 = vsub.f32 %v422, %v1394
        %v1396 = vand.u32 %v1395, 4294901760
        %1397 = vmatmul.mubr.f32.gmra.mxu0 %v1396
        %v1398 = vpop.f32.mrf.mxu0
        %v1399 = vadd.f32 %v1153, %v1398
        %v1400 = vpop.f32.mrf.mxu0
        %v1401 = vadd.f32 %v1155, %v1400
        %1402 = vmatprep.mubr.f32.mxu0 0.0
        %v1403 = vand.u32 %v425, 4294901760
        %v1404 = vsub.f32 %v425, %v1403
        %v1405 = vand.u32 %v1404, 4294901760
        %1406 = vmatmul.mubr.f32.gmra.mxu0 %v1405
        %v1407 = vpop.f32.mrf.mxu0
        %v1408 = vadd.f32 %v1161, %v1407
        %v1409 = vpop.f32.mrf.mxu0
        %v1410 = vadd.f32 %v1163, %v1409
        %1411 = vdwg.mxu0
        %1412 = vmatprep.subr.mxu0 0.0
        %1413 = vmatpush1.msra.mxu0 0.0
        %1414 = vmatprep.subr.mxu0 0.0
        %1415 = vmatpush1.msra.mxu0 0.0
        %1416 = vmatprep.subr.mxu0 0.0
        %1417 = vmatpush1.msra.mxu0 0.0
        %1418 = vmatprep.subr.mxu0 0.0
        %1419 = vmatpush1.msra.mxu0 0.0
        %1420 = vmatprep.subr.mxu0 0.0
        %1421 = vmatpush1.msra.mxu0 0.0
        %1422 = vmatprep.subr.mxu0 0.0
        %1423 = vmatpush1.msra.mxu0 0.0
        %1424 = vmatprep.subr.mxu0 0.0
        %1425 = vmatpush1.msra.mxu0 0.0
        %1426 = vmatprep.subr.mxu0 0.0
        %1427 = vmatpush1.msra.mxu0 0.0
        %1428 = vmatprep.subr.mxu0 0.0
        %1429 = vmatpush1.msra.mxu0 0.0
        %1430 = vmatprep.subr.mxu0 0.0
        %1431 = vmatpush1.msra.mxu0 0.0
        %1432 = vmatprep.subr.mxu0 0.0
        %1433 = vmatpush1.msra.mxu0 0.0
        %1434 = vmatprep.subr.mxu0 0.0
        %1435 = vmatpush1.msra.mxu0 0.0
        %1436 = vmatprep.subr.mxu0 0.0
        %1437 = vmatpush1.msra.mxu0 0.0
        %1438 = vmatprep.subr.mxu0 0.0
        %1439 = vmatpush1.msra.mxu0 0.0
        %1440 = vmatprep.subr.mxu0 0.0
        %1441 = vmatpush1.msra.mxu0 0.0
        %v1442 = vand.u32 %v432, 4294901760
        %v1443 = vsub.f32 %v432, %v1442
        %v1444 = vand.u32 %v1443, 4294901760
        %1445 = vmatprep.subr.mxu0 %v1444
        %v1446 = vand.u32 %v429, 4294901760
        %v1447 = vsub.f32 %v429, %v1446
        %v1448 = vand.u32 %v1447, 4294901760
        %1449 = vmatpush1.msra.mxu0 %v1448
        %1450 = vmatprep.subr.mxu0 0.0
        %1451 = vmatpush2.msra.mxu0 0.0
        %1452 = vmatprep.subr.mxu0 0.0
        %1453 = vmatpush2.msra.mxu0 0.0
        %1454 = vmatprep.subr.mxu0 0.0
        %1455 = vmatpush2.msra.mxu0 0.0
        %1456 = vmatprep.subr.mxu0 0.0
        %1457 = vmatpush2.msra.mxu0 0.0
        %1458 = vmatprep.subr.mxu0 0.0
        %1459 = vmatpush2.msra.mxu0 0.0
        %1460 = vmatprep.subr.mxu0 0.0
        %1461 = vmatpush2.msra.mxu0 0.0
        %1462 = vmatprep.subr.mxu0 0.0
        %1463 = vmatpush2.msra.mxu0 0.0
        %1464 = vmatprep.subr.mxu0 0.0
        %1465 = vmatpush2.msra.mxu0 0.0
        %1466 = vmatprep.subr.mxu0 0.0
        %1467 = vmatpush2.msra.mxu0 0.0
        %1468 = vmatprep.subr.mxu0 0.0
        %1469 = vmatpush2.msra.mxu0 0.0
        %1470 = vmatprep.subr.mxu0 0.0
        %1471 = vmatpush2.msra.mxu0 0.0
        %1472 = vmatprep.subr.mxu0 0.0
        %1473 = vmatpush2.msra.mxu0 0.0
        %1474 = vmatprep.subr.mxu0 0.0
        %1475 = vmatpush2.msra.mxu0 0.0
        %1476 = vmatprep.subr.mxu0 0.0
        %1477 = vmatpush2.msra.mxu0 0.0
        %1478 = vmatprep.subr.mxu0 0.0
        %1479 = vmatpush2.msra.mxu0 0.0
        %1480 = vmatprep.subr.mxu0 0.0
        %1481 = vmatpush2.msra.mxu0 0.0
        %1482 = vmatprep.mubr.f32.mxu0 0.0
        %v1483 = vand.u32 %v368, 4294901760
        %1484 = vmatmul.mubr.f32.gmra.mxu0 %v1483
        %v1485 = vpop.f32.mrf.mxu0
        %v1486 = vadd.f32 %v1237, %v1485
        %v1487 = vpop.f32.mrf.mxu0
        %v1488 = vadd.f32 %v1239, %v1487
        %1489 = vmatprep.mubr.f32.mxu0 0.0
        %v1490 = vand.u32 %v371, 4294901760
        %1491 = vmatmul.mubr.f32.gmra.mxu0 %v1490
        %v1492 = vpop.f32.mrf.mxu0
        %v1493 = vadd.f32 %v1246, %v1492
        %v1494 = vpop.f32.mrf.mxu0
        %v1495 = vadd.f32 %v1248, %v1494
        %1496 = vmatprep.mubr.f32.mxu0 0.0
        %v1497 = vand.u32 %v374, 4294901760
        %1498 = vmatmul.mubr.f32.gmra.mxu0 %v1497
        %v1499 = vpop.f32.mrf.mxu0
        %v1500 = vadd.f32 %v1255, %v1499
        %v1501 = vpop.f32.mrf.mxu0
        %v1502 = vadd.f32 %v1257, %v1501
        %1503 = vmatprep.mubr.f32.mxu0 0.0
        %v1504 = vand.u32 %v377, 4294901760
        %1505 = vmatmul.mubr.f32.gmra.mxu0 %v1504
        %v1506 = vpop.f32.mrf.mxu0
        %v1507 = vadd.f32 %v1264, %v1506
        %v1508 = vpop.f32.mrf.mxu0
        %v1509 = vadd.f32 %v1266, %v1508
        %1510 = vmatprep.mubr.f32.mxu0 0.0
        %v1511 = vand.u32 %v380, 4294901760
        %1512 = vmatmul.mubr.f32.gmra.mxu0 %v1511
        %v1513 = vpop.f32.mrf.mxu0
        %v1514 = vadd.f32 %v1273, %v1513
        %v1515 = vpop.f32.mrf.mxu0
        %v1516 = vadd.f32 %v1275, %v1515
        %1517 = vmatprep.mubr.f32.mxu0 0.0
        %v1518 = vand.u32 %v383, 4294901760
        %1519 = vmatmul.mubr.f32.gmra.mxu0 %v1518
        %v1520 = vpop.f32.mrf.mxu0
        %v1521 = vadd.f32 %v1282, %v1520
        %v1522 = vpop.f32.mrf.mxu0
        %v1523 = vadd.f32 %v1284, %v1522
        %1524 = vmatprep.mubr.f32.mxu0 0.0
        %v1525 = vand.u32 %v386, 4294901760
        %1526 = vmatmul.mubr.f32.gmra.mxu0 %v1525
        %v1527 = vpop.f32.mrf.mxu0
        %v1528 = vadd.f32 %v1291, %v1527
        %v1529 = vpop.f32.mrf.mxu0
        %v1530 = vadd.f32 %v1293, %v1529
        %1531 = vmatprep.mubr.f32.mxu0 0.0
        %v1532 = vand.u32 %v389, 4294901760
        %1533 = vmatmul.mubr.f32.gmra.mxu0 %v1532
        %v1534 = vpop.f32.mrf.mxu0
        %v1535 = vadd.f32 %v1300, %v1534
        %v1536 = vpop.f32.mrf.mxu0
        %v1537 = vadd.f32 %v1302, %v1536
        %1538 = vmatprep.mubr.f32.mxu0 0.0
        %v1539 = vand.u32 %v392, 4294901760
        %1540 = vmatmul.mubr.f32.gmra.mxu0 %v1539
        %v1541 = vpop.f32.mrf.mxu0
        %v1542 = vadd.f32 %v1309, %v1541
        %v1543 = vpop.f32.mrf.mxu0
        %v1544 = vadd.f32 %v1311, %v1543
        %1545 = vmatprep.mubr.f32.mxu0 0.0
        %v1546 = vand.u32 %v395, 4294901760
        %1547 = vmatmul.mubr.f32.gmra.mxu0 %v1546
        %v1548 = vpop.f32.mrf.mxu0
        %v1549 = vadd.f32 %v1318, %v1548
        %v1550 = vpop.f32.mrf.mxu0
        %v1551 = vadd.f32 %v1320, %v1550
        %1552 = vmatprep.mubr.f32.mxu0 0.0
        %v1553 = vand.u32 %v398, 4294901760
        %1554 = vmatmul.mubr.f32.gmra.mxu0 %v1553
        %v1555 = vpop.f32.mrf.mxu0
        %v1556 = vadd.f32 %v1327, %v1555
        %v1557 = vpop.f32.mrf.mxu0
        %v1558 = vadd.f32 %v1329, %v1557
        %1559 = vmatprep.mubr.f32.mxu0 0.0
        %v1560 = vand.u32 %v401, 4294901760
        %1561 = vmatmul.mubr.f32.gmra.mxu0 %v1560
        %v1562 = vpop.f32.mrf.mxu0
        %v1563 = vadd.f32 %v1336, %v1562
        %v1564 = vpop.f32.mrf.mxu0
        %v1565 = vadd.f32 %v1338, %v1564
        %1566 = vmatprep.mubr.f32.mxu0 0.0
        %v1567 = vand.u32 %v404, 4294901760
        %1568 = vmatmul.mubr.f32.gmra.mxu0 %v1567
        %v1569 = vpop.f32.mrf.mxu0
        %v1570 = vadd.f32 %v1345, %v1569
        %v1571 = vpop.f32.mrf.mxu0
        %v1572 = vadd.f32 %v1347, %v1571
        %1573 = vmatprep.mubr.f32.mxu0 0.0
        %v1574 = vand.u32 %v407, 4294901760
        %1575 = vmatmul.mubr.f32.gmra.mxu0 %v1574
        %v1576 = vpop.f32.mrf.mxu0
        %v1577 = vadd.f32 %v1354, %v1576
        %v1578 = vpop.f32.mrf.mxu0
        %v1579 = vadd.f32 %v1356, %v1578
        %1580 = vmatprep.mubr.f32.mxu0 0.0
        %v1581 = vand.u32 %v410, 4294901760
        %1582 = vmatmul.mubr.f32.gmra.mxu0 %v1581
        %v1583 = vpop.f32.mrf.mxu0
        %v1584 = vadd.f32 %v1363, %v1583
        %v1585 = vpop.f32.mrf.mxu0
        %v1586 = vadd.f32 %v1365, %v1585
        %1587 = vmatprep.mubr.f32.mxu0 0.0
        %v1588 = vand.u32 %v413, 4294901760
        %1589 = vmatmul.mubr.f32.gmra.mxu0 %v1588
        %v1590 = vpop.f32.mrf.mxu0
        %v1591 = vadd.f32 %v1372, %v1590
        %v1592 = vpop.f32.mrf.mxu0
        %v1593 = vadd.f32 %v1374, %v1592
        %1594 = vmatprep.mubr.f32.mxu0 0.0
        %v1595 = vand.u32 %v416, 4294901760
        %1596 = vmatmul.mubr.f32.gmra.mxu0 %v1595
        %v1597 = vpop.f32.mrf.mxu0
        %v1598 = vadd.f32 %v1381, %v1597
        %v1599 = vpop.f32.mrf.mxu0
        %v1600 = vadd.f32 %v1383, %v1599
        %1601 = vmatprep.mubr.f32.mxu0 0.0
        %v1602 = vand.u32 %v419, 4294901760
        %1603 = vmatmul.mubr.f32.gmra.mxu0 %v1602
        %v1604 = vpop.f32.mrf.mxu0
        %v1605 = vadd.f32 %v1390, %v1604
        %v1606 = vpop.f32.mrf.mxu0
        %v1607 = vadd.f32 %v1392, %v1606
        %1608 = vmatprep.mubr.f32.mxu0 0.0
        %v1609 = vand.u32 %v422, 4294901760
        %1610 = vmatmul.mubr.f32.gmra.mxu0 %v1609
        %v1611 = vpop.f32.mrf.mxu0
        %v1612 = vadd.f32 %v1399, %v1611
        %v1613 = vpop.f32.mrf.mxu0
        %v1614 = vadd.f32 %v1401, %v1613
        %1615 = vmatprep.mubr.f32.mxu0 0.0
        %v1616 = vand.u32 %v425, 4294901760
        %1617 = vmatmul.mubr.f32.gmra.mxu0 %v1616
        %v1618 = vpop.f32.mrf.mxu0
        %v1619 = vadd.f32 %v1408, %v1618
        %v1620 = vpop.f32.mrf.mxu0
        %v1621 = vadd.f32 %v1410, %v1620
        %1622 = vdwg.mxu0
        %1623 = vmatprep.subr.mxu0 0.0
        %1624 = vmatpush1.msra.mxu0 0.0
        %1625 = vmatprep.subr.mxu0 0.0
        %1626 = vmatpush1.msra.mxu0 0.0
        %1627 = vmatprep.subr.mxu0 0.0
        %1628 = vmatpush1.msra.mxu0 0.0
        %1629 = vmatprep.subr.mxu0 0.0
        %1630 = vmatpush1.msra.mxu0 0.0
        %1631 = vmatprep.subr.mxu0 0.0
        %1632 = vmatpush1.msra.mxu0 0.0
        %1633 = vmatprep.subr.mxu0 0.0
        %1634 = vmatpush1.msra.mxu0 0.0
        %1635 = vmatprep.subr.mxu0 0.0
        %1636 = vmatpush1.msra.mxu0 0.0
        %1637 = vmatprep.subr.mxu0 0.0
        %1638 = vmatpush1.msra.mxu0 0.0
        %1639 = vmatprep.subr.mxu0 0.0
        %1640 = vmatpush1.msra.mxu0 0.0
        %1641 = vmatprep.subr.mxu0 0.0
        %1642 = vmatpush1.msra.mxu0 0.0
        %1643 = vmatprep.subr.mxu0 0.0
        %1644 = vmatpush1.msra.mxu0 0.0
        %1645 = vmatprep.subr.mxu0 0.0
        %1646 = vmatpush1.msra.mxu0 0.0
        %1647 = vmatprep.subr.mxu0 0.0
        %1648 = vmatpush1.msra.mxu0 0.0
        %1649 = vmatprep.subr.mxu0 0.0
        %1650 = vmatpush1.msra.mxu0 0.0
        %1651 = vmatprep.subr.mxu0 0.0
        %1652 = vmatpush1.msra.mxu0 0.0
        %v1653 = vand.u32 %v432, 4294901760
        %1654 = vmatprep.subr.mxu0 %v1653
        %v1655 = vand.u32 %v429, 4294901760
        %1656 = vmatpush1.msra.mxu0 %v1655
        %1657 = vmatprep.subr.mxu0 0.0
        %1658 = vmatpush2.msra.mxu0 0.0
        %1659 = vmatprep.subr.mxu0 0.0
        %1660 = vmatpush2.msra.mxu0 0.0
        %1661 = vmatprep.subr.mxu0 0.0
        %1662 = vmatpush2.msra.mxu0 0.0
        %1663 = vmatprep.subr.mxu0 0.0
        %1664 = vmatpush2.msra.mxu0 0.0
        %1665 = vmatprep.subr.mxu0 0.0
        %1666 = vmatpush2.msra.mxu0 0.0
        %1667 = vmatprep.subr.mxu0 0.0
        %1668 = vmatpush2.msra.mxu0 0.0
        %1669 = vmatprep.subr.mxu0 0.0
        %1670 = vmatpush2.msra.mxu0 0.0
        %1671 = vmatprep.subr.mxu0 0.0
        %1672 = vmatpush2.msra.mxu0 0.0
        %1673 = vmatprep.subr.mxu0 0.0
        %1674 = vmatpush2.msra.mxu0 0.0
        %1675 = vmatprep.subr.mxu0 0.0
        %1676 = vmatpush2.msra.mxu0 0.0
        %1677 = vmatprep.subr.mxu0 0.0
        %1678 = vmatpush2.msra.mxu0 0.0
        %1679 = vmatprep.subr.mxu0 0.0
        %1680 = vmatpush2.msra.mxu0 0.0
        %1681 = vmatprep.subr.mxu0 0.0
        %1682 = vmatpush2.msra.mxu0 0.0
        %1683 = vmatprep.subr.mxu0 0.0
        %1684 = vmatpush2.msra.mxu0 0.0
        %1685 = vmatprep.subr.mxu0 0.0
        %1686 = vmatpush2.msra.mxu0 0.0
        %1687 = vmatprep.subr.mxu0 0.0
        %1688 = vmatpush2.msra.mxu0 0.0
        %1689 = vmatprep.mubr.f32.mxu0 0.0
        %v1690 = vand.u32 %v368, 4294901760
        %1691 = vmatmul.mubr.f32.gmra.mxu0 %v1690
        %v1692 = vpop.f32.mrf.mxu0
        %v1693 = vadd.f32 %v1486, %v1692
        %v1694 = vpop.f32.mrf.mxu0
        %v1695 = vadd.f32 %v1488, %v1694
        %1696 = vmatprep.mubr.f32.mxu0 0.0
        %v1697 = vand.u32 %v371, 4294901760
        %1698 = vmatmul.mubr.f32.gmra.mxu0 %v1697
        %v1699 = vpop.f32.mrf.mxu0
        %v1700 = vadd.f32 %v1493, %v1699
        %v1701 = vpop.f32.mrf.mxu0
        %v1702 = vadd.f32 %v1495, %v1701
        %1703 = vmatprep.mubr.f32.mxu0 0.0
        %v1704 = vand.u32 %v374, 4294901760
        %1705 = vmatmul.mubr.f32.gmra.mxu0 %v1704
        %v1706 = vpop.f32.mrf.mxu0
        %v1707 = vadd.f32 %v1500, %v1706
        %v1708 = vpop.f32.mrf.mxu0
        %v1709 = vadd.f32 %v1502, %v1708
        %1710 = vmatprep.mubr.f32.mxu0 0.0
        %v1711 = vand.u32 %v377, 4294901760
        %1712 = vmatmul.mubr.f32.gmra.mxu0 %v1711
        %v1713 = vpop.f32.mrf.mxu0
        %v1714 = vadd.f32 %v1507, %v1713
        %v1715 = vpop.f32.mrf.mxu0
        %v1716 = vadd.f32 %v1509, %v1715
        %1717 = vmatprep.mubr.f32.mxu0 0.0
        %v1718 = vand.u32 %v380, 4294901760
        %1719 = vmatmul.mubr.f32.gmra.mxu0 %v1718
        %v1720 = vpop.f32.mrf.mxu0
        %v1721 = vadd.f32 %v1514, %v1720
        %v1722 = vpop.f32.mrf.mxu0
        %v1723 = vadd.f32 %v1516, %v1722
        %1724 = vmatprep.mubr.f32.mxu0 0.0
        %v1725 = vand.u32 %v383, 4294901760
        %1726 = vmatmul.mubr.f32.gmra.mxu0 %v1725
        %v1727 = vpop.f32.mrf.mxu0
        %v1728 = vadd.f32 %v1521, %v1727
        %v1729 = vpop.f32.mrf.mxu0
        %v1730 = vadd.f32 %v1523, %v1729
        %1731 = vmatprep.mubr.f32.mxu0 0.0
        %v1732 = vand.u32 %v386, 4294901760
        %1733 = vmatmul.mubr.f32.gmra.mxu0 %v1732
        %v1734 = vpop.f32.mrf.mxu0
        %v1735 = vadd.f32 %v1528, %v1734
        %v1736 = vpop.f32.mrf.mxu0
        %v1737 = vadd.f32 %v1530, %v1736
        %1738 = vmatprep.mubr.f32.mxu0 0.0
        %v1739 = vand.u32 %v389, 4294901760
        %1740 = vmatmul.mubr.f32.gmra.mxu0 %v1739
        %v1741 = vpop.f32.mrf.mxu0
        %v1742 = vadd.f32 %v1535, %v1741
        %v1743 = vpop.f32.mrf.mxu0
        %v1744 = vadd.f32 %v1537, %v1743
        %1745 = vmatprep.mubr.f32.mxu0 0.0
        %v1746 = vand.u32 %v392, 4294901760
        %1747 = vmatmul.mubr.f32.gmra.mxu0 %v1746
        %v1748 = vpop.f32.mrf.mxu0
        %v1749 = vadd.f32 %v1542, %v1748
        %v1750 = vpop.f32.mrf.mxu0
        %v1751 = vadd.f32 %v1544, %v1750
        %1752 = vmatprep.mubr.f32.mxu0 0.0
        %v1753 = vand.u32 %v395, 4294901760
        %1754 = vmatmul.mubr.f32.gmra.mxu0 %v1753
        %v1755 = vpop.f32.mrf.mxu0
        %v1756 = vadd.f32 %v1549, %v1755
        %v1757 = vpop.f32.mrf.mxu0
        %v1758 = vadd.f32 %v1551, %v1757
        %1759 = vmatprep.mubr.f32.mxu0 0.0
        %v1760 = vand.u32 %v398, 4294901760
        %1761 = vmatmul.mubr.f32.gmra.mxu0 %v1760
        %v1762 = vpop.f32.mrf.mxu0
        %v1763 = vadd.f32 %v1556, %v1762
        %v1764 = vpop.f32.mrf.mxu0
        %v1765 = vadd.f32 %v1558, %v1764
        %1766 = vmatprep.mubr.f32.mxu0 0.0
        %v1767 = vand.u32 %v401, 4294901760
        %1768 = vmatmul.mubr.f32.gmra.mxu0 %v1767
        %v1769 = vpop.f32.mrf.mxu0
        %v1770 = vadd.f32 %v1563, %v1769
        %v1771 = vpop.f32.mrf.mxu0
        %v1772 = vadd.f32 %v1565, %v1771
        %1773 = vmatprep.mubr.f32.mxu0 0.0
        %v1774 = vand.u32 %v404, 4294901760
        %1775 = vmatmul.mubr.f32.gmra.mxu0 %v1774
        %v1776 = vpop.f32.mrf.mxu0
        %v1777 = vadd.f32 %v1570, %v1776
        %v1778 = vpop.f32.mrf.mxu0
        %v1779 = vadd.f32 %v1572, %v1778
        %1780 = vmatprep.mubr.f32.mxu0 0.0
        %v1781 = vand.u32 %v407, 4294901760
        %1782 = vmatmul.mubr.f32.gmra.mxu0 %v1781
        %v1783 = vpop.f32.mrf.mxu0
        %v1784 = vadd.f32 %v1577, %v1783
        %v1785 = vpop.f32.mrf.mxu0
        %v1786 = vadd.f32 %v1579, %v1785
        %1787 = vmatprep.mubr.f32.mxu0 0.0
        %v1788 = vand.u32 %v410, 4294901760
        %1789 = vmatmul.mubr.f32.gmra.mxu0 %v1788
        %v1790 = vpop.f32.mrf.mxu0
        %v1791 = vadd.f32 %v1584, %v1790
        %v1792 = vpop.f32.mrf.mxu0
        %v1793 = vadd.f32 %v1586, %v1792
        %1794 = vmatprep.mubr.f32.mxu0 0.0
        %v1795 = vand.u32 %v413, 4294901760
        %1796 = vmatmul.mubr.f32.gmra.mxu0 %v1795
        %v1797 = vpop.f32.mrf.mxu0
        %v1798 = vadd.f32 %v1591, %v1797
        %v1799 = vpop.f32.mrf.mxu0
        %v1800 = vadd.f32 %v1593, %v1799
        %1801 = vmatprep.mubr.f32.mxu0 0.0
        %v1802 = vand.u32 %v416, 4294901760
        %1803 = vmatmul.mubr.f32.gmra.mxu0 %v1802
        %v1804 = vpop.f32.mrf.mxu0
        %v1805 = vadd.f32 %v1598, %v1804
        %v1806 = vpop.f32.mrf.mxu0
        %v1807 = vadd.f32 %v1600, %v1806
        %1808 = vmatprep.mubr.f32.mxu0 0.0
        %v1809 = vand.u32 %v419, 4294901760
        %1810 = vmatmul.mubr.f32.gmra.mxu0 %v1809
        %v1811 = vpop.f32.mrf.mxu0
        %v1812 = vadd.f32 %v1605, %v1811
        %v1813 = vpop.f32.mrf.mxu0
        %v1814 = vadd.f32 %v1607, %v1813
        %1815 = vmatprep.mubr.f32.mxu0 0.0
        %v1816 = vand.u32 %v422, 4294901760
        %1817 = vmatmul.mubr.f32.gmra.mxu0 %v1816
        %v1818 = vpop.f32.mrf.mxu0
        %v1819 = vadd.f32 %v1612, %v1818
        %v1820 = vpop.f32.mrf.mxu0
        %v1821 = vadd.f32 %v1614, %v1820
        %1822 = vmatprep.mubr.f32.mxu0 0.0
        %v1823 = vand.u32 %v425, 4294901760
        %1824 = vmatmul.mubr.f32.gmra.mxu0 %v1823
        %v1825 = vpop.f32.mrf.mxu0
        %v1826 = vadd.f32 %v1619, %v1825
        %v1827 = vpop.f32.mrf.mxu0
        %v1828 = vadd.f32 %v1621, %v1827
        %1829 = vdwg.mxu0
        %v1830 = vmax.f32 %v1693, 0.0
        %v1831 = vmax.f32 %v1695, 0.0
        %v1832 = vmax.f32 %v1700, 0.0
        %v1833 = vmax.f32 %v1702, 0.0
        %v1834 = vmax.f32 %v1707, 0.0
        %v1835 = vmax.f32 %v1709, 0.0
        %v1836 = vmax.f32 %v1714, 0.0
        %v1837 = vmax.f32 %v1716, 0.0
        %v1838 = vmax.f32 %v1721, 0.0
        %v1839 = vmax.f32 %v1723, 0.0
        %v1840 = vmax.f32 %v1728, 0.0
        %v1841 = vmax.f32 %v1730, 0.0
        %v1842 = vmax.f32 %v1735, 0.0
        %v1843 = vmax.f32 %v1737, 0.0
        %v1844 = vmax.f32 %v1742, 0.0
        %v1845 = vmax.f32 %v1744, 0.0
        %v1846 = vmul.f32 %v1830, %v1830
        %v1847 = vmul.f32 %v1831, %v1831
        %v1848 = vmul.f32 %v1832, %v1832
        %v1849 = vmul.f32 %v1833, %v1833
        %v1850 = vmul.f32 %v1834, %v1834
        %v1851 = vmul.f32 %v1835, %v1835
        %v1852 = vmul.f32 %v1836, %v1836
        %v1853 = vmul.f32 %v1837, %v1837
        %v1854 = vmul.f32 %v1838, %v1838
        %v1855 = vmul.f32 %v1839, %v1839
        %v1856 = vmul.f32 %v1840, %v1840
        %v1857 = vmul.f32 %v1841, %v1841
        %v1858 = vmul.f32 %v1842, %v1842
        %v1859 = vmul.f32 %v1843, %v1843
        %v1860 = vmul.f32 %v1844, %v1844
        %v1861 = vmul.f32 %v1845, %v1845
        %v1862 = vmul.f32 %v1830, 100.0
        %v1863 = vmul.f32 %v1831, 100.0
        %v1864 = vmul.f32 %v1832, 100.0
        %v1865 = vmul.f32 %v1833, 100.0
        %v1866 = vmul.f32 %v1834, 100.0
        %v1867 = vmul.f32 %v1835, 100.0
        %v1868 = vmul.f32 %v1836, 100.0
        %v1869 = vmul.f32 %v1837, 100.0
        %v1870 = vmul.f32 %v1838, 100.0
        %v1871 = vmul.f32 %v1839, 100.0
        %v1872 = vmul.f32 %v1840, 100.0
        %v1873 = vmul.f32 %v1841, 100.0
        %v1874 = vmul.f32 %v1842, 100.0
        %v1875 = vmul.f32 %v1843, 100.0
        %v1876 = vmul.f32 %v1844, 100.0
        %v1877 = vmul.f32 %v1845, 100.0
        %v1878 = vmul.f32 %v1846, 500.0
        %v1879 = vmul.f32 %v1847, 500.0
        %v1880 = vmul.f32 %v1848, 500.0
        %v1881 = vmul.f32 %v1849, 500.0
        %v1882 = vmul.f32 %v1850, 500.0
        %v1883 = vmul.f32 %v1851, 500.0
        %v1884 = vmul.f32 %v1852, 500.0
        %v1885 = vmul.f32 %v1853, 500.0
        %v1886 = vmul.f32 %v1854, 500.0
        %v1887 = vmul.f32 %v1855, 500.0
        %v1888 = vmul.f32 %v1856, 500.0
        %v1889 = vmul.f32 %v1857, 500.0
        %v1890 = vmul.f32 %v1858, 500.0
        %v1891 = vmul.f32 %v1859, 500.0
        %v1892 = vmul.f32 %v1860, 500.0
        %v1893 = vmul.f32 %v1861, 500.0
        %v1894 = vsub.f32 %v1862, %v1878
        %v1895 = vsub.f32 %v1863, %v1879
        %v1896 = vsub.f32 %v1864, %v1880
        %v1897 = vsub.f32 %v1865, %v1881
        %v1898 = vsub.f32 %v1866, %v1882
        %v1899 = vsub.f32 %v1867, %v1883
        %v1900 = vsub.f32 %v1868, %v1884
        %v1901 = vsub.f32 %v1869, %v1885
        %v1902 = vsub.f32 %v1870, %v1886
        %v1903 = vsub.f32 %v1871, %v1887
        %v1904 = vsub.f32 %v1872, %v1888
        %v1905 = vsub.f32 %v1873, %v1889
        %v1906 = vsub.f32 %v1874, %v1890
        %v1907 = vsub.f32 %v1875, %v1891
        %v1908 = vsub.f32 %v1876, %v1892
        %v1909 = vsub.f32 %v1877, %v1893
        %v1910 = vmul.f32 %v1846, %v1894
        %v1911 = vmul.f32 %v1847, %v1895
        %v1912 = vmul.f32 %v1848, %v1896
        %v1913 = vmul.f32 %v1849, %v1897
        %v1914 = vmul.f32 %v1850, %v1898
        %v1915 = vmul.f32 %v1851, %v1899
        %v1916 = vmul.f32 %v1852, %v1900
        %v1917 = vmul.f32 %v1853, %v1901
        %v1918 = vmul.f32 %v1854, %v1902
        %v1919 = vmul.f32 %v1855, %v1903
        %v1920 = vmul.f32 %v1856, %v1904
        %v1921 = vmul.f32 %v1857, %v1905
        %v1922 = vmul.f32 %v1858, %v1906
        %v1923 = vmul.f32 %v1859, %v1907
        %v1924 = vmul.f32 %v1860, %v1908
        %v1925 = vmul.f32 %v1861, %v1909
        %vm1926 = vcmp.lt.f32.partialorder %v1693, 0.1
        %vm1927 = vcmp.lt.f32.partialorder %v1695, 0.1
        %vm1928 = vcmp.lt.f32.partialorder %v1700, 0.1
        %vm1929 = vcmp.lt.f32.partialorder %v1702, 0.1
        %vm1930 = vcmp.lt.f32.partialorder %v1707, 0.1
        %vm1931 = vcmp.lt.f32.partialorder %v1709, 0.1
        %vm1932 = vcmp.lt.f32.partialorder %v1714, 0.1
        %vm1933 = vcmp.lt.f32.partialorder %v1716, 0.1
        %vm1934 = vcmp.lt.f32.partialorder %v1721, 0.1
        %vm1935 = vcmp.lt.f32.partialorder %v1723, 0.1
        %vm1936 = vcmp.lt.f32.partialorder %v1728, 0.1
        %vm1937 = vcmp.lt.f32.partialorder %v1730, 0.1
        %vm1938 = vcmp.lt.f32.partialorder %v1735, 0.1
        %vm1939 = vcmp.lt.f32.partialorder %v1737, 0.1
        %vm1940 = vcmp.lt.f32.partialorder %v1742, 0.1
        %vm1941 = vcmp.lt.f32.partialorder %v1744, 0.1
        %v1942 = vsub.f32 %v1693, 0.05
        %v1943 = vsub.f32 %v1695, 0.05
        %v1944 = vsub.f32 %v1700, 0.05
        %v1945 = vsub.f32 %v1702, 0.05
        %v1946 = vsub.f32 %v1707, 0.05
        %v1947 = vsub.f32 %v1709, 0.05
        %v1948 = vsub.f32 %v1714, 0.05
        %v1949 = vsub.f32 %v1716, 0.05
        %v1950 = vsub.f32 %v1721, 0.05
        %v1951 = vsub.f32 %v1723, 0.05
        %v1952 = vsub.f32 %v1728, 0.05
        %v1953 = vsub.f32 %v1730, 0.05
        %v1954 = vsub.f32 %v1735, 0.05
        %v1955 = vsub.f32 %v1737, 0.05
        %v1956 = vsub.f32 %v1742, 0.05
        %v1957 = vsub.f32 %v1744, 0.05
        %v1958 = vsel %vm1926, %v1910, %v1942
        %v1959 = vsel %vm1927, %v1911, %v1943
        %v1960 = vsel %vm1928, %v1912, %v1944
        %v1961 = vsel %vm1929, %v1913, %v1945
        %v1962 = vsel %vm1930, %v1914, %v1946
        %v1963 = vsel %vm1931, %v1915, %v1947
        %v1964 = vsel %vm1932, %v1916, %v1948
        %v1965 = vsel %vm1933, %v1917, %v1949
        %v1966 = vsel %vm1934, %v1918, %v1950
        %v1967 = vsel %vm1935, %v1919, %v1951
        %v1968 = vsel %vm1936, %v1920, %v1952
        %v1969 = vsel %vm1937, %v1921, %v1953
        %v1970 = vsel %vm1938, %v1922, %v1954
        %v1971 = vsel %vm1939, %v1923, %v1955
        %v1972 = vsel %vm1940, %v1924, %v1956
        %v1973 = vsel %vm1941, %v1925, %v1957
        %v1974 = vld [vmem:[%s2] sm:$0xff]
        %v1975 = vld [vmem:[%s2 + $0x8] sm:$0xff]
        %v1976 = vld [vmem:[%s2 + $0x10] sm:$0xff]
        %v1977 = vld [vmem:[%s2 + $0x18] sm:$0xff]
        %v1978 = vld [vmem:[%s2 + $0x20] sm:$0xff]
        %v1979 = vld [vmem:[%s2 + $0x28] sm:$0xff]
        %v1980 = vld [vmem:[%s2 + $0x30] sm:$0xff]
        %v1981 = vld [vmem:[%s2 + $0x38] sm:$0xff]
        %vm1982 = vcmask 523264
        %v1984 = vsel %vm1982, %v1974, 0
        %v1987 = vsel %vm1982, %v1975, 0
        %v1990 = vsel %vm1982, %v1976, 0
        %v1993 = vsel %vm1982, %v1977, 0
        %v1996 = vsel %vm1982, %v1978, 0
        %v1999 = vsel %vm1982, %v1979, 0
        %v2002 = vsel %vm1982, %v1980, 0
        %v2005 = vsel %vm1982, %v1981, 0
        %2007 = vmatprep.subr.mxu0 0.0
        %2008 = vmatpush1.msra.mxu0 0.0
        %2009 = vmatprep.subr.mxu0 0.0
        %2010 = vmatpush1.msra.mxu0 0.0
        %2011 = vmatprep.subr.mxu0 0.0
        %2012 = vmatpush1.msra.mxu0 0.0
        %2013 = vmatprep.subr.mxu0 0.0
        %2014 = vmatpush1.msra.mxu0 0.0
        %2015 = vmatprep.subr.mxu0 0.0
        %2016 = vmatpush1.msra.mxu0 0.0
        %2017 = vmatprep.subr.mxu0 0.0
        %2018 = vmatpush1.msra.mxu0 0.0
        %2019 = vmatprep.subr.mxu0 0.0
        %2020 = vmatpush1.msra.mxu0 0.0
        %2021 = vmatprep.subr.mxu0 0.0
        %2022 = vmatpush1.msra.mxu0 0.0
        %v2023 = vand.u32 %v1973, 4294901760
        %2024 = vmatprep.subr.mxu0 %v2023
        %v2025 = vand.u32 %v1972, 4294901760
        %2026 = vmatpush1.msra.mxu0 %v2025
        %v2027 = vand.u32 %v1971, 4294901760
        %2028 = vmatprep.subr.mxu0 %v2027
        %v2029 = vand.u32 %v1970, 4294901760
        %2030 = vmatpush1.msra.mxu0 %v2029
        %v2031 = vand.u32 %v1969, 4294901760
        %2032 = vmatprep.subr.mxu0 %v2031
        %v2033 = vand.u32 %v1968, 4294901760
        %2034 = vmatpush1.msra.mxu0 %v2033
        %v2035 = vand.u32 %v1967, 4294901760
        %2036 = vmatprep.subr.mxu0 %v2035
        %v2037 = vand.u32 %v1966, 4294901760
        %2038 = vmatpush1.msra.mxu0 %v2037
        %v2039 = vand.u32 %v1965, 4294901760
        %2040 = vmatprep.subr.mxu0 %v2039
        %v2041 = vand.u32 %v1964, 4294901760
        %2042 = vmatpush1.msra.mxu0 %v2041
        %v2043 = vand.u32 %v1963, 4294901760
        %2044 = vmatprep.subr.mxu0 %v2043
        %v2045 = vand.u32 %v1962, 4294901760
        %2046 = vmatpush1.msra.mxu0 %v2045
        %v2047 = vand.u32 %v1961, 4294901760
        %2048 = vmatprep.subr.mxu0 %v2047
        %v2049 = vand.u32 %v1960, 4294901760
        %2050 = vmatpush1.msra.mxu0 %v2049
        %v2051 = vand.u32 %v1959, 4294901760
        %2052 = vmatprep.subr.mxu0 %v2051
        %v2053 = vand.u32 %v1958, 4294901760
        %2054 = vmatpush1.msra.mxu0 %v2053
        %2055 = vmatprep.subr.mxu0 0.0
        %2056 = vmatpush2.msra.mxu0 0.0
        %2057 = vmatprep.subr.mxu0 0.0
        %2058 = vmatpush2.msra.mxu0 0.0
        %2059 = vmatprep.subr.mxu0 0.0
        %2060 = vmatpush2.msra.mxu0 0.0
        %2061 = vmatprep.subr.mxu0 0.0
        %2062 = vmatpush2.msra.mxu0 0.0
        %2063 = vmatprep.subr.mxu0 0.0
        %2064 = vmatpush2.msra.mxu0 0.0
        %2065 = vmatprep.subr.mxu0 0.0
        %2066 = vmatpush2.msra.mxu0 0.0
        %2067 = vmatprep.subr.mxu0 0.0
        %2068 = vmatpush2.msra.mxu0 0.0
        %2069 = vmatprep.subr.mxu0 0.0
        %2070 = vmatpush2.msra.mxu0 0.0
        %2071 = vmatprep.subr.mxu0 0.0
        %2072 = vmatpush2.msra.mxu0 0.0
        %2073 = vmatprep.subr.mxu0 0.0
        %2074 = vmatpush2.msra.mxu0 0.0
        %2075 = vmatprep.subr.mxu0 0.0
        %2076 = vmatpush2.msra.mxu0 0.0
        %2077 = vmatprep.subr.mxu0 0.0
        %2078 = vmatpush2.msra.mxu0 0.0
        %2079 = vmatprep.subr.mxu0 0.0
        %2080 = vmatpush2.msra.mxu0 0.0
        %2081 = vmatprep.subr.mxu0 0.0
        %2082 = vmatpush2.msra.mxu0 0.0
        %2083 = vmatprep.subr.mxu0 0.0
        %2084 = vmatpush2.msra.mxu0 0.0
        %2085 = vmatprep.subr.mxu0 0.0
        %2086 = vmatpush2.msra.mxu0 0.0
        %2087 = vmatprep.mubr.f32.mxu0 0.0
        %v2088 = vand.u32 %v1984, 4294901760
        %v2089 = vsub.f32 %v1984, %v2088
        %v2090 = vand.u32 %v2089, 4294901760
        %v2091 = vsub.f32 %v2089, %v2090
        %v2092 = vand.u32 %v2091, 4294901760
        %2093 = vmatmul.mubr.f32.gmra.mxu0 %v2092
        %v2094 = vpop.f32.mrf.mxu0
        %v2095 = vadd.f32 0.0, %v2094
        %v2096 = vpop.f32.mrf.mxu0
        %v2097 = vadd.f32 0.0, %v2096
        %2098 = vmatprep.mubr.f32.mxu0 0.0
        %v2099 = vand.u32 %v1987, 4294901760
        %v2100 = vsub.f32 %v1987, %v2099
        %v2101 = vand.u32 %v2100, 4294901760
        %v2102 = vsub.f32 %v2100, %v2101
        %v2103 = vand.u32 %v2102, 4294901760
        %2104 = vmatmul.mubr.f32.gmra.mxu0 %v2103
        %v2105 = vpop.f32.mrf.mxu0
        %v2106 = vadd.f32 0.0, %v2105
        %v2107 = vpop.f32.mrf.mxu0
        %v2108 = vadd.f32 0.0, %v2107
        %2109 = vmatprep.mubr.f32.mxu0 0.0
        %v2110 = vand.u32 %v1990, 4294901760
        %v2111 = vsub.f32 %v1990, %v2110
        %v2112 = vand.u32 %v2111, 4294901760
        %v2113 = vsub.f32 %v2111, %v2112
        %v2114 = vand.u32 %v2113, 4294901760
        %2115 = vmatmul.mubr.f32.gmra.mxu0 %v2114
        %v2116 = vpop.f32.mrf.mxu0
        %v2117 = vadd.f32 0.0, %v2116
        %v2118 = vpop.f32.mrf.mxu0
        %v2119 = vadd.f32 0.0, %v2118
        %2120 = vmatprep.mubr.f32.mxu0 0.0
        %v2121 = vand.u32 %v1993, 4294901760
        %v2122 = vsub.f32 %v1993, %v2121
        %v2123 = vand.u32 %v2122, 4294901760
        %v2124 = vsub.f32 %v2122, %v2123
        %v2125 = vand.u32 %v2124, 4294901760
        %2126 = vmatmul.mubr.f32.gmra.mxu0 %v2125
        %v2127 = vpop.f32.mrf.mxu0
        %v2128 = vadd.f32 0.0, %v2127
        %v2129 = vpop.f32.mrf.mxu0
        %v2130 = vadd.f32 0.0, %v2129
        %2131 = vmatprep.mubr.f32.mxu0 0.0
        %v2132 = vand.u32 %v1996, 4294901760
        %v2133 = vsub.f32 %v1996, %v2132
        %v2134 = vand.u32 %v2133, 4294901760
        %v2135 = vsub.f32 %v2133, %v2134
        %v2136 = vand.u32 %v2135, 4294901760
        %2137 = vmatmul.mubr.f32.gmra.mxu0 %v2136
        %v2138 = vpop.f32.mrf.mxu0
        %v2139 = vadd.f32 0.0, %v2138
        %v2140 = vpop.f32.mrf.mxu0
        %v2141 = vadd.f32 0.0, %v2140
        %2142 = vmatprep.mubr.f32.mxu0 0.0
        %v2143 = vand.u32 %v1999, 4294901760
        %v2144 = vsub.f32 %v1999, %v2143
        %v2145 = vand.u32 %v2144, 4294901760
        %v2146 = vsub.f32 %v2144, %v2145
        %v2147 = vand.u32 %v2146, 4294901760
        %2148 = vmatmul.mubr.f32.gmra.mxu0 %v2147
        %v2149 = vpop.f32.mrf.mxu0
        %v2150 = vadd.f32 0.0, %v2149
        %v2151 = vpop.f32.mrf.mxu0
        %v2152 = vadd.f32 0.0, %v2151
        %2153 = vmatprep.mubr.f32.mxu0 0.0
        %v2154 = vand.u32 %v2002, 4294901760
        %v2155 = vsub.f32 %v2002, %v2154
        %v2156 = vand.u32 %v2155, 4294901760
        %v2157 = vsub.f32 %v2155, %v2156
        %v2158 = vand.u32 %v2157, 4294901760
        %2159 = vmatmul.mubr.f32.gmra.mxu0 %v2158
        %v2160 = vpop.f32.mrf.mxu0
        %v2161 = vadd.f32 0.0, %v2160
        %v2162 = vpop.f32.mrf.mxu0
        %v2163 = vadd.f32 0.0, %v2162
        %2164 = vmatprep.mubr.f32.mxu0 0.0
        %v2165 = vand.u32 %v2005, 4294901760
        %v2166 = vsub.f32 %v2005, %v2165
        %v2167 = vand.u32 %v2166, 4294901760
        %v2168 = vsub.f32 %v2166, %v2167
        %v2169 = vand.u32 %v2168, 4294901760
        %2170 = vmatmul.mubr.f32.gmra.mxu0 %v2169
        %v2171 = vpop.f32.mrf.mxu0
        %v2172 = vadd.f32 0.0, %v2171
        %v2173 = vpop.f32.mrf.mxu0
        %v2174 = vadd.f32 0.0, %v2173
        %2175 = vdwg.mxu0
        %2176 = vmatprep.subr.mxu0 0.0
        %2177 = vmatpush1.msra.mxu0 0.0
        %2178 = vmatprep.subr.mxu0 0.0
        %2179 = vmatpush1.msra.mxu0 0.0
        %2180 = vmatprep.subr.mxu0 0.0
        %2181 = vmatpush1.msra.mxu0 0.0
        %2182 = vmatprep.subr.mxu0 0.0
        %2183 = vmatpush1.msra.mxu0 0.0
        %2184 = vmatprep.subr.mxu0 0.0
        %2185 = vmatpush1.msra.mxu0 0.0
        %2186 = vmatprep.subr.mxu0 0.0
        %2187 = vmatpush1.msra.mxu0 0.0
        %2188 = vmatprep.subr.mxu0 0.0
        %2189 = vmatpush1.msra.mxu0 0.0
        %2190 = vmatprep.subr.mxu0 0.0
        %2191 = vmatpush1.msra.mxu0 0.0
        %v2192 = vand.u32 %v1973, 4294901760
        %v2193 = vsub.f32 %v1973, %v2192
        %v2194 = vand.u32 %v2193, 4294901760
        %v2195 = vsub.f32 %v2193, %v2194
        %v2196 = vand.u32 %v2195, 4294901760
        %2197 = vmatprep.subr.mxu0 %v2196
        %v2198 = vand.u32 %v1972, 4294901760
        %v2199 = vsub.f32 %v1972, %v2198
        %v2200 = vand.u32 %v2199, 4294901760
        %v2201 = vsub.f32 %v2199, %v2200
        %v2202 = vand.u32 %v2201, 4294901760
        %2203 = vmatpush1.msra.mxu0 %v2202
        %v2204 = vand.u32 %v1971, 4294901760
        %v2205 = vsub.f32 %v1971, %v2204
        %v2206 = vand.u32 %v2205, 4294901760
        %v2207 = vsub.f32 %v2205, %v2206
        %v2208 = vand.u32 %v2207, 4294901760
        %2209 = vmatprep.subr.mxu0 %v2208
        %v2210 = vand.u32 %v1970, 4294901760
        %v2211 = vsub.f32 %v1970, %v2210
        %v2212 = vand.u32 %v2211, 4294901760
        %v2213 = vsub.f32 %v2211, %v2212
        %v2214 = vand.u32 %v2213, 4294901760
        %2215 = vmatpush1.msra.mxu0 %v2214
        %v2216 = vand.u32 %v1969, 4294901760
        %v2217 = vsub.f32 %v1969, %v2216
        %v2218 = vand.u32 %v2217, 4294901760
        %v2219 = vsub.f32 %v2217, %v2218
        %v2220 = vand.u32 %v2219, 4294901760
        %2221 = vmatprep.subr.mxu0 %v2220
        %v2222 = vand.u32 %v1968, 4294901760
        %v2223 = vsub.f32 %v1968, %v2222
        %v2224 = vand.u32 %v2223, 4294901760
        %v2225 = vsub.f32 %v2223, %v2224
        %v2226 = vand.u32 %v2225, 4294901760
        %2227 = vmatpush1.msra.mxu0 %v2226
        %v2228 = vand.u32 %v1967, 4294901760
        %v2229 = vsub.f32 %v1967, %v2228
        %v2230 = vand.u32 %v2229, 4294901760
        %v2231 = vsub.f32 %v2229, %v2230
        %v2232 = vand.u32 %v2231, 4294901760
        %2233 = vmatprep.subr.mxu0 %v2232
        %v2234 = vand.u32 %v1966, 4294901760
        %v2235 = vsub.f32 %v1966, %v2234
        %v2236 = vand.u32 %v2235, 4294901760
        %v2237 = vsub.f32 %v2235, %v2236
        %v2238 = vand.u32 %v2237, 4294901760
        %2239 = vmatpush1.msra.mxu0 %v2238
        %v2240 = vand.u32 %v1965, 4294901760
        %v2241 = vsub.f32 %v1965, %v2240
        %v2242 = vand.u32 %v2241, 4294901760
        %v2243 = vsub.f32 %v2241, %v2242
        %v2244 = vand.u32 %v2243, 4294901760
        %2245 = vmatprep.subr.mxu0 %v2244
        %v2246 = vand.u32 %v1964, 4294901760
        %v2247 = vsub.f32 %v1964, %v2246
        %v2248 = vand.u32 %v2247, 4294901760
        %v2249 = vsub.f32 %v2247, %v2248
        %v2250 = vand.u32 %v2249, 4294901760
        %2251 = vmatpush1.msra.mxu0 %v2250
        %v2252 = vand.u32 %v1963, 4294901760
        %v2253 = vsub.f32 %v1963, %v2252
        %v2254 = vand.u32 %v2253, 4294901760
        %v2255 = vsub.f32 %v2253, %v2254
        %v2256 = vand.u32 %v2255, 4294901760
        %2257 = vmatprep.subr.mxu0 %v2256
        %v2258 = vand.u32 %v1962, 4294901760
        %v2259 = vsub.f32 %v1962, %v2258
        %v2260 = vand.u32 %v2259, 4294901760
        %v2261 = vsub.f32 %v2259, %v2260
        %v2262 = vand.u32 %v2261, 4294901760
        %2263 = vmatpush1.msra.mxu0 %v2262
        %v2264 = vand.u32 %v1961, 4294901760
        %v2265 = vsub.f32 %v1961, %v2264
        %v2266 = vand.u32 %v2265, 4294901760
        %v2267 = vsub.f32 %v2265, %v2266
        %v2268 = vand.u32 %v2267, 4294901760
        %2269 = vmatprep.subr.mxu0 %v2268
        %v2270 = vand.u32 %v1960, 4294901760
        %v2271 = vsub.f32 %v1960, %v2270
        %v2272 = vand.u32 %v2271, 4294901760
        %v2273 = vsub.f32 %v2271, %v2272
        %v2274 = vand.u32 %v2273, 4294901760
        %2275 = vmatpush1.msra.mxu0 %v2274
        %v2276 = vand.u32 %v1959, 4294901760
        %v2277 = vsub.f32 %v1959, %v2276
        %v2278 = vand.u32 %v2277, 4294901760
        %v2279 = vsub.f32 %v2277, %v2278
        %v2280 = vand.u32 %v2279, 4294901760
        %2281 = vmatprep.subr.mxu0 %v2280
        %v2282 = vand.u32 %v1958, 4294901760
        %v2283 = vsub.f32 %v1958, %v2282
        %v2284 = vand.u32 %v2283, 4294901760
        %v2285 = vsub.f32 %v2283, %v2284
        %v2286 = vand.u32 %v2285, 4294901760
        %2287 = vmatpush1.msra.mxu0 %v2286
        %2288 = vmatprep.subr.mxu0 0.0
        %2289 = vmatpush2.msra.mxu0 0.0
        %2290 = vmatprep.subr.mxu0 0.0
        %2291 = vmatpush2.msra.mxu0 0.0
        %2292 = vmatprep.subr.mxu0 0.0
        %2293 = vmatpush2.msra.mxu0 0.0
        %2294 = vmatprep.subr.mxu0 0.0
        %2295 = vmatpush2.msra.mxu0 0.0
        %2296 = vmatprep.subr.mxu0 0.0
        %2297 = vmatpush2.msra.mxu0 0.0
        %2298 = vmatprep.subr.mxu0 0.0
        %2299 = vmatpush2.msra.mxu0 0.0
        %2300 = vmatprep.subr.mxu0 0.0
        %2301 = vmatpush2.msra.mxu0 0.0
        %2302 = vmatprep.subr.mxu0 0.0
        %2303 = vmatpush2.msra.mxu0 0.0
        %2304 = vmatprep.subr.mxu0 0.0
        %2305 = vmatpush2.msra.mxu0 0.0
        %2306 = vmatprep.subr.mxu0 0.0
        %2307 = vmatpush2.msra.mxu0 0.0
        %2308 = vmatprep.subr.mxu0 0.0
        %2309 = vmatpush2.msra.mxu0 0.0
        %2310 = vmatprep.subr.mxu0 0.0
        %2311 = vmatpush2.msra.mxu0 0.0
        %2312 = vmatprep.subr.mxu0 0.0
        %2313 = vmatpush2.msra.mxu0 0.0
        %2314 = vmatprep.subr.mxu0 0.0
        %2315 = vmatpush2.msra.mxu0 0.0
        %2316 = vmatprep.subr.mxu0 0.0
        %2317 = vmatpush2.msra.mxu0 0.0
        %2318 = vmatprep.subr.mxu0 0.0
        %2319 = vmatpush2.msra.mxu0 0.0
        %2320 = vmatprep.mubr.f32.mxu0 0.0
        %v2321 = vand.u32 %v1984, 4294901760
        %2322 = vmatmul.mubr.f32.gmra.mxu0 %v2321
        %v2323 = vpop.f32.mrf.mxu0
        %v2324 = vadd.f32 %v2095, %v2323
        %v2325 = vpop.f32.mrf.mxu0
        %v2326 = vadd.f32 %v2097, %v2325
        %2327 = vmatprep.mubr.f32.mxu0 0.0
        %v2328 = vand.u32 %v1987, 4294901760
        %2329 = vmatmul.mubr.f32.gmra.mxu0 %v2328
        %v2330 = vpop.f32.mrf.mxu0
        %v2331 = vadd.f32 %v2106, %v2330
        %v2332 = vpop.f32.mrf.mxu0
        %v2333 = vadd.f32 %v2108, %v2332
        %2334 = vmatprep.mubr.f32.mxu0 0.0
        %v2335 = vand.u32 %v1990, 4294901760
        %2336 = vmatmul.mubr.f32.gmra.mxu0 %v2335
        %v2337 = vpop.f32.mrf.mxu0
        %v2338 = vadd.f32 %v2117, %v2337
        %v2339 = vpop.f32.mrf.mxu0
        %v2340 = vadd.f32 %v2119, %v2339
        %2341 = vmatprep.mubr.f32.mxu0 0.0
        %v2342 = vand.u32 %v1993, 4294901760
        %2343 = vmatmul.mubr.f32.gmra.mxu0 %v2342
        %v2344 = vpop.f32.mrf.mxu0
        %v2345 = vadd.f32 %v2128, %v2344
        %v2346 = vpop.f32.mrf.mxu0
        %v2347 = vadd.f32 %v2130, %v2346
        %2348 = vmatprep.mubr.f32.mxu0 0.0
        %v2349 = vand.u32 %v1996, 4294901760
        %2350 = vmatmul.mubr.f32.gmra.mxu0 %v2349
        %v2351 = vpop.f32.mrf.mxu0
        %v2352 = vadd.f32 %v2139, %v2351
        %v2353 = vpop.f32.mrf.mxu0
        %v2354 = vadd.f32 %v2141, %v2353
        %2355 = vmatprep.mubr.f32.mxu0 0.0
        %v2356 = vand.u32 %v1999, 4294901760
        %2357 = vmatmul.mubr.f32.gmra.mxu0 %v2356
        %v2358 = vpop.f32.mrf.mxu0
        %v2359 = vadd.f32 %v2150, %v2358
        %v2360 = vpop.f32.mrf.mxu0
        %v2361 = vadd.f32 %v2152, %v2360
        %2362 = vmatprep.mubr.f32.mxu0 0.0
        %v2363 = vand.u32 %v2002, 4294901760
        %2364 = vmatmul.mubr.f32.gmra.mxu0 %v2363
        %v2365 = vpop.f32.mrf.mxu0
        %v2366 = vadd.f32 %v2161, %v2365
        %v2367 = vpop.f32.mrf.mxu0
        %v2368 = vadd.f32 %v2163, %v2367
        %2369 = vmatprep.mubr.f32.mxu0 0.0
        %v2370 = vand.u32 %v2005, 4294901760
        %2371 = vmatmul.mubr.f32.gmra.mxu0 %v2370
        %v2372 = vpop.f32.mrf.mxu0
        %v2373 = vadd.f32 %v2172, %v2372
        %v2374 = vpop.f32.mrf.mxu0
        %v2375 = vadd.f32 %v2174, %v2374
        %2376 = vdwg.mxu0
        %2377 = vmatprep.subr.mxu0 0.0
        %2378 = vmatpush1.msra.mxu0 0.0
        %2379 = vmatprep.subr.mxu0 0.0
        %2380 = vmatpush1.msra.mxu0 0.0
        %2381 = vmatprep.subr.mxu0 0.0
        %2382 = vmatpush1.msra.mxu0 0.0
        %2383 = vmatprep.subr.mxu0 0.0
        %2384 = vmatpush1.msra.mxu0 0.0
        %2385 = vmatprep.subr.mxu0 0.0
        %2386 = vmatpush1.msra.mxu0 0.0
        %2387 = vmatprep.subr.mxu0 0.0
        %2388 = vmatpush1.msra.mxu0 0.0
        %2389 = vmatprep.subr.mxu0 0.0
        %2390 = vmatpush1.msra.mxu0 0.0
        %2391 = vmatprep.subr.mxu0 0.0
        %2392 = vmatpush1.msra.mxu0 0.0
        %v2393 = vand.u32 %v1973, 4294901760
        %v2394 = vsub.f32 %v1973, %v2393
        %2395 = vmatprep.subr.mxu0 %v2394
        %v2396 = vand.u32 %v1972, 4294901760
        %v2397 = vsub.f32 %v1972, %v2396
        %2398 = vmatpush1.msra.mxu0 %v2397
        %v2399 = vand.u32 %v1971, 4294901760
        %v2400 = vsub.f32 %v1971, %v2399
        %2401 = vmatprep.subr.mxu0 %v2400
        %v2402 = vand.u32 %v1970, 4294901760
        %v2403 = vsub.f32 %v1970, %v2402
        %2404 = vmatpush1.msra.mxu0 %v2403
        %v2405 = vand.u32 %v1969, 4294901760
        %v2406 = vsub.f32 %v1969, %v2405
        %2407 = vmatprep.subr.mxu0 %v2406
        %v2408 = vand.u32 %v1968, 4294901760
        %v2409 = vsub.f32 %v1968, %v2408
        %2410 = vmatpush1.msra.mxu0 %v2409
        %v2411 = vand.u32 %v1967, 4294901760
        %v2412 = vsub.f32 %v1967, %v2411
        %2413 = vmatprep.subr.mxu0 %v2412
        %v2414 = vand.u32 %v1966, 4294901760
        %v2415 = vsub.f32 %v1966, %v2414
        %2416 = vmatpush1.msra.mxu0 %v2415
        %v2417 = vand.u32 %v1965, 4294901760
        %v2418 = vsub.f32 %v1965, %v2417
        %2419 = vmatprep.subr.mxu0 %v2418
        %v2420 = vand.u32 %v1964, 4294901760
        %v2421 = vsub.f32 %v1964, %v2420
        %2422 = vmatpush1.msra.mxu0 %v2421
        %v2423 = vand.u32 %v1963, 4294901760
        %v2424 = vsub.f32 %v1963, %v2423
        %2425 = vmatprep.subr.mxu0 %v2424
        %v2426 = vand.u32 %v1962, 4294901760
        %v2427 = vsub.f32 %v1962, %v2426
        %2428 = vmatpush1.msra.mxu0 %v2427
        %v2429 = vand.u32 %v1961, 4294901760
        %v2430 = vsub.f32 %v1961, %v2429
        %2431 = vmatprep.subr.mxu0 %v2430
        %v2432 = vand.u32 %v1960, 4294901760
        %v2433 = vsub.f32 %v1960, %v2432
        %2434 = vmatpush1.msra.mxu0 %v2433
        %v2435 = vand.u32 %v1959, 4294901760
        %v2436 = vsub.f32 %v1959, %v2435
        %2437 = vmatprep.subr.mxu0 %v2436
        %v2438 = vand.u32 %v1958, 4294901760
        %v2439 = vsub.f32 %v1958, %v2438
        %2440 = vmatpush1.msra.mxu0 %v2439
        %2441 = vmatprep.subr.mxu0 0.0
        %2442 = vmatpush2.msra.mxu0 0.0
        %2443 = vmatprep.subr.mxu0 0.0
        %2444 = vmatpush2.msra.mxu0 0.0
        %2445 = vmatprep.subr.mxu0 0.0
        %2446 = vmatpush2.msra.mxu0 0.0
        %2447 = vmatprep.subr.mxu0 0.0
        %2448 = vmatpush2.msra.mxu0 0.0
        %2449 = vmatprep.subr.mxu0 0.0
        %2450 = vmatpush2.msra.mxu0 0.0
        %2451 = vmatprep.subr.mxu0 0.0
        %2452 = vmatpush2.msra.mxu0 0.0
        %2453 = vmatprep.subr.mxu0 0.0
        %2454 = vmatpush2.msra.mxu0 0.0
        %2455 = vmatprep.subr.mxu0 0.0
        %2456 = vmatpush2.msra.mxu0 0.0
        %2457 = vmatprep.subr.mxu0 0.0
        %2458 = vmatpush2.msra.mxu0 0.0
        %2459 = vmatprep.subr.mxu0 0.0
        %2460 = vmatpush2.msra.mxu0 0.0
        %2461 = vmatprep.subr.mxu0 0.0
        %2462 = vmatpush2.msra.mxu0 0.0
        %2463 = vmatprep.subr.mxu0 0.0
        %2464 = vmatpush2.msra.mxu0 0.0
        %2465 = vmatprep.subr.mxu0 0.0
        %2466 = vmatpush2.msra.mxu0 0.0
        %2467 = vmatprep.subr.mxu0 0.0
        %2468 = vmatpush2.msra.mxu0 0.0
        %2469 = vmatprep.subr.mxu0 0.0
        %2470 = vmatpush2.msra.mxu0 0.0
        %2471 = vmatprep.subr.mxu0 0.0
        %2472 = vmatpush2.msra.mxu0 0.0
        %2473 = vmatprep.mubr.f32.mxu0 0.0
        %v2474 = vand.u32 %v1984, 4294901760
        %v2475 = vsub.f32 %v1984, %v2474
        %2476 = vmatmul.mubr.f32.gmra.mxu0 %v2475
        %v2477 = vpop.f32.mrf.mxu0
        %v2478 = vadd.f32 %v2324, %v2477
        %v2479 = vpop.f32.mrf.mxu0
        %v2480 = vadd.f32 %v2326, %v2479
        %2481 = vmatprep.mubr.f32.mxu0 0.0
        %v2482 = vand.u32 %v1987, 4294901760
        %v2483 = vsub.f32 %v1987, %v2482
        %2484 = vmatmul.mubr.f32.gmra.mxu0 %v2483
        %v2485 = vpop.f32.mrf.mxu0
        %v2486 = vadd.f32 %v2331, %v2485
        %v2487 = vpop.f32.mrf.mxu0
        %v2488 = vadd.f32 %v2333, %v2487
        %2489 = vmatprep.mubr.f32.mxu0 0.0
        %v2490 = vand.u32 %v1990, 4294901760
        %v2491 = vsub.f32 %v1990, %v2490
        %2492 = vmatmul.mubr.f32.gmra.mxu0 %v2491
        %v2493 = vpop.f32.mrf.mxu0
        %v2494 = vadd.f32 %v2338, %v2493
        %v2495 = vpop.f32.mrf.mxu0
        %v2496 = vadd.f32 %v2340, %v2495
        %2497 = vmatprep.mubr.f32.mxu0 0.0
        %v2498 = vand.u32 %v1993, 4294901760
        %v2499 = vsub.f32 %v1993, %v2498
        %2500 = vmatmul.mubr.f32.gmra.mxu0 %v2499
        %v2501 = vpop.f32.mrf.mxu0
        %v2502 = vadd.f32 %v2345, %v2501
        %v2503 = vpop.f32.mrf.mxu0
        %v2504 = vadd.f32 %v2347, %v2503
        %2505 = vmatprep.mubr.f32.mxu0 0.0
        %v2506 = vand.u32 %v1996, 4294901760
        %v2507 = vsub.f32 %v1996, %v2506
        %2508 = vmatmul.mubr.f32.gmra.mxu0 %v2507
        %v2509 = vpop.f32.mrf.mxu0
        %v2510 = vadd.f32 %v2352, %v2509
        %v2511 = vpop.f32.mrf.mxu0
        %v2512 = vadd.f32 %v2354, %v2511
        %2513 = vmatprep.mubr.f32.mxu0 0.0
        %v2514 = vand.u32 %v1999, 4294901760
        %v2515 = vsub.f32 %v1999, %v2514
        %2516 = vmatmul.mubr.f32.gmra.mxu0 %v2515
        %v2517 = vpop.f32.mrf.mxu0
        %v2518 = vadd.f32 %v2359, %v2517
        %v2519 = vpop.f32.mrf.mxu0
        %v2520 = vadd.f32 %v2361, %v2519
        %2521 = vmatprep.mubr.f32.mxu0 0.0
        %v2522 = vand.u32 %v2002, 4294901760
        %v2523 = vsub.f32 %v2002, %v2522
        %2524 = vmatmul.mubr.f32.gmra.mxu0 %v2523
        %v2525 = vpop.f32.mrf.mxu0
        %v2526 = vadd.f32 %v2366, %v2525
        %v2527 = vpop.f32.mrf.mxu0
        %v2528 = vadd.f32 %v2368, %v2527
        %2529 = vmatprep.mubr.f32.mxu0 0.0
        %v2530 = vand.u32 %v2005, 4294901760
        %v2531 = vsub.f32 %v2005, %v2530
        %2532 = vmatmul.mubr.f32.gmra.mxu0 %v2531
        %v2533 = vpop.f32.mrf.mxu0
        %v2534 = vadd.f32 %v2373, %v2533
        %v2535 = vpop.f32.mrf.mxu0
        %v2536 = vadd.f32 %v2375, %v2535
        %2537 = vdwg.mxu0
        %2538 = vmatprep.subr.mxu0 0.0
        %2539 = vmatpush1.msra.mxu0 0.0
        %2540 = vmatprep.subr.mxu0 0.0
        %2541 = vmatpush1.msra.mxu0 0.0
        %2542 = vmatprep.subr.mxu0 0.0
        %2543 = vmatpush1.msra.mxu0 0.0
        %2544 = vmatprep.subr.mxu0 0.0
        %2545 = vmatpush1.msra.mxu0 0.0
        %2546 = vmatprep.subr.mxu0 0.0
        %2547 = vmatpush1.msra.mxu0 0.0
        %2548 = vmatprep.subr.mxu0 0.0
        %2549 = vmatpush1.msra.mxu0 0.0
        %2550 = vmatprep.subr.mxu0 0.0
        %2551 = vmatpush1.msra.mxu0 0.0
        %2552 = vmatprep.subr.mxu0 0.0
        %2553 = vmatpush1.msra.mxu0 0.0
        %v2554 = vand.u32 %v1973, 4294901760
        %2555 = vmatprep.subr.mxu0 %v2554
        %v2556 = vand.u32 %v1972, 4294901760
        %2557 = vmatpush1.msra.mxu0 %v2556
        %v2558 = vand.u32 %v1971, 4294901760
        %2559 = vmatprep.subr.mxu0 %v2558
        %v2560 = vand.u32 %v1970, 4294901760
        %2561 = vmatpush1.msra.mxu0 %v2560
        %v2562 = vand.u32 %v1969, 4294901760
        %2563 = vmatprep.subr.mxu0 %v2562
        %v2564 = vand.u32 %v1968, 4294901760
        %2565 = vmatpush1.msra.mxu0 %v2564
        %v2566 = vand.u32 %v1967, 4294901760
        %2567 = vmatprep.subr.mxu0 %v2566
        %v2568 = vand.u32 %v1966, 4294901760
        %2569 = vmatpush1.msra.mxu0 %v2568
        %v2570 = vand.u32 %v1965, 4294901760
        %2571 = vmatprep.subr.mxu0 %v2570
        %v2572 = vand.u32 %v1964, 4294901760
        %2573 = vmatpush1.msra.mxu0 %v2572
        %v2574 = vand.u32 %v1963, 4294901760
        %2575 = vmatprep.subr.mxu0 %v2574
        %v2576 = vand.u32 %v1962, 4294901760
        %2577 = vmatpush1.msra.mxu0 %v2576
        %v2578 = vand.u32 %v1961, 4294901760
        %2579 = vmatprep.subr.mxu0 %v2578
        %v2580 = vand.u32 %v1960, 4294901760
        %2581 = vmatpush1.msra.mxu0 %v2580
        %v2582 = vand.u32 %v1959, 4294901760
        %2583 = vmatprep.subr.mxu0 %v2582
        %v2584 = vand.u32 %v1958, 4294901760
        %2585 = vmatpush1.msra.mxu0 %v2584
        %2586 = vmatprep.subr.mxu0 0.0
        %2587 = vmatpush2.msra.mxu0 0.0
        %2588 = vmatprep.subr.mxu0 0.0
        %2589 = vmatpush2.msra.mxu0 0.0
        %2590 = vmatprep.subr.mxu0 0.0
        %2591 = vmatpush2.msra.mxu0 0.0
        %2592 = vmatprep.subr.mxu0 0.0
        %2593 = vmatpush2.msra.mxu0 0.0
        %2594 = vmatprep.subr.mxu0 0.0
        %2595 = vmatpush2.msra.mxu0 0.0
        %2596 = vmatprep.subr.mxu0 0.0
        %2597 = vmatpush2.msra.mxu0 0.0
        %2598 = vmatprep.subr.mxu0 0.0
        %2599 = vmatpush2.msra.mxu0 0.0
        %2600 = vmatprep.subr.mxu0 0.0
        %2601 = vmatpush2.msra.mxu0 0.0
        %2602 = vmatprep.subr.mxu0 0.0
        %2603 = vmatpush2.msra.mxu0 0.0
        %2604 = vmatprep.subr.mxu0 0.0
        %2605 = vmatpush2.msra.mxu0 0.0
        %2606 = vmatprep.subr.mxu0 0.0
        %2607 = vmatpush2.msra.mxu0 0.0
        %2608 = vmatprep.subr.mxu0 0.0
        %2609 = vmatpush2.msra.mxu0 0.0
        %2610 = vmatprep.subr.mxu0 0.0
        %2611 = vmatpush2.msra.mxu0 0.0
        %2612 = vmatprep.subr.mxu0 0.0
        %2613 = vmatpush2.msra.mxu0 0.0
        %2614 = vmatprep.subr.mxu0 0.0
        %2615 = vmatpush2.msra.mxu0 0.0
        %2616 = vmatprep.subr.mxu0 0.0
        %2617 = vmatpush2.msra.mxu0 0.0
        %2618 = vmatprep.mubr.f32.mxu0 0.0
        %v2619 = vand.u32 %v1984, 4294901760
        %v2620 = vsub.f32 %v1984, %v2619
        %v2621 = vand.u32 %v2620, 4294901760
        %2622 = vmatmul.mubr.f32.gmra.mxu0 %v2621
        %v2623 = vpop.f32.mrf.mxu0
        %v2624 = vadd.f32 %v2478, %v2623
        %v2625 = vpop.f32.mrf.mxu0
        %v2626 = vadd.f32 %v2480, %v2625
        %2627 = vmatprep.mubr.f32.mxu0 0.0
        %v2628 = vand.u32 %v1987, 4294901760
        %v2629 = vsub.f32 %v1987, %v2628
        %v2630 = vand.u32 %v2629, 4294901760
        %2631 = vmatmul.mubr.f32.gmra.mxu0 %v2630
        %v2632 = vpop.f32.mrf.mxu0
        %v2633 = vadd.f32 %v2486, %v2632
        %v2634 = vpop.f32.mrf.mxu0
        %v2635 = vadd.f32 %v2488, %v2634
        %2636 = vmatprep.mubr.f32.mxu0 0.0
        %v2637 = vand.u32 %v1990, 4294901760
        %v2638 = vsub.f32 %v1990, %v2637
        %v2639 = vand.u32 %v2638, 4294901760
        %2640 = vmatmul.mubr.f32.gmra.mxu0 %v2639
        %v2641 = vpop.f32.mrf.mxu0
        %v2642 = vadd.f32 %v2494, %v2641
        %v2643 = vpop.f32.mrf.mxu0
        %v2644 = vadd.f32 %v2496, %v2643
        %2645 = vmatprep.mubr.f32.mxu0 0.0
        %v2646 = vand.u32 %v1993, 4294901760
        %v2647 = vsub.f32 %v1993, %v2646
        %v2648 = vand.u32 %v2647, 4294901760
        %2649 = vmatmul.mubr.f32.gmra.mxu0 %v2648
        %v2650 = vpop.f32.mrf.mxu0
        %v2651 = vadd.f32 %v2502, %v2650
        %v2652 = vpop.f32.mrf.mxu0
        %v2653 = vadd.f32 %v2504, %v2652
        %2654 = vmatprep.mubr.f32.mxu0 0.0
        %v2655 = vand.u32 %v1996, 4294901760
        %v2656 = vsub.f32 %v1996, %v2655
        %v2657 = vand.u32 %v2656, 4294901760
        %2658 = vmatmul.mubr.f32.gmra.mxu0 %v2657
        %v2659 = vpop.f32.mrf.mxu0
        %v2660 = vadd.f32 %v2510, %v2659
        %v2661 = vpop.f32.mrf.mxu0
        %v2662 = vadd.f32 %v2512, %v2661
        %2663 = vmatprep.mubr.f32.mxu0 0.0
        %v2664 = vand.u32 %v1999, 4294901760
        %v2665 = vsub.f32 %v1999, %v2664
        %v2666 = vand.u32 %v2665, 4294901760
        %2667 = vmatmul.mubr.f32.gmra.mxu0 %v2666
        %v2668 = vpop.f32.mrf.mxu0
        %v2669 = vadd.f32 %v2518, %v2668
        %v2670 = vpop.f32.mrf.mxu0
        %v2671 = vadd.f32 %v2520, %v2670
        %2672 = vmatprep.mubr.f32.mxu0 0.0
        %v2673 = vand.u32 %v2002, 4294901760
        %v2674 = vsub.f32 %v2002, %v2673
        %v2675 = vand.u32 %v2674, 4294901760
        %2676 = vmatmul.mubr.f32.gmra.mxu0 %v2675
        %v2677 = vpop.f32.mrf.mxu0
        %v2678 = vadd.f32 %v2526, %v2677
        %v2679 = vpop.f32.mrf.mxu0
        %v2680 = vadd.f32 %v2528, %v2679
        %2681 = vmatprep.mubr.f32.mxu0 0.0
        %v2682 = vand.u32 %v2005, 4294901760
        %v2683 = vsub.f32 %v2005, %v2682
        %v2684 = vand.u32 %v2683, 4294901760
        %2685 = vmatmul.mubr.f32.gmra.mxu0 %v2684
        %v2686 = vpop.f32.mrf.mxu0
        %v2687 = vadd.f32 %v2534, %v2686
        %v2688 = vpop.f32.mrf.mxu0
        %v2689 = vadd.f32 %v2536, %v2688
        %2690 = vdwg.mxu0
        %2691 = vmatprep.subr.mxu0 0.0
        %2692 = vmatpush1.msra.mxu0 0.0
        %2693 = vmatprep.subr.mxu0 0.0
        %2694 = vmatpush1.msra.mxu0 0.0
        %2695 = vmatprep.subr.mxu0 0.0
        %2696 = vmatpush1.msra.mxu0 0.0
        %2697 = vmatprep.subr.mxu0 0.0
        %2698 = vmatpush1.msra.mxu0 0.0
        %2699 = vmatprep.subr.mxu0 0.0
        %2700 = vmatpush1.msra.mxu0 0.0
        %2701 = vmatprep.subr.mxu0 0.0
        %2702 = vmatpush1.msra.mxu0 0.0
        %2703 = vmatprep.subr.mxu0 0.0
        %2704 = vmatpush1.msra.mxu0 0.0
        %2705 = vmatprep.subr.mxu0 0.0
        %2706 = vmatpush1.msra.mxu0 0.0
        %v2707 = vand.u32 %v1973, 4294901760
        %v2708 = vsub.f32 %v1973, %v2707
        %v2709 = vand.u32 %v2708, 4294901760
        %2710 = vmatprep.subr.mxu0 %v2709
        %v2711 = vand.u32 %v1972, 4294901760
        %v2712 = vsub.f32 %v1972, %v2711
        %v2713 = vand.u32 %v2712, 4294901760
        %2714 = vmatpush1.msra.mxu0 %v2713
        %v2715 = vand.u32 %v1971, 4294901760
        %v2716 = vsub.f32 %v1971, %v2715
        %v2717 = vand.u32 %v2716, 4294901760
        %2718 = vmatprep.subr.mxu0 %v2717
        %v2719 = vand.u32 %v1970, 4294901760
        %v2720 = vsub.f32 %v1970, %v2719
        %v2721 = vand.u32 %v2720, 4294901760
        %2722 = vmatpush1.msra.mxu0 %v2721
        %v2723 = vand.u32 %v1969, 4294901760
        %v2724 = vsub.f32 %v1969, %v2723
        %v2725 = vand.u32 %v2724, 4294901760
        %2726 = vmatprep.subr.mxu0 %v2725
        %v2727 = vand.u32 %v1968, 4294901760
        %v2728 = vsub.f32 %v1968, %v2727
        %v2729 = vand.u32 %v2728, 4294901760
        %2730 = vmatpush1.msra.mxu0 %v2729
        %v2731 = vand.u32 %v1967, 4294901760
        %v2732 = vsub.f32 %v1967, %v2731
        %v2733 = vand.u32 %v2732, 4294901760
        %2734 = vmatprep.subr.mxu0 %v2733
        %v2735 = vand.u32 %v1966, 4294901760
        %v2736 = vsub.f32 %v1966, %v2735
        %v2737 = vand.u32 %v2736, 4294901760
        %2738 = vmatpush1.msra.mxu0 %v2737
        %v2739 = vand.u32 %v1965, 4294901760
        %v2740 = vsub.f32 %v1965, %v2739
        %v2741 = vand.u32 %v2740, 4294901760
        %2742 = vmatprep.subr.mxu0 %v2741
        %v2743 = vand.u32 %v1964, 4294901760
        %v2744 = vsub.f32 %v1964, %v2743
        %v2745 = vand.u32 %v2744, 4294901760
        %2746 = vmatpush1.msra.mxu0 %v2745
        %v2747 = vand.u32 %v1963, 4294901760
        %v2748 = vsub.f32 %v1963, %v2747
        %v2749 = vand.u32 %v2748, 4294901760
        %2750 = vmatprep.subr.mxu0 %v2749
        %v2751 = vand.u32 %v1962, 4294901760
        %v2752 = vsub.f32 %v1962, %v2751
        %v2753 = vand.u32 %v2752, 4294901760
        %2754 = vmatpush1.msra.mxu0 %v2753
        %v2755 = vand.u32 %v1961, 4294901760
        %v2756 = vsub.f32 %v1961, %v2755
        %v2757 = vand.u32 %v2756, 4294901760
        %2758 = vmatprep.subr.mxu0 %v2757
        %v2759 = vand.u32 %v1960, 4294901760
        %v2760 = vsub.f32 %v1960, %v2759
        %v2761 = vand.u32 %v2760, 4294901760
        %2762 = vmatpush1.msra.mxu0 %v2761
        %v2763 = vand.u32 %v1959, 4294901760
        %v2764 = vsub.f32 %v1959, %v2763
        %v2765 = vand.u32 %v2764, 4294901760
        %2766 = vmatprep.subr.mxu0 %v2765
        %v2767 = vand.u32 %v1958, 4294901760
        %v2768 = vsub.f32 %v1958, %v2767
        %v2769 = vand.u32 %v2768, 4294901760
        %2770 = vmatpush1.msra.mxu0 %v2769
        %2771 = vmatprep.subr.mxu0 0.0
        %2772 = vmatpush2.msra.mxu0 0.0
        %2773 = vmatprep.subr.mxu0 0.0
        %2774 = vmatpush2.msra.mxu0 0.0
        %2775 = vmatprep.subr.mxu0 0.0
        %2776 = vmatpush2.msra.mxu0 0.0
        %2777 = vmatprep.subr.mxu0 0.0
        %2778 = vmatpush2.msra.mxu0 0.0
        %2779 = vmatprep.subr.mxu0 0.0
        %2780 = vmatpush2.msra.mxu0 0.0
        %2781 = vmatprep.subr.mxu0 0.0
        %2782 = vmatpush2.msra.mxu0 0.0
        %2783 = vmatprep.subr.mxu0 0.0
        %2784 = vmatpush2.msra.mxu0 0.0
        %2785 = vmatprep.subr.mxu0 0.0
        %2786 = vmatpush2.msra.mxu0 0.0
        %2787 = vmatprep.subr.mxu0 0.0
        %2788 = vmatpush2.msra.mxu0 0.0
        %2789 = vmatprep.subr.mxu0 0.0
        %2790 = vmatpush2.msra.mxu0 0.0
        %2791 = vmatprep.subr.mxu0 0.0
        %2792 = vmatpush2.msra.mxu0 0.0
        %2793 = vmatprep.subr.mxu0 0.0
        %2794 = vmatpush2.msra.mxu0 0.0
        %2795 = vmatprep.subr.mxu0 0.0
        %2796 = vmatpush2.msra.mxu0 0.0
        %2797 = vmatprep.subr.mxu0 0.0
        %2798 = vmatpush2.msra.mxu0 0.0
        %2799 = vmatprep.subr.mxu0 0.0
        %2800 = vmatpush2.msra.mxu0 0.0
        %2801 = vmatprep.subr.mxu0 0.0
        %2802 = vmatpush2.msra.mxu0 0.0
        %2803 = vmatprep.mubr.f32.mxu0 0.0
        %v2804 = vand.u32 %v1984, 4294901760
        %2805 = vmatmul.mubr.f32.gmra.mxu0 %v2804
        %v2806 = vpop.f32.mrf.mxu0
        %v2807 = vadd.f32 %v2624, %v2806
        %v2808 = vpop.f32.mrf.mxu0
        %v2809 = vadd.f32 %v2626, %v2808
        %2810 = vmatprep.mubr.f32.mxu0 0.0
        %v2811 = vand.u32 %v1987, 4294901760
        %2812 = vmatmul.mubr.f32.gmra.mxu0 %v2811
        %v2813 = vpop.f32.mrf.mxu0
        %v2814 = vadd.f32 %v2633, %v2813
        %v2815 = vpop.f32.mrf.mxu0
        %v2816 = vadd.f32 %v2635, %v2815
        %2817 = vmatprep.mubr.f32.mxu0 0.0
        %v2818 = vand.u32 %v1990, 4294901760
        %2819 = vmatmul.mubr.f32.gmra.mxu0 %v2818
        %v2820 = vpop.f32.mrf.mxu0
        %v2821 = vadd.f32 %v2642, %v2820
        %v2822 = vpop.f32.mrf.mxu0
        %v2823 = vadd.f32 %v2644, %v2822
        %2824 = vmatprep.mubr.f32.mxu0 0.0
        %v2825 = vand.u32 %v1993, 4294901760
        %2826 = vmatmul.mubr.f32.gmra.mxu0 %v2825
        %v2827 = vpop.f32.mrf.mxu0
        %v2828 = vadd.f32 %v2651, %v2827
        %v2829 = vpop.f32.mrf.mxu0
        %v2830 = vadd.f32 %v2653, %v2829
        %2831 = vmatprep.mubr.f32.mxu0 0.0
        %v2832 = vand.u32 %v1996, 4294901760
        %2833 = vmatmul.mubr.f32.gmra.mxu0 %v2832
        %v2834 = vpop.f32.mrf.mxu0
        %v2835 = vadd.f32 %v2660, %v2834
        %v2836 = vpop.f32.mrf.mxu0
        %v2837 = vadd.f32 %v2662, %v2836
        %2838 = vmatprep.mubr.f32.mxu0 0.0
        %v2839 = vand.u32 %v1999, 4294901760
        %2840 = vmatmul.mubr.f32.gmra.mxu0 %v2839
        %v2841 = vpop.f32.mrf.mxu0
        %v2842 = vadd.f32 %v2669, %v2841
        %v2843 = vpop.f32.mrf.mxu0
        %v2844 = vadd.f32 %v2671, %v2843
        %2845 = vmatprep.mubr.f32.mxu0 0.0
        %v2846 = vand.u32 %v2002, 4294901760
        %2847 = vmatmul.mubr.f32.gmra.mxu0 %v2846
        %v2848 = vpop.f32.mrf.mxu0
        %v2849 = vadd.f32 %v2678, %v2848
        %v2850 = vpop.f32.mrf.mxu0
        %v2851 = vadd.f32 %v2680, %v2850
        %2852 = vmatprep.mubr.f32.mxu0 0.0
        %v2853 = vand.u32 %v2005, 4294901760
        %2854 = vmatmul.mubr.f32.gmra.mxu0 %v2853
        %v2855 = vpop.f32.mrf.mxu0
        %v2856 = vadd.f32 %v2687, %v2855
        %v2857 = vpop.f32.mrf.mxu0
        %v2858 = vadd.f32 %v2689, %v2857
        %2859 = vdwg.mxu0
        %2860 = vmatprep.subr.mxu0 0.0
        %2861 = vmatpush1.msra.mxu0 0.0
        %2862 = vmatprep.subr.mxu0 0.0
        %2863 = vmatpush1.msra.mxu0 0.0
        %2864 = vmatprep.subr.mxu0 0.0
        %2865 = vmatpush1.msra.mxu0 0.0
        %2866 = vmatprep.subr.mxu0 0.0
        %2867 = vmatpush1.msra.mxu0 0.0
        %2868 = vmatprep.subr.mxu0 0.0
        %2869 = vmatpush1.msra.mxu0 0.0
        %2870 = vmatprep.subr.mxu0 0.0
        %2871 = vmatpush1.msra.mxu0 0.0
        %2872 = vmatprep.subr.mxu0 0.0
        %2873 = vmatpush1.msra.mxu0 0.0
        %2874 = vmatprep.subr.mxu0 0.0
        %2875 = vmatpush1.msra.mxu0 0.0
        %v2876 = vand.u32 %v1973, 4294901760
        %2877 = vmatprep.subr.mxu0 %v2876
        %v2878 = vand.u32 %v1972, 4294901760
        %2879 = vmatpush1.msra.mxu0 %v2878
        %v2880 = vand.u32 %v1971, 4294901760
        %2881 = vmatprep.subr.mxu0 %v2880
        %v2882 = vand.u32 %v1970, 4294901760
        %2883 = vmatpush1.msra.mxu0 %v2882
        %v2884 = vand.u32 %v1969, 4294901760
        %2885 = vmatprep.subr.mxu0 %v2884
        %v2886 = vand.u32 %v1968, 4294901760
        %2887 = vmatpush1.msra.mxu0 %v2886
        %v2888 = vand.u32 %v1967, 4294901760
        %2889 = vmatprep.subr.mxu0 %v2888
        %v2890 = vand.u32 %v1966, 4294901760
        %2891 = vmatpush1.msra.mxu0 %v2890
        %v2892 = vand.u32 %v1965, 4294901760
        %2893 = vmatprep.subr.mxu0 %v2892
        %v2894 = vand.u32 %v1964, 4294901760
        %2895 = vmatpush1.msra.mxu0 %v2894
        %v2896 = vand.u32 %v1963, 4294901760
        %2897 = vmatprep.subr.mxu0 %v2896
        %v2898 = vand.u32 %v1962, 4294901760
        %2899 = vmatpush1.msra.mxu0 %v2898
        %v2900 = vand.u32 %v1961, 4294901760
        %2901 = vmatprep.subr.mxu0 %v2900
        %v2902 = vand.u32 %v1960, 4294901760
        %2903 = vmatpush1.msra.mxu0 %v2902
        %v2904 = vand.u32 %v1959, 4294901760
        %2905 = vmatprep.subr.mxu0 %v2904
        %v2906 = vand.u32 %v1958, 4294901760
        %2907 = vmatpush1.msra.mxu0 %v2906
        %2908 = vmatprep.subr.mxu0 0.0
        %2909 = vmatpush2.msra.mxu0 0.0
        %2910 = vmatprep.subr.mxu0 0.0
        %2911 = vmatpush2.msra.mxu0 0.0
        %2912 = vmatprep.subr.mxu0 0.0
        %2913 = vmatpush2.msra.mxu0 0.0
        %2914 = vmatprep.subr.mxu0 0.0
        %2915 = vmatpush2.msra.mxu0 0.0
        %2916 = vmatprep.subr.mxu0 0.0
        %2917 = vmatpush2.msra.mxu0 0.0
        %2918 = vmatprep.subr.mxu0 0.0
        %2919 = vmatpush2.msra.mxu0 0.0
        %2920 = vmatprep.subr.mxu0 0.0
        %2921 = vmatpush2.msra.mxu0 0.0
        %2922 = vmatprep.subr.mxu0 0.0
        %2923 = vmatpush2.msra.mxu0 0.0
        %2924 = vmatprep.subr.mxu0 0.0
        %2925 = vmatpush2.msra.mxu0 0.0
        %2926 = vmatprep.subr.mxu0 0.0
        %2927 = vmatpush2.msra.mxu0 0.0
        %2928 = vmatprep.subr.mxu0 0.0
        %2929 = vmatpush2.msra.mxu0 0.0
        %2930 = vmatprep.subr.mxu0 0.0
        %2931 = vmatpush2.msra.mxu0 0.0
        %2932 = vmatprep.subr.mxu0 0.0
        %2933 = vmatpush2.msra.mxu0 0.0
        %2934 = vmatprep.subr.mxu0 0.0
        %2935 = vmatpush2.msra.mxu0 0.0
        %2936 = vmatprep.subr.mxu0 0.0
        %2937 = vmatpush2.msra.mxu0 0.0
        %2938 = vmatprep.subr.mxu0 0.0
        %2939 = vmatpush2.msra.mxu0 0.0
        %2940 = vmatprep.mubr.f32.mxu0 0.0
        %v2941 = vand.u32 %v1984, 4294901760
        %2942 = vmatmul.mubr.f32.gmra.mxu0 %v2941
        %v2943 = vpop.f32.mrf.mxu0
        %v2944 = vadd.f32 %v2807, %v2943
        %v2945 = vpop.f32.mrf.mxu0
        %v2946 = vadd.f32 %v2809, %v2945
        %2947 = vmatprep.mubr.f32.mxu0 0.0
        %v2948 = vand.u32 %v1987, 4294901760
        %2949 = vmatmul.mubr.f32.gmra.mxu0 %v2948
        %v2950 = vpop.f32.mrf.mxu0
        %v2951 = vadd.f32 %v2814, %v2950
        %v2952 = vpop.f32.mrf.mxu0
        %v2953 = vadd.f32 %v2816, %v2952
        %2954 = vmatprep.mubr.f32.mxu0 0.0
        %v2955 = vand.u32 %v1990, 4294901760
        %2956 = vmatmul.mubr.f32.gmra.mxu0 %v2955
        %v2957 = vpop.f32.mrf.mxu0
        %v2958 = vadd.f32 %v2821, %v2957
        %v2959 = vpop.f32.mrf.mxu0
        %v2960 = vadd.f32 %v2823, %v2959
        %2961 = vmatprep.mubr.f32.mxu0 0.0
        %v2962 = vand.u32 %v1993, 4294901760
        %2963 = vmatmul.mubr.f32.gmra.mxu0 %v2962
        %v2964 = vpop.f32.mrf.mxu0
        %v2965 = vadd.f32 %v2828, %v2964
        %v2966 = vpop.f32.mrf.mxu0
        %v2967 = vadd.f32 %v2830, %v2966
        %2968 = vmatprep.mubr.f32.mxu0 0.0
        %v2969 = vand.u32 %v1996, 4294901760
        %2970 = vmatmul.mubr.f32.gmra.mxu0 %v2969
        %v2971 = vpop.f32.mrf.mxu0
        %v2972 = vadd.f32 %v2835, %v2971
        %v2973 = vpop.f32.mrf.mxu0
        %v2974 = vadd.f32 %v2837, %v2973
        %2975 = vmatprep.mubr.f32.mxu0 0.0
        %v2976 = vand.u32 %v1999, 4294901760
        %2977 = vmatmul.mubr.f32.gmra.mxu0 %v2976
        %v2978 = vpop.f32.mrf.mxu0
        %v2979 = vadd.f32 %v2842, %v2978
        %v2980 = vpop.f32.mrf.mxu0
        %v2981 = vadd.f32 %v2844, %v2980
        %2982 = vmatprep.mubr.f32.mxu0 0.0
        %v2983 = vand.u32 %v2002, 4294901760
        %2984 = vmatmul.mubr.f32.gmra.mxu0 %v2983
        %v2985 = vpop.f32.mrf.mxu0
        %v2986 = vadd.f32 %v2849, %v2985
        %v2987 = vpop.f32.mrf.mxu0
        %v2988 = vadd.f32 %v2851, %v2987
        %2989 = vmatprep.mubr.f32.mxu0 0.0
        %v2990 = vand.u32 %v2005, 4294901760
        %2991 = vmatmul.mubr.f32.gmra.mxu0 %v2990
        %v2992 = vpop.f32.mrf.mxu0
        %v2993 = vadd.f32 %v2856, %v2992
        %v2994 = vpop.f32.mrf.mxu0
        %v2995 = vadd.f32 %v2858, %v2994
        %2996 = vdwg.mxu0
        %v2997 = vadd.f32 %v1749, %v2944
        %v2998 = vadd.f32 %v1751, %v2946
        %v2999 = vadd.f32 %v1756, %v2951
        %v3000 = vadd.f32 %v1758, %v2953
        %v3001 = vadd.f32 %v1763, %v2958
        %v3002 = vadd.f32 %v1765, %v2960
        %v3003 = vadd.f32 %v1770, %v2965
        %v3004 = vadd.f32 %v1772, %v2967
        %v3005 = vadd.f32 %v1777, %v2972
        %v3006 = vadd.f32 %v1779, %v2974
        %v3007 = vadd.f32 %v1784, %v2979
        %v3008 = vadd.f32 %v1786, %v2981
        %v3009 = vadd.f32 %v1791, %v2986
        %v3010 = vadd.f32 %v1793, %v2988
        %v3011 = vadd.f32 %v1798, %v2993
        %v3012 = vadd.f32 %v1800, %v2995
        %v3013 = vmax.f32 %v2997, 0.0
        %v3014 = vmax.f32 %v2998, 0.0
        %v3015 = vmax.f32 %v2999, 0.0
        %v3016 = vmax.f32 %v3000, 0.0
        %v3017 = vmax.f32 %v3001, 0.0
        %v3018 = vmax.f32 %v3002, 0.0
        %v3019 = vmax.f32 %v3003, 0.0
        %v3020 = vmax.f32 %v3004, 0.0
        %v3021 = vmax.f32 %v3005, 0.0
        %v3022 = vmax.f32 %v3006, 0.0
        %v3023 = vmax.f32 %v3007, 0.0
        %v3024 = vmax.f32 %v3008, 0.0
        %v3025 = vmax.f32 %v3009, 0.0
        %v3026 = vmax.f32 %v3010, 0.0
        %v3027 = vmax.f32 %v3011, 0.0
        %v3028 = vmax.f32 %v3012, 0.0
        %v3029 = vmul.f32 %v3013, %v3013
        %v3030 = vmul.f32 %v3014, %v3014
        %v3031 = vmul.f32 %v3015, %v3015
        %v3032 = vmul.f32 %v3016, %v3016
        %v3033 = vmul.f32 %v3017, %v3017
        %v3034 = vmul.f32 %v3018, %v3018
        %v3035 = vmul.f32 %v3019, %v3019
        %v3036 = vmul.f32 %v3020, %v3020
        %v3037 = vmul.f32 %v3021, %v3021
        %v3038 = vmul.f32 %v3022, %v3022
        %v3039 = vmul.f32 %v3023, %v3023
        %v3040 = vmul.f32 %v3024, %v3024
        %v3041 = vmul.f32 %v3025, %v3025
        %v3042 = vmul.f32 %v3026, %v3026
        %v3043 = vmul.f32 %v3027, %v3027
        %v3044 = vmul.f32 %v3028, %v3028
        %v3045 = vmul.f32 %v3013, 100.0
        %v3046 = vmul.f32 %v3014, 100.0
        %v3047 = vmul.f32 %v3015, 100.0
        %v3048 = vmul.f32 %v3016, 100.0
        %v3049 = vmul.f32 %v3017, 100.0
        %v3050 = vmul.f32 %v3018, 100.0
        %v3051 = vmul.f32 %v3019, 100.0
        %v3052 = vmul.f32 %v3020, 100.0
        %v3053 = vmul.f32 %v3021, 100.0
        %v3054 = vmul.f32 %v3022, 100.0
        %v3055 = vmul.f32 %v3023, 100.0
        %v3056 = vmul.f32 %v3024, 100.0
        %v3057 = vmul.f32 %v3025, 100.0
        %v3058 = vmul.f32 %v3026, 100.0
        %v3059 = vmul.f32 %v3027, 100.0
        %v3060 = vmul.f32 %v3028, 100.0
        %v3061 = vmul.f32 %v3029, 500.0
        %v3062 = vmul.f32 %v3030, 500.0
        %v3063 = vmul.f32 %v3031, 500.0
        %v3064 = vmul.f32 %v3032, 500.0
        %v3065 = vmul.f32 %v3033, 500.0
        %v3066 = vmul.f32 %v3034, 500.0
        %v3067 = vmul.f32 %v3035, 500.0
        %v3068 = vmul.f32 %v3036, 500.0
        %v3069 = vmul.f32 %v3037, 500.0
        %v3070 = vmul.f32 %v3038, 500.0
        %v3071 = vmul.f32 %v3039, 500.0
        %v3072 = vmul.f32 %v3040, 500.0
        %v3073 = vmul.f32 %v3041, 500.0
        %v3074 = vmul.f32 %v3042, 500.0
        %v3075 = vmul.f32 %v3043, 500.0
        %v3076 = vmul.f32 %v3044, 500.0
        %v3077 = vsub.f32 %v3045, %v3061
        %v3078 = vsub.f32 %v3046, %v3062
        %v3079 = vsub.f32 %v3047, %v3063
        %v3080 = vsub.f32 %v3048, %v3064
        %v3081 = vsub.f32 %v3049, %v3065
        %v3082 = vsub.f32 %v3050, %v3066
        %v3083 = vsub.f32 %v3051, %v3067
        %v3084 = vsub.f32 %v3052, %v3068
        %v3085 = vsub.f32 %v3053, %v3069
        %v3086 = vsub.f32 %v3054, %v3070
        %v3087 = vsub.f32 %v3055, %v3071
        %v3088 = vsub.f32 %v3056, %v3072
        %v3089 = vsub.f32 %v3057, %v3073
        %v3090 = vsub.f32 %v3058, %v3074
        %v3091 = vsub.f32 %v3059, %v3075
        %v3092 = vsub.f32 %v3060, %v3076
        %v3093 = vmul.f32 %v3029, %v3077
        %v3094 = vmul.f32 %v3030, %v3078
        %v3095 = vmul.f32 %v3031, %v3079
        %v3096 = vmul.f32 %v3032, %v3080
        %v3097 = vmul.f32 %v3033, %v3081
        %v3098 = vmul.f32 %v3034, %v3082
        %v3099 = vmul.f32 %v3035, %v3083
        %v3100 = vmul.f32 %v3036, %v3084
        %v3101 = vmul.f32 %v3037, %v3085
        %v3102 = vmul.f32 %v3038, %v3086
        %v3103 = vmul.f32 %v3039, %v3087
        %v3104 = vmul.f32 %v3040, %v3088
        %v3105 = vmul.f32 %v3041, %v3089
        %v3106 = vmul.f32 %v3042, %v3090
        %v3107 = vmul.f32 %v3043, %v3091
        %v3108 = vmul.f32 %v3044, %v3092
        %vm3109 = vcmp.lt.f32.partialorder %v2997, 0.1
        %vm3110 = vcmp.lt.f32.partialorder %v2998, 0.1
        %vm3111 = vcmp.lt.f32.partialorder %v2999, 0.1
        %vm3112 = vcmp.lt.f32.partialorder %v3000, 0.1
        %vm3113 = vcmp.lt.f32.partialorder %v3001, 0.1
        %vm3114 = vcmp.lt.f32.partialorder %v3002, 0.1
        %vm3115 = vcmp.lt.f32.partialorder %v3003, 0.1
        %vm3116 = vcmp.lt.f32.partialorder %v3004, 0.1
        %vm3117 = vcmp.lt.f32.partialorder %v3005, 0.1
        %vm3118 = vcmp.lt.f32.partialorder %v3006, 0.1
        %vm3119 = vcmp.lt.f32.partialorder %v3007, 0.1
        %vm3120 = vcmp.lt.f32.partialorder %v3008, 0.1
        %vm3121 = vcmp.lt.f32.partialorder %v3009, 0.1
        %vm3122 = vcmp.lt.f32.partialorder %v3010, 0.1
        %vm3123 = vcmp.lt.f32.partialorder %v3011, 0.1
        %vm3124 = vcmp.lt.f32.partialorder %v3012, 0.1
        %v3125 = vsub.f32 %v2997, 0.05
        %v3126 = vsub.f32 %v2998, 0.05
        %v3127 = vsub.f32 %v2999, 0.05
        %v3128 = vsub.f32 %v3000, 0.05
        %v3129 = vsub.f32 %v3001, 0.05
        %v3130 = vsub.f32 %v3002, 0.05
        %v3131 = vsub.f32 %v3003, 0.05
        %v3132 = vsub.f32 %v3004, 0.05
        %v3133 = vsub.f32 %v3005, 0.05
        %v3134 = vsub.f32 %v3006, 0.05
        %v3135 = vsub.f32 %v3007, 0.05
        %v3136 = vsub.f32 %v3008, 0.05
        %v3137 = vsub.f32 %v3009, 0.05
        %v3138 = vsub.f32 %v3010, 0.05
        %v3139 = vsub.f32 %v3011, 0.05
        %v3140 = vsub.f32 %v3012, 0.05
        %v3141 = vsel %vm3109, %v3093, %v3125
        %v3142 = vsel %vm3110, %v3094, %v3126
        %v3143 = vsel %vm3111, %v3095, %v3127
        %v3144 = vsel %vm3112, %v3096, %v3128
        %v3145 = vsel %vm3113, %v3097, %v3129
        %v3146 = vsel %vm3114, %v3098, %v3130
        %v3147 = vsel %vm3115, %v3099, %v3131
        %v3148 = vsel %vm3116, %v3100, %v3132
        %v3149 = vsel %vm3117, %v3101, %v3133
        %v3150 = vsel %vm3118, %v3102, %v3134
        %v3151 = vsel %vm3119, %v3103, %v3135
        %v3152 = vsel %vm3120, %v3104, %v3136
        %v3153 = vsel %vm3121, %v3105, %v3137
        %v3154 = vsel %vm3122, %v3106, %v3138
        %v3155 = vsel %vm3123, %v3107, %v3139
        %v3156 = vsel %vm3124, %v3108, %v3140
        %v3157 = vmul.f32 %v344, %v344
        %v3158 = vmul.f32 %v345, %v345
        %vm3159 = vcmask 1043456
        %v3160 = vsel %vm3159, %v3157, 0.0
        %v3161 = vrot.slane %v3160, 4
        %v3162 = vadd.f32 %v3160, %v3161
        %v3163 = vrot.slane %v3162, 2
        %v3164 = vadd.f32 %v3162, %v3163
        %v3165 = vrot.slane %v3164, 1
        %v3166 = vadd.f32 %v3164, %v3165
        %v3167 = vsel %vm3159, %v3158, 0.0
        %v3168 = vrot.slane %v3167, 4
        %v3169 = vadd.f32 %v3167, %v3168
        %v3170 = vrot.slane %v3169, 2
        %v3171 = vadd.f32 %v3169, %v3170
        %v3172 = vrot.slane %v3171, 1
        %v3173 = vadd.f32 %v3171, %v3172
        %v3174 = vld [vmem:[%s3] sm:$0xff]
        %v3175 = vld [vmem:[%s3 + $0x8] sm:$0xff]
        %v3176 = vld [vmem:[%s3 + $0x10] sm:$0xff]
        %v3177 = vld [vmem:[%s3 + $0x18] sm:$0xff]
        %v3178 = vld [vmem:[%s3 + $0x20] sm:$0xff]
        %v3179 = vld [vmem:[%s3 + $0x28] sm:$0xff]
        %v3180 = vld [vmem:[%s3 + $0x30] sm:$0xff]
        %v3181 = vld [vmem:[%s3 + $0x38] sm:$0xff]
        %3183 = vset.pattern.permute.xlu0 0
        %3184 = vperm.xlu0 %3183, %v3174
        %v3185 = vpop.permute.xlu0 %3184
        %3188 = vset.pattern.permute.xlu0 0
        %3189 = vperm.xlu0 %3188, %v3175
        %v3190 = vpop.permute.xlu0 %3189
        %3193 = vset.pattern.permute.xlu0 0
        %3194 = vperm.xlu0 %3193, %v3176
        %v3195 = vpop.permute.xlu0 %3194
        %3198 = vset.pattern.permute.xlu0 0
        %3199 = vperm.xlu0 %3198, %v3177
        %v3200 = vpop.permute.xlu0 %3199
        %3203 = vset.pattern.permute.xlu0 0
        %3204 = vperm.xlu0 %3203, %v3178
        %v3205 = vpop.permute.xlu0 %3204
        %3208 = vset.pattern.permute.xlu0 0
        %3209 = vperm.xlu0 %3208, %v3179
        %v3210 = vpop.permute.xlu0 %3209
        %3213 = vset.pattern.permute.xlu0 0
        %3214 = vperm.xlu0 %3213, %v3180
        %v3215 = vpop.permute.xlu0 %3214
        %3218 = vset.pattern.permute.xlu0 0
        %3219 = vperm.xlu0 %3218, %v3181
        %v3220 = vpop.permute.xlu0 %3219
        %v3222 = vsub.f32 %v3141, %v3185
        %v3223 = vsub.f32 %v3142, %v3185
        %v3224 = vsub.f32 %v3143, %v3190
        %v3225 = vsub.f32 %v3144, %v3190
        %v3226 = vsub.f32 %v3145, %v3195
        %v3227 = vsub.f32 %v3146, %v3195
        %v3228 = vsub.f32 %v3147, %v3200
        %v3229 = vsub.f32 %v3148, %v3200
        %v3230 = vsub.f32 %v3149, %v3205
        %v3231 = vsub.f32 %v3150, %v3205
        %v3232 = vsub.f32 %v3151, %v3210
        %v3233 = vsub.f32 %v3152, %v3210
        %v3234 = vsub.f32 %v3153, %v3215
        %v3235 = vsub.f32 %v3154, %v3215
        %v3236 = vsub.f32 %v3155, %v3220
        %v3237 = vsub.f32 %v3156, %v3220
        %v3238 = vmax.f32 %v3222, 0.0
        %v3239 = vmax.f32 %v3223, 0.0
        %v3240 = vmax.f32 %v3224, 0.0
        %v3241 = vmax.f32 %v3225, 0.0
        %v3242 = vmax.f32 %v3226, 0.0
        %v3243 = vmax.f32 %v3227, 0.0
        %v3244 = vmax.f32 %v3228, 0.0
        %v3245 = vmax.f32 %v3229, 0.0
        %v3246 = vmax.f32 %v3230, 0.0
        %v3247 = vmax.f32 %v3231, 0.0
        %v3248 = vmax.f32 %v3232, 0.0
        %v3249 = vmax.f32 %v3233, 0.0
        %v3250 = vmax.f32 %v3234, 0.0
        %v3251 = vmax.f32 %v3235, 0.0
        %v3252 = vmax.f32 %v3236, 0.0
        %v3253 = vmax.f32 %v3237, 0.0
        %v3254 = vmul.f32 %v3238, %v3238
        %v3255 = vmul.f32 %v3239, %v3239
        %v3256 = vmul.f32 %v3240, %v3240
        %v3257 = vmul.f32 %v3241, %v3241
        %v3258 = vmul.f32 %v3242, %v3242
        %v3259 = vmul.f32 %v3243, %v3243
        %v3260 = vmul.f32 %v3244, %v3244
        %v3261 = vmul.f32 %v3245, %v3245
        %v3262 = vmul.f32 %v3246, %v3246
        %v3263 = vmul.f32 %v3247, %v3247
        %v3264 = vmul.f32 %v3248, %v3248
        %v3265 = vmul.f32 %v3249, %v3249
        %v3266 = vmul.f32 %v3250, %v3250
        %v3267 = vmul.f32 %v3251, %v3251
        %v3268 = vmul.f32 %v3252, %v3252
        %v3269 = vmul.f32 %v3253, %v3253
        %v3270 = vmul.f32 %v3238, 100.0
        %v3271 = vmul.f32 %v3239, 100.0
        %v3272 = vmul.f32 %v3240, 100.0
        %v3273 = vmul.f32 %v3241, 100.0
        %v3274 = vmul.f32 %v3242, 100.0
        %v3275 = vmul.f32 %v3243, 100.0
        %v3276 = vmul.f32 %v3244, 100.0
        %v3277 = vmul.f32 %v3245, 100.0
        %v3278 = vmul.f32 %v3246, 100.0
        %v3279 = vmul.f32 %v3247, 100.0
        %v3280 = vmul.f32 %v3248, 100.0
        %v3281 = vmul.f32 %v3249, 100.0
        %v3282 = vmul.f32 %v3250, 100.0
        %v3283 = vmul.f32 %v3251, 100.0
        %v3284 = vmul.f32 %v3252, 100.0
        %v3285 = vmul.f32 %v3253, 100.0
        %v3286 = vmul.f32 %v3254, 500.0
        %v3287 = vmul.f32 %v3255, 500.0
        %v3288 = vmul.f32 %v3256, 500.0
        %v3289 = vmul.f32 %v3257, 500.0
        %v3290 = vmul.f32 %v3258, 500.0
        %v3291 = vmul.f32 %v3259, 500.0
        %v3292 = vmul.f32 %v3260, 500.0
        %v3293 = vmul.f32 %v3261, 500.0
        %v3294 = vmul.f32 %v3262, 500.0
        %v3295 = vmul.f32 %v3263, 500.0
        %v3296 = vmul.f32 %v3264, 500.0
        %v3297 = vmul.f32 %v3265, 500.0
        %v3298 = vmul.f32 %v3266, 500.0
        %v3299 = vmul.f32 %v3267, 500.0
        %v3300 = vmul.f32 %v3268, 500.0
        %v3301 = vmul.f32 %v3269, 500.0
        %v3302 = vsub.f32 %v3270, %v3286
        %v3303 = vsub.f32 %v3271, %v3287
        %v3304 = vsub.f32 %v3272, %v3288
        %v3305 = vsub.f32 %v3273, %v3289
        %v3306 = vsub.f32 %v3274, %v3290
        %v3307 = vsub.f32 %v3275, %v3291
        %v3308 = vsub.f32 %v3276, %v3292
        %v3309 = vsub.f32 %v3277, %v3293
        %v3310 = vsub.f32 %v3278, %v3294
        %v3311 = vsub.f32 %v3279, %v3295
        %v3312 = vsub.f32 %v3280, %v3296
        %v3313 = vsub.f32 %v3281, %v3297
        %v3314 = vsub.f32 %v3282, %v3298
        %v3315 = vsub.f32 %v3283, %v3299
        %v3316 = vsub.f32 %v3284, %v3300
        %v3317 = vsub.f32 %v3285, %v3301
        %v3318 = vmul.f32 %v3254, %v3302
        %v3319 = vmul.f32 %v3255, %v3303
        %v3320 = vmul.f32 %v3256, %v3304
        %v3321 = vmul.f32 %v3257, %v3305
        %v3322 = vmul.f32 %v3258, %v3306
        %v3323 = vmul.f32 %v3259, %v3307
        %v3324 = vmul.f32 %v3260, %v3308
        %v3325 = vmul.f32 %v3261, %v3309
        %v3326 = vmul.f32 %v3262, %v3310
        %v3327 = vmul.f32 %v3263, %v3311
        %v3328 = vmul.f32 %v3264, %v3312
        %v3329 = vmul.f32 %v3265, %v3313
        %v3330 = vmul.f32 %v3266, %v3314
        %v3331 = vmul.f32 %v3267, %v3315
        %v3332 = vmul.f32 %v3268, %v3316
        %v3333 = vmul.f32 %v3269, %v3317
        %vm3334 = vcmp.lt.f32.partialorder %v3222, 0.1
        %vm3335 = vcmp.lt.f32.partialorder %v3223, 0.1
        %vm3336 = vcmp.lt.f32.partialorder %v3224, 0.1
        %vm3337 = vcmp.lt.f32.partialorder %v3225, 0.1
        %vm3338 = vcmp.lt.f32.partialorder %v3226, 0.1
        %vm3339 = vcmp.lt.f32.partialorder %v3227, 0.1
        %vm3340 = vcmp.lt.f32.partialorder %v3228, 0.1
        %vm3341 = vcmp.lt.f32.partialorder %v3229, 0.1
        %vm3342 = vcmp.lt.f32.partialorder %v3230, 0.1
        %vm3343 = vcmp.lt.f32.partialorder %v3231, 0.1
        %vm3344 = vcmp.lt.f32.partialorder %v3232, 0.1
        %vm3345 = vcmp.lt.f32.partialorder %v3233, 0.1
        %vm3346 = vcmp.lt.f32.partialorder %v3234, 0.1
        %vm3347 = vcmp.lt.f32.partialorder %v3235, 0.1
        %vm3348 = vcmp.lt.f32.partialorder %v3236, 0.1
        %vm3349 = vcmp.lt.f32.partialorder %v3237, 0.1
        %v3350 = vsub.f32 %v3222, 0.05
        %v3351 = vsub.f32 %v3223, 0.05
        %v3352 = vsub.f32 %v3224, 0.05
        %v3353 = vsub.f32 %v3225, 0.05
        %v3354 = vsub.f32 %v3226, 0.05
        %v3355 = vsub.f32 %v3227, 0.05
        %v3356 = vsub.f32 %v3228, 0.05
        %v3357 = vsub.f32 %v3229, 0.05
        %v3358 = vsub.f32 %v3230, 0.05
        %v3359 = vsub.f32 %v3231, 0.05
        %v3360 = vsub.f32 %v3232, 0.05
        %v3361 = vsub.f32 %v3233, 0.05
        %v3362 = vsub.f32 %v3234, 0.05
        %v3363 = vsub.f32 %v3235, 0.05
        %v3364 = vsub.f32 %v3236, 0.05
        %v3365 = vsub.f32 %v3237, 0.05
        %v3366 = vsel %vm3334, %v3318, %v3350
        %v3367 = vsel %vm3335, %v3319, %v3351
        %v3368 = vsel %vm3336, %v3320, %v3352
        %v3369 = vsel %vm3337, %v3321, %v3353
        %v3370 = vsel %vm3338, %v3322, %v3354
        %v3371 = vsel %vm3339, %v3323, %v3355
        %v3372 = vsel %vm3340, %v3324, %v3356
        %v3373 = vsel %vm3341, %v3325, %v3357
        %v3374 = vsel %vm3342, %v3326, %v3358
        %v3375 = vsel %vm3343, %v3327, %v3359
        %v3376 = vsel %vm3344, %v3328, %v3360
        %v3377 = vsel %vm3345, %v3329, %v3361
        %v3378 = vsel %vm3346, %v3330, %v3362
        %v3379 = vsel %vm3347, %v3331, %v3363
        %v3380 = vsel %vm3348, %v3332, %v3364
        %v3381 = vsel %vm3349, %v3333, %v3365
        %v3382 = vmul.f32 %v3166, 0.001
        %v3383 = vmul.f32 %v3173, 0.001
        %v3384 = vadd.f32 %v3366, %v3382
        %v3385 = vadd.f32 %v3367, %v3383
        %v3386 = vadd.f32 %v3368, %v3382
        %v3387 = vadd.f32 %v3369, %v3383
        %v3388 = vadd.f32 %v3370, %v3382
        %v3389 = vadd.f32 %v3371, %v3383
        %v3390 = vadd.f32 %v3372, %v3382
        %v3391 = vadd.f32 %v3373, %v3383
        %v3392 = vadd.f32 %v3374, %v3382
        %v3393 = vadd.f32 %v3375, %v3383
        %v3394 = vadd.f32 %v3376, %v3382
        %v3395 = vadd.f32 %v3377, %v3383
        %v3396 = vadd.f32 %v3378, %v3382
        %v3397 = vadd.f32 %v3379, %v3383
        %v3398 = vadd.f32 %v3380, %v3382
        %v3399 = vadd.f32 %v3381, %v3383
        %3400 = vst [vmem:[%s323] sm:$0xff] %v3384
        %3401 = vst [vmem:[%s323 + $0x8] sm:$0xff] %v3385
        %3402 = vst [vmem:[%s323 + $0x10] sm:$0xff] %v3386
        %3403 = vst [vmem:[%s323 + $0x18] sm:$0xff] %v3387
        %3404 = vst [vmem:[%s323 + $0x20] sm:$0xff] %v3388
        %3405 = vst [vmem:[%s323 + $0x28] sm:$0xff] %v3389
        %3406 = vst [vmem:[%s323 + $0x30] sm:$0xff] %v3390
        %3407 = vst [vmem:[%s323 + $0x38] sm:$0xff] %v3391
        %3408 = vst [vmem:[%s323 + $0x40] sm:$0xff] %v3392
        %3409 = vst [vmem:[%s323 + $0x48] sm:$0xff] %v3393
        %3410 = vst [vmem:[%s323 + $0x50] sm:$0xff] %v3394
        %3411 = vst [vmem:[%s323 + $0x58] sm:$0xff] %v3395
        %3412 = vst [vmem:[%s323 + $0x60] sm:$0xff] %v3396
        %3413 = vst [vmem:[%s323 + $0x68] sm:$0xff] %v3397
        %3414 = vst [vmem:[%s323 + $0x70] sm:$0xff] %v3398
        %3415 = vst [vmem:[%s323 + $0x78] sm:$0xff] %v3399
        %v3416 = vmax.f32 %v1805, 0.0
        %v3417 = vmax.f32 %v1807, 0.0
        %v3418 = vmax.f32 %v1812, 0.0
        %v3419 = vmax.f32 %v1814, 0.0
        %v3420 = vmax.f32 %v1819, 0.0
        %v3421 = vmax.f32 %v1821, 0.0
        %v3422 = vmax.f32 %v1826, 0.0
        %v3423 = vmax.f32 %v1828, 0.0
        %v3424 = vld [vmem:[%s4] sm:$0xff]
        %v3425 = vld [vmem:[%s4 + $0x8] sm:$0xff]
        %v3426 = vld [vmem:[%s4 + $0x10] sm:$0xff]
        %v3427 = vld [vmem:[%s4 + $0x18] sm:$0xff]
        %v3428 = vld [vmem:[%s5] sm:$0xff]
        %v3429 = vld [vmem:[%s5 + $0x8] sm:$0xff]
        %v3430 = vld [vmem:[%s5 + $0x10] sm:$0xff]
        %v3431 = vld [vmem:[%s5 + $0x18] sm:$0xff]
        %3433 = vset.pattern.permute.xlu0 0
        %3434 = vperm.xlu0 %3433, %v3428
        %v3435 = vpop.permute.xlu0 %3434
        %3438 = vset.pattern.permute.xlu0 0
        %3439 = vperm.xlu0 %3438, %v3429
        %v3440 = vpop.permute.xlu0 %3439
        %3443 = vset.pattern.permute.xlu0 0
        %3444 = vperm.xlu0 %3443, %v3430
        %v3445 = vpop.permute.xlu0 %3444
        %3448 = vset.pattern.permute.xlu0 0
        %3449 = vperm.xlu0 %3448, %v3431
        %v3450 = vpop.permute.xlu0 %3449
        %vm3452 = vcmask 261120
        %v3454 = vsel %vm3452, %v3424, 0
        %v3457 = vsel %vm3452, %v3425, 0
        %v3460 = vsel %vm3452, %v3426, 0
        %v3463 = vsel %vm3452, %v3427, 0
        %3465 = vmatprep.subr.mxu0 0.0
        %3466 = vmatpush1.msra.mxu0 0.0
        %3467 = vmatprep.subr.mxu0 0.0
        %3468 = vmatpush1.msra.mxu0 0.0
        %3469 = vmatprep.subr.mxu0 0.0
        %3470 = vmatpush1.msra.mxu0 0.0
        %3471 = vmatprep.subr.mxu0 0.0
        %3472 = vmatpush1.msra.mxu0 0.0
        %3473 = vmatprep.subr.mxu0 0.0
        %3474 = vmatpush1.msra.mxu0 0.0
        %3475 = vmatprep.subr.mxu0 0.0
        %3476 = vmatpush1.msra.mxu0 0.0
        %3477 = vmatprep.subr.mxu0 0.0
        %3478 = vmatpush1.msra.mxu0 0.0
        %3479 = vmatprep.subr.mxu0 0.0
        %3480 = vmatpush1.msra.mxu0 0.0
        %3481 = vmatprep.subr.mxu0 0.0
        %3482 = vmatpush1.msra.mxu0 0.0
        %3483 = vmatprep.subr.mxu0 0.0
        %3484 = vmatpush1.msra.mxu0 0.0
        %3485 = vmatprep.subr.mxu0 0.0
        %3486 = vmatpush1.msra.mxu0 0.0
        %3487 = vmatprep.subr.mxu0 0.0
        %3488 = vmatpush1.msra.mxu0 0.0
        %v3489 = vand.u32 %v3423, 4294901760
        %3490 = vmatprep.subr.mxu0 %v3489
        %v3491 = vand.u32 %v3422, 4294901760
        %3492 = vmatpush1.msra.mxu0 %v3491
        %v3493 = vand.u32 %v3421, 4294901760
        %3494 = vmatprep.subr.mxu0 %v3493
        %v3495 = vand.u32 %v3420, 4294901760
        %3496 = vmatpush1.msra.mxu0 %v3495
        %v3497 = vand.u32 %v3419, 4294901760
        %3498 = vmatprep.subr.mxu0 %v3497
        %v3499 = vand.u32 %v3418, 4294901760
        %3500 = vmatpush1.msra.mxu0 %v3499
        %v3501 = vand.u32 %v3417, 4294901760
        %3502 = vmatprep.subr.mxu0 %v3501
        %v3503 = vand.u32 %v3416, 4294901760
        %3504 = vmatpush1.msra.mxu0 %v3503
        %3505 = vmatprep.subr.mxu0 0.0
        %3506 = vmatpush2.msra.mxu0 0.0
        %3507 = vmatprep.subr.mxu0 0.0
        %3508 = vmatpush2.msra.mxu0 0.0
        %3509 = vmatprep.subr.mxu0 0.0
        %3510 = vmatpush2.msra.mxu0 0.0
        %3511 = vmatprep.subr.mxu0 0.0
        %3512 = vmatpush2.msra.mxu0 0.0
        %3513 = vmatprep.subr.mxu0 0.0
        %3514 = vmatpush2.msra.mxu0 0.0
        %3515 = vmatprep.subr.mxu0 0.0
        %3516 = vmatpush2.msra.mxu0 0.0
        %3517 = vmatprep.subr.mxu0 0.0
        %3518 = vmatpush2.msra.mxu0 0.0
        %3519 = vmatprep.subr.mxu0 0.0
        %3520 = vmatpush2.msra.mxu0 0.0
        %3521 = vmatprep.subr.mxu0 0.0
        %3522 = vmatpush2.msra.mxu0 0.0
        %3523 = vmatprep.subr.mxu0 0.0
        %3524 = vmatpush2.msra.mxu0 0.0
        %3525 = vmatprep.subr.mxu0 0.0
        %3526 = vmatpush2.msra.mxu0 0.0
        %3527 = vmatprep.subr.mxu0 0.0
        %3528 = vmatpush2.msra.mxu0 0.0
        %3529 = vmatprep.subr.mxu0 0.0
        %3530 = vmatpush2.msra.mxu0 0.0
        %3531 = vmatprep.subr.mxu0 0.0
        %3532 = vmatpush2.msra.mxu0 0.0
        %3533 = vmatprep.subr.mxu0 0.0
        %3534 = vmatpush2.msra.mxu0 0.0
        %3535 = vmatprep.subr.mxu0 0.0
        %3536 = vmatpush2.msra.mxu0 0.0
        %3537 = vmatprep.mubr.f32.mxu0 0.0
        %v3538 = vand.u32 %v3454, 4294901760
        %v3539 = vsub.f32 %v3454, %v3538
        %v3540 = vand.u32 %v3539, 4294901760
        %v3541 = vsub.f32 %v3539, %v3540
        %v3542 = vand.u32 %v3541, 4294901760
        %3543 = vmatmul.mubr.f32.gmra.mxu0 %v3542
        %v3544 = vpop.f32.mrf.mxu0
        %v3545 = vadd.f32 %v3435, %v3544
        %v3546 = vpop.f32.mrf.mxu0
        %v3547 = vadd.f32 %v3435, %v3546
        %3548 = vmatprep.mubr.f32.mxu0 0.0
        %v3549 = vand.u32 %v3457, 4294901760
        %v3550 = vsub.f32 %v3457, %v3549
        %v3551 = vand.u32 %v3550, 4294901760
        %v3552 = vsub.f32 %v3550, %v3551
        %v3553 = vand.u32 %v3552, 4294901760
        %3554 = vmatmul.mubr.f32.gmra.mxu0 %v3553
        %v3555 = vpop.f32.mrf.mxu0
        %v3556 = vadd.f32 %v3440, %v3555
        %v3557 = vpop.f32.mrf.mxu0
        %v3558 = vadd.f32 %v3440, %v3557
        %3559 = vmatprep.mubr.f32.mxu0 0.0
        %v3560 = vand.u32 %v3460, 4294901760
        %v3561 = vsub.f32 %v3460, %v3560
        %v3562 = vand.u32 %v3561, 4294901760
        %v3563 = vsub.f32 %v3561, %v3562
        %v3564 = vand.u32 %v3563, 4294901760
        %3565 = vmatmul.mubr.f32.gmra.mxu0 %v3564
        %v3566 = vpop.f32.mrf.mxu0
        %v3567 = vadd.f32 %v3445, %v3566
        %v3568 = vpop.f32.mrf.mxu0
        %v3569 = vadd.f32 %v3445, %v3568
        %3570 = vmatprep.mubr.f32.mxu0 0.0
        %v3571 = vand.u32 %v3463, 4294901760
        %v3572 = vsub.f32 %v3463, %v3571
        %v3573 = vand.u32 %v3572, 4294901760
        %v3574 = vsub.f32 %v3572, %v3573
        %v3575 = vand.u32 %v3574, 4294901760
        %3576 = vmatmul.mubr.f32.gmra.mxu0 %v3575
        %v3577 = vpop.f32.mrf.mxu0
        %v3578 = vadd.f32 %v3450, %v3577
        %v3579 = vpop.f32.mrf.mxu0
        %v3580 = vadd.f32 %v3450, %v3579
        %3581 = vdwg.mxu0
        %3582 = vmatprep.subr.mxu0 0.0
        %3583 = vmatpush1.msra.mxu0 0.0
        %3584 = vmatprep.subr.mxu0 0.0
        %3585 = vmatpush1.msra.mxu0 0.0
        %3586 = vmatprep.subr.mxu0 0.0
        %3587 = vmatpush1.msra.mxu0 0.0
        %3588 = vmatprep.subr.mxu0 0.0
        %3589 = vmatpush1.msra.mxu0 0.0
        %3590 = vmatprep.subr.mxu0 0.0
        %3591 = vmatpush1.msra.mxu0 0.0
        %3592 = vmatprep.subr.mxu0 0.0
        %3593 = vmatpush1.msra.mxu0 0.0
        %3594 = vmatprep.subr.mxu0 0.0
        %3595 = vmatpush1.msra.mxu0 0.0
        %3596 = vmatprep.subr.mxu0 0.0
        %3597 = vmatpush1.msra.mxu0 0.0
        %3598 = vmatprep.subr.mxu0 0.0
        %3599 = vmatpush1.msra.mxu0 0.0
        %3600 = vmatprep.subr.mxu0 0.0
        %3601 = vmatpush1.msra.mxu0 0.0
        %3602 = vmatprep.subr.mxu0 0.0
        %3603 = vmatpush1.msra.mxu0 0.0
        %3604 = vmatprep.subr.mxu0 0.0
        %3605 = vmatpush1.msra.mxu0 0.0
        %v3606 = vand.u32 %v3423, 4294901760
        %v3607 = vsub.f32 %v3423, %v3606
        %v3608 = vand.u32 %v3607, 4294901760
        %v3609 = vsub.f32 %v3607, %v3608
        %v3610 = vand.u32 %v3609, 4294901760
        %3611 = vmatprep.subr.mxu0 %v3610
        %v3612 = vand.u32 %v3422, 4294901760
        %v3613 = vsub.f32 %v3422, %v3612
        %v3614 = vand.u32 %v3613, 4294901760
        %v3615 = vsub.f32 %v3613, %v3614
        %v3616 = vand.u32 %v3615, 4294901760
        %3617 = vmatpush1.msra.mxu0 %v3616
        %v3618 = vand.u32 %v3421, 4294901760
        %v3619 = vsub.f32 %v3421, %v3618
        %v3620 = vand.u32 %v3619, 4294901760
        %v3621 = vsub.f32 %v3619, %v3620
        %v3622 = vand.u32 %v3621, 4294901760
        %3623 = vmatprep.subr.mxu0 %v3622
        %v3624 = vand.u32 %v3420, 4294901760
        %v3625 = vsub.f32 %v3420, %v3624
        %v3626 = vand.u32 %v3625, 4294901760
        %v3627 = vsub.f32 %v3625, %v3626
        %v3628 = vand.u32 %v3627, 4294901760
        %3629 = vmatpush1.msra.mxu0 %v3628
        %v3630 = vand.u32 %v3419, 4294901760
        %v3631 = vsub.f32 %v3419, %v3630
        %v3632 = vand.u32 %v3631, 4294901760
        %v3633 = vsub.f32 %v3631, %v3632
        %v3634 = vand.u32 %v3633, 4294901760
        %3635 = vmatprep.subr.mxu0 %v3634
        %v3636 = vand.u32 %v3418, 4294901760
        %v3637 = vsub.f32 %v3418, %v3636
        %v3638 = vand.u32 %v3637, 4294901760
        %v3639 = vsub.f32 %v3637, %v3638
        %v3640 = vand.u32 %v3639, 4294901760
        %3641 = vmatpush1.msra.mxu0 %v3640
        %v3642 = vand.u32 %v3417, 4294901760
        %v3643 = vsub.f32 %v3417, %v3642
        %v3644 = vand.u32 %v3643, 4294901760
        %v3645 = vsub.f32 %v3643, %v3644
        %v3646 = vand.u32 %v3645, 4294901760
        %3647 = vmatprep.subr.mxu0 %v3646
        %v3648 = vand.u32 %v3416, 4294901760
        %v3649 = vsub.f32 %v3416, %v3648
        %v3650 = vand.u32 %v3649, 4294901760
        %v3651 = vsub.f32 %v3649, %v3650
        %v3652 = vand.u32 %v3651, 4294901760
        %3653 = vmatpush1.msra.mxu0 %v3652
        %3654 = vmatprep.subr.mxu0 0.0
        %3655 = vmatpush2.msra.mxu0 0.0
        %3656 = vmatprep.subr.mxu0 0.0
        %3657 = vmatpush2.msra.mxu0 0.0
        %3658 = vmatprep.subr.mxu0 0.0
        %3659 = vmatpush2.msra.mxu0 0.0
        %3660 = vmatprep.subr.mxu0 0.0
        %3661 = vmatpush2.msra.mxu0 0.0
        %3662 = vmatprep.subr.mxu0 0.0
        %3663 = vmatpush2.msra.mxu0 0.0
        %3664 = vmatprep.subr.mxu0 0.0
        %3665 = vmatpush2.msra.mxu0 0.0
        %3666 = vmatprep.subr.mxu0 0.0
        %3667 = vmatpush2.msra.mxu0 0.0
        %3668 = vmatprep.subr.mxu0 0.0
        %3669 = vmatpush2.msra.mxu0 0.0
        %3670 = vmatprep.subr.mxu0 0.0
        %3671 = vmatpush2.msra.mxu0 0.0
        %3672 = vmatprep.subr.mxu0 0.0
        %3673 = vmatpush2.msra.mxu0 0.0
        %3674 = vmatprep.subr.mxu0 0.0
        %3675 = vmatpush2.msra.mxu0 0.0
        %3676 = vmatprep.subr.mxu0 0.0
        %3677 = vmatpush2.msra.mxu0 0.0
        %3678 = vmatprep.subr.mxu0 0.0
        %3679 = vmatpush2.msra.mxu0 0.0
        %3680 = vmatprep.subr.mxu0 0.0
        %3681 = vmatpush2.msra.mxu0 0.0
        %3682 = vmatprep.subr.mxu0 0.0
        %3683 = vmatpush2.msra.mxu0 0.0
        %3684 = vmatprep.subr.mxu0 0.0
        %3685 = vmatpush2.msra.mxu0 0.0
        %3686 = vmatprep.mubr.f32.mxu0 0.0
        %v3687 = vand.u32 %v3454, 4294901760
        %3688 = vmatmul.mubr.f32.gmra.mxu0 %v3687
        %v3689 = vpop.f32.mrf.mxu0
        %v3690 = vadd.f32 %v3545, %v3689
        %v3691 = vpop.f32.mrf.mxu0
        %v3692 = vadd.f32 %v3547, %v3691
        %3693 = vmatprep.mubr.f32.mxu0 0.0
        %v3694 = vand.u32 %v3457, 4294901760
        %3695 = vmatmul.mubr.f32.gmra.mxu0 %v3694
        %v3696 = vpop.f32.mrf.mxu0
        %v3697 = vadd.f32 %v3556, %v3696
        %v3698 = vpop.f32.mrf.mxu0
        %v3699 = vadd.f32 %v3558, %v3698
        %3700 = vmatprep.mubr.f32.mxu0 0.0
        %v3701 = vand.u32 %v3460, 4294901760
        %3702 = vmatmul.mubr.f32.gmra.mxu0 %v3701
        %v3703 = vpop.f32.mrf.mxu0
        %v3704 = vadd.f32 %v3567, %v3703
        %v3705 = vpop.f32.mrf.mxu0
        %v3706 = vadd.f32 %v3569, %v3705
        %3707 = vmatprep.mubr.f32.mxu0 0.0
        %v3708 = vand.u32 %v3463, 4294901760
        %3709 = vmatmul.mubr.f32.gmra.mxu0 %v3708
        %v3710 = vpop.f32.mrf.mxu0
        %v3711 = vadd.f32 %v3578, %v3710
        %v3712 = vpop.f32.mrf.mxu0
        %v3713 = vadd.f32 %v3580, %v3712
        %3714 = vdwg.mxu0
        %3715 = vmatprep.subr.mxu0 0.0
        %3716 = vmatpush1.msra.mxu0 0.0
        %3717 = vmatprep.subr.mxu0 0.0
        %3718 = vmatpush1.msra.mxu0 0.0
        %3719 = vmatprep.subr.mxu0 0.0
        %3720 = vmatpush1.msra.mxu0 0.0
        %3721 = vmatprep.subr.mxu0 0.0
        %3722 = vmatpush1.msra.mxu0 0.0
        %3723 = vmatprep.subr.mxu0 0.0
        %3724 = vmatpush1.msra.mxu0 0.0
        %3725 = vmatprep.subr.mxu0 0.0
        %3726 = vmatpush1.msra.mxu0 0.0
        %3727 = vmatprep.subr.mxu0 0.0
        %3728 = vmatpush1.msra.mxu0 0.0
        %3729 = vmatprep.subr.mxu0 0.0
        %3730 = vmatpush1.msra.mxu0 0.0
        %3731 = vmatprep.subr.mxu0 0.0
        %3732 = vmatpush1.msra.mxu0 0.0
        %3733 = vmatprep.subr.mxu0 0.0
        %3734 = vmatpush1.msra.mxu0 0.0
        %3735 = vmatprep.subr.mxu0 0.0
        %3736 = vmatpush1.msra.mxu0 0.0
        %3737 = vmatprep.subr.mxu0 0.0
        %3738 = vmatpush1.msra.mxu0 0.0
        %v3739 = vand.u32 %v3423, 4294901760
        %v3740 = vsub.f32 %v3423, %v3739
        %3741 = vmatprep.subr.mxu0 %v3740
        %v3742 = vand.u32 %v3422, 4294901760
        %v3743 = vsub.f32 %v3422, %v3742
        %3744 = vmatpush1.msra.mxu0 %v3743
        %v3745 = vand.u32 %v3421, 4294901760
        %v3746 = vsub.f32 %v3421, %v3745
        %3747 = vmatprep.subr.mxu0 %v3746
        %v3748 = vand.u32 %v3420, 4294901760
        %v3749 = vsub.f32 %v3420, %v3748
        %3750 = vmatpush1.msra.mxu0 %v3749
        %v3751 = vand.u32 %v3419, 4294901760
        %v3752 = vsub.f32 %v3419, %v3751
        %3753 = vmatprep.subr.mxu0 %v3752
        %v3754 = vand.u32 %v3418, 4294901760
        %v3755 = vsub.f32 %v3418, %v3754
        %3756 = vmatpush1.msra.mxu0 %v3755
        %v3757 = vand.u32 %v3417, 4294901760
        %v3758 = vsub.f32 %v3417, %v3757
        %3759 = vmatprep.subr.mxu0 %v3758
        %v3760 = vand.u32 %v3416, 4294901760
        %v3761 = vsub.f32 %v3416, %v3760
        %3762 = vmatpush1.msra.mxu0 %v3761
        %3763 = vmatprep.subr.mxu0 0.0
        %3764 = vmatpush2.msra.mxu0 0.0
        %3765 = vmatprep.subr.mxu0 0.0
        %3766 = vmatpush2.msra.mxu0 0.0
        %3767 = vmatprep.subr.mxu0 0.0
        %3768 = vmatpush2.msra.mxu0 0.0
        %3769 = vmatprep.subr.mxu0 0.0
        %3770 = vmatpush2.msra.mxu0 0.0
        %3771 = vmatprep.subr.mxu0 0.0
        %3772 = vmatpush2.msra.mxu0 0.0
        %3773 = vmatprep.subr.mxu0 0.0
        %3774 = vmatpush2.msra.mxu0 0.0
        %3775 = vmatprep.subr.mxu0 0.0
        %3776 = vmatpush2.msra.mxu0 0.0
        %3777 = vmatprep.subr.mxu0 0.0
        %3778 = vmatpush2.msra.mxu0 0.0
        %3779 = vmatprep.subr.mxu0 0.0
        %3780 = vmatpush2.msra.mxu0 0.0
        %3781 = vmatprep.subr.mxu0 0.0
        %3782 = vmatpush2.msra.mxu0 0.0
        %3783 = vmatprep.subr.mxu0 0.0
        %3784 = vmatpush2.msra.mxu0 0.0
        %3785 = vmatprep.subr.mxu0 0.0
        %3786 = vmatpush2.msra.mxu0 0.0
        %3787 = vmatprep.subr.mxu0 0.0
        %3788 = vmatpush2.msra.mxu0 0.0
        %3789 = vmatprep.subr.mxu0 0.0
        %3790 = vmatpush2.msra.mxu0 0.0
        %3791 = vmatprep.subr.mxu0 0.0
        %3792 = vmatpush2.msra.mxu0 0.0
        %3793 = vmatprep.subr.mxu0 0.0
        %3794 = vmatpush2.msra.mxu0 0.0
        %3795 = vmatprep.mubr.f32.mxu0 0.0
        %v3796 = vand.u32 %v3454, 4294901760
        %v3797 = vsub.f32 %v3454, %v3796
        %3798 = vmatmul.mubr.f32.gmra.mxu0 %v3797
        %v3799 = vpop.f32.mrf.mxu0
        %v3800 = vadd.f32 %v3690, %v3799
        %v3801 = vpop.f32.mrf.mxu0
        %v3802 = vadd.f32 %v3692, %v3801
        %3803 = vmatprep.mubr.f32.mxu0 0.0
        %v3804 = vand.u32 %v3457, 4294901760
        %v3805 = vsub.f32 %v3457, %v3804
        %3806 = vmatmul.mubr.f32.gmra.mxu0 %v3805
        %v3807 = vpop.f32.mrf.mxu0
        %v3808 = vadd.f32 %v3697, %v3807
        %v3809 = vpop.f32.mrf.mxu0
        %v3810 = vadd.f32 %v3699, %v3809
        %3811 = vmatprep.mubr.f32.mxu0 0.0
        %v3812 = vand.u32 %v3460, 4294901760
        %v3813 = vsub.f32 %v3460, %v3812
        %3814 = vmatmul.mubr.f32.gmra.mxu0 %v3813
        %v3815 = vpop.f32.mrf.mxu0
        %v3816 = vadd.f32 %v3704, %v3815
        %v3817 = vpop.f32.mrf.mxu0
        %v3818 = vadd.f32 %v3706, %v3817
        %3819 = vmatprep.mubr.f32.mxu0 0.0
        %v3820 = vand.u32 %v3463, 4294901760
        %v3821 = vsub.f32 %v3463, %v3820
        %3822 = vmatmul.mubr.f32.gmra.mxu0 %v3821
        %v3823 = vpop.f32.mrf.mxu0
        %v3824 = vadd.f32 %v3711, %v3823
        %v3825 = vpop.f32.mrf.mxu0
        %v3826 = vadd.f32 %v3713, %v3825
        %3827 = vdwg.mxu0
        %3828 = vmatprep.subr.mxu0 0.0
        %3829 = vmatpush1.msra.mxu0 0.0
        %3830 = vmatprep.subr.mxu0 0.0
        %3831 = vmatpush1.msra.mxu0 0.0
        %3832 = vmatprep.subr.mxu0 0.0
        %3833 = vmatpush1.msra.mxu0 0.0
        %3834 = vmatprep.subr.mxu0 0.0
        %3835 = vmatpush1.msra.mxu0 0.0
        %3836 = vmatprep.subr.mxu0 0.0
        %3837 = vmatpush1.msra.mxu0 0.0
        %3838 = vmatprep.subr.mxu0 0.0
        %3839 = vmatpush1.msra.mxu0 0.0
        %3840 = vmatprep.subr.mxu0 0.0
        %3841 = vmatpush1.msra.mxu0 0.0
        %3842 = vmatprep.subr.mxu0 0.0
        %3843 = vmatpush1.msra.mxu0 0.0
        %3844 = vmatprep.subr.mxu0 0.0
        %3845 = vmatpush1.msra.mxu0 0.0
        %3846 = vmatprep.subr.mxu0 0.0
        %3847 = vmatpush1.msra.mxu0 0.0
        %3848 = vmatprep.subr.mxu0 0.0
        %3849 = vmatpush1.msra.mxu0 0.0
        %3850 = vmatprep.subr.mxu0 0.0
        %3851 = vmatpush1.msra.mxu0 0.0
        %v3852 = vand.u32 %v3423, 4294901760
        %3853 = vmatprep.subr.mxu0 %v3852
        %v3854 = vand.u32 %v3422, 4294901760
        %3855 = vmatpush1.msra.mxu0 %v3854
        %v3856 = vand.u32 %v3421, 4294901760
        %3857 = vmatprep.subr.mxu0 %v3856
        %v3858 = vand.u32 %v3420, 4294901760
        %3859 = vmatpush1.msra.mxu0 %v3858
        %v3860 = vand.u32 %v3419, 4294901760
        %3861 = vmatprep.subr.mxu0 %v3860
        %v3862 = vand.u32 %v3418, 4294901760
        %3863 = vmatpush1.msra.mxu0 %v3862
        %v3864 = vand.u32 %v3417, 4294901760
        %3865 = vmatprep.subr.mxu0 %v3864
        %v3866 = vand.u32 %v3416, 4294901760
        %3867 = vmatpush1.msra.mxu0 %v3866
        %3868 = vmatprep.subr.mxu0 0.0
        %3869 = vmatpush2.msra.mxu0 0.0
        %3870 = vmatprep.subr.mxu0 0.0
        %3871 = vmatpush2.msra.mxu0 0.0
        %3872 = vmatprep.subr.mxu0 0.0
        %3873 = vmatpush2.msra.mxu0 0.0
        %3874 = vmatprep.subr.mxu0 0.0
        %3875 = vmatpush2.msra.mxu0 0.0
        %3876 = vmatprep.subr.mxu0 0.0
        %3877 = vmatpush2.msra.mxu0 0.0
        %3878 = vmatprep.subr.mxu0 0.0
        %3879 = vmatpush2.msra.mxu0 0.0
        %3880 = vmatprep.subr.mxu0 0.0
        %3881 = vmatpush2.msra.mxu0 0.0
        %3882 = vmatprep.subr.mxu0 0.0
        %3883 = vmatpush2.msra.mxu0 0.0
        %3884 = vmatprep.subr.mxu0 0.0
        %3885 = vmatpush2.msra.mxu0 0.0
        %3886 = vmatprep.subr.mxu0 0.0
        %3887 = vmatpush2.msra.mxu0 0.0
        %3888 = vmatprep.subr.mxu0 0.0
        %3889 = vmatpush2.msra.mxu0 0.0
        %3890 = vmatprep.subr.mxu0 0.0
        %3891 = vmatpush2.msra.mxu0 0.0
        %3892 = vmatprep.subr.mxu0 0.0
        %3893 = vmatpush2.msra.mxu0 0.0
        %3894 = vmatprep.subr.mxu0 0.0
        %3895 = vmatpush2.msra.mxu0 0.0
        %3896 = vmatprep.subr.mxu0 0.0
        %3897 = vmatpush2.msra.mxu0 0.0
        %3898 = vmatprep.subr.mxu0 0.0
        %3899 = vmatpush2.msra.mxu0 0.0
        %3900 = vmatprep.mubr.f32.mxu0 0.0
        %v3901 = vand.u32 %v3454, 4294901760
        %v3902 = vsub.f32 %v3454, %v3901
        %v3903 = vand.u32 %v3902, 4294901760
        %3904 = vmatmul.mubr.f32.gmra.mxu0 %v3903
        %v3905 = vpop.f32.mrf.mxu0
        %v3906 = vadd.f32 %v3800, %v3905
        %v3907 = vpop.f32.mrf.mxu0
        %v3908 = vadd.f32 %v3802, %v3907
        %3909 = vmatprep.mubr.f32.mxu0 0.0
        %v3910 = vand.u32 %v3457, 4294901760
        %v3911 = vsub.f32 %v3457, %v3910
        %v3912 = vand.u32 %v3911, 4294901760
        %3913 = vmatmul.mubr.f32.gmra.mxu0 %v3912
        %v3914 = vpop.f32.mrf.mxu0
        %v3915 = vadd.f32 %v3808, %v3914
        %v3916 = vpop.f32.mrf.mxu0
        %v3917 = vadd.f32 %v3810, %v3916
        %3918 = vmatprep.mubr.f32.mxu0 0.0
        %v3919 = vand.u32 %v3460, 4294901760
        %v3920 = vsub.f32 %v3460, %v3919
        %v3921 = vand.u32 %v3920, 4294901760
        %3922 = vmatmul.mubr.f32.gmra.mxu0 %v3921
        %v3923 = vpop.f32.mrf.mxu0
        %v3924 = vadd.f32 %v3816, %v3923
        %v3925 = vpop.f32.mrf.mxu0
        %v3926 = vadd.f32 %v3818, %v3925
        %3927 = vmatprep.mubr.f32.mxu0 0.0
        %v3928 = vand.u32 %v3463, 4294901760
        %v3929 = vsub.f32 %v3463, %v3928
        %v3930 = vand.u32 %v3929, 4294901760
        %3931 = vmatmul.mubr.f32.gmra.mxu0 %v3930
        %v3932 = vpop.f32.mrf.mxu0
        %v3933 = vadd.f32 %v3824, %v3932
        %v3934 = vpop.f32.mrf.mxu0
        %v3935 = vadd.f32 %v3826, %v3934
        %3936 = vdwg.mxu0
        %3937 = vmatprep.subr.mxu0 0.0
        %3938 = vmatpush1.msra.mxu0 0.0
        %3939 = vmatprep.subr.mxu0 0.0
        %3940 = vmatpush1.msra.mxu0 0.0
        %3941 = vmatprep.subr.mxu0 0.0
        %3942 = vmatpush1.msra.mxu0 0.0
        %3943 = vmatprep.subr.mxu0 0.0
        %3944 = vmatpush1.msra.mxu0 0.0
        %3945 = vmatprep.subr.mxu0 0.0
        %3946 = vmatpush1.msra.mxu0 0.0
        %3947 = vmatprep.subr.mxu0 0.0
        %3948 = vmatpush1.msra.mxu0 0.0
        %3949 = vmatprep.subr.mxu0 0.0
        %3950 = vmatpush1.msra.mxu0 0.0
        %3951 = vmatprep.subr.mxu0 0.0
        %3952 = vmatpush1.msra.mxu0 0.0
        %3953 = vmatprep.subr.mxu0 0.0
        %3954 = vmatpush1.msra.mxu0 0.0
        %3955 = vmatprep.subr.mxu0 0.0
        %3956 = vmatpush1.msra.mxu0 0.0
        %3957 = vmatprep.subr.mxu0 0.0
        %3958 = vmatpush1.msra.mxu0 0.0
        %3959 = vmatprep.subr.mxu0 0.0
        %3960 = vmatpush1.msra.mxu0 0.0
        %v3961 = vand.u32 %v3423, 4294901760
        %v3962 = vsub.f32 %v3423, %v3961
        %v3963 = vand.u32 %v3962, 4294901760
        %3964 = vmatprep.subr.mxu0 %v3963
        %v3965 = vand.u32 %v3422, 4294901760
        %v3966 = vsub.f32 %v3422, %v3965
        %v3967 = vand.u32 %v3966, 4294901760
        %3968 = vmatpush1.msra.mxu0 %v3967
        %v3969 = vand.u32 %v3421, 4294901760
        %v3970 = vsub.f32 %v3421, %v3969
        %v3971 = vand.u32 %v3970, 4294901760
        %3972 = vmatprep.subr.mxu0 %v3971
        %v3973 = vand.u32 %v3420, 4294901760
        %v3974 = vsub.f32 %v3420, %v3973
        %v3975 = vand.u32 %v3974, 4294901760
        %3976 = vmatpush1.msra.mxu0 %v3975
        %v3977 = vand.u32 %v3419, 4294901760
        %v3978 = vsub.f32 %v3419, %v3977
        %v3979 = vand.u32 %v3978, 4294901760
        %3980 = vmatprep.subr.mxu0 %v3979
        %v3981 = vand.u32 %v3418, 4294901760
        %v3982 = vsub.f32 %v3418, %v3981
        %v3983 = vand.u32 %v3982, 4294901760
        %3984 = vmatpush1.msra.mxu0 %v3983
        %v3985 = vand.u32 %v3417, 4294901760
        %v3986 = vsub.f32 %v3417, %v3985
        %v3987 = vand.u32 %v3986, 4294901760
        %3988 = vmatprep.subr.mxu0 %v3987
        %v3989 = vand.u32 %v3416, 4294901760
        %v3990 = vsub.f32 %v3416, %v3989
        %v3991 = vand.u32 %v3990, 4294901760
        %3992 = vmatpush1.msra.mxu0 %v3991
        %3993 = vmatprep.subr.mxu0 0.0
        %3994 = vmatpush2.msra.mxu0 0.0
        %3995 = vmatprep.subr.mxu0 0.0
        %3996 = vmatpush2.msra.mxu0 0.0
        %3997 = vmatprep.subr.mxu0 0.0
        %3998 = vmatpush2.msra.mxu0 0.0
        %3999 = vmatprep.subr.mxu0 0.0
        %4000 = vmatpush2.msra.mxu0 0.0
        %4001 = vmatprep.subr.mxu0 0.0
        %4002 = vmatpush2.msra.mxu0 0.0
        %4003 = vmatprep.subr.mxu0 0.0
        %4004 = vmatpush2.msra.mxu0 0.0
        %4005 = vmatprep.subr.mxu0 0.0
        %4006 = vmatpush2.msra.mxu0 0.0
        %4007 = vmatprep.subr.mxu0 0.0
        %4008 = vmatpush2.msra.mxu0 0.0
        %4009 = vmatprep.subr.mxu0 0.0
        %4010 = vmatpush2.msra.mxu0 0.0
        %4011 = vmatprep.subr.mxu0 0.0
        %4012 = vmatpush2.msra.mxu0 0.0
        %4013 = vmatprep.subr.mxu0 0.0
        %4014 = vmatpush2.msra.mxu0 0.0
        %4015 = vmatprep.subr.mxu0 0.0
        %4016 = vmatpush2.msra.mxu0 0.0
        %4017 = vmatprep.subr.mxu0 0.0
        %4018 = vmatpush2.msra.mxu0 0.0
        %4019 = vmatprep.subr.mxu0 0.0
        %4020 = vmatpush2.msra.mxu0 0.0
        %4021 = vmatprep.subr.mxu0 0.0
        %4022 = vmatpush2.msra.mxu0 0.0
        %4023 = vmatprep.subr.mxu0 0.0
        %4024 = vmatpush2.msra.mxu0 0.0
        %4025 = vmatprep.mubr.f32.mxu0 0.0
        %v4026 = vand.u32 %v3454, 4294901760
        %4027 = vmatmul.mubr.f32.gmra.mxu0 %v4026
        %v4028 = vpop.f32.mrf.mxu0
        %v4029 = vadd.f32 %v3906, %v4028
        %v4030 = vpop.f32.mrf.mxu0
        %v4031 = vadd.f32 %v3908, %v4030
        %4032 = vmatprep.mubr.f32.mxu0 0.0
        %v4033 = vand.u32 %v3457, 4294901760
        %4034 = vmatmul.mubr.f32.gmra.mxu0 %v4033
        %v4035 = vpop.f32.mrf.mxu0
        %v4036 = vadd.f32 %v3915, %v4035
        %v4037 = vpop.f32.mrf.mxu0
        %v4038 = vadd.f32 %v3917, %v4037
        %4039 = vmatprep.mubr.f32.mxu0 0.0
        %v4040 = vand.u32 %v3460, 4294901760
        %4041 = vmatmul.mubr.f32.gmra.mxu0 %v4040
        %v4042 = vpop.f32.mrf.mxu0
        %v4043 = vadd.f32 %v3924, %v4042
        %v4044 = vpop.f32.mrf.mxu0
        %v4045 = vadd.f32 %v3926, %v4044
        %4046 = vmatprep.mubr.f32.mxu0 0.0
        %v4047 = vand.u32 %v3463, 4294901760
        %4048 = vmatmul.mubr.f32.gmra.mxu0 %v4047
        %v4049 = vpop.f32.mrf.mxu0
        %v4050 = vadd.f32 %v3933, %v4049
        %v4051 = vpop.f32.mrf.mxu0
        %v4052 = vadd.f32 %v3935, %v4051
        %4053 = vdwg.mxu0
        %4054 = vmatprep.subr.mxu0 0.0
        %4055 = vmatpush1.msra.mxu0 0.0
        %4056 = vmatprep.subr.mxu0 0.0
        %4057 = vmatpush1.msra.mxu0 0.0
        %4058 = vmatprep.subr.mxu0 0.0
        %4059 = vmatpush1.msra.mxu0 0.0
        %4060 = vmatprep.subr.mxu0 0.0
        %4061 = vmatpush1.msra.mxu0 0.0
        %4062 = vmatprep.subr.mxu0 0.0
        %4063 = vmatpush1.msra.mxu0 0.0
        %4064 = vmatprep.subr.mxu0 0.0
        %4065 = vmatpush1.msra.mxu0 0.0
        %4066 = vmatprep.subr.mxu0 0.0
        %4067 = vmatpush1.msra.mxu0 0.0
        %4068 = vmatprep.subr.mxu0 0.0
        %4069 = vmatpush1.msra.mxu0 0.0
        %4070 = vmatprep.subr.mxu0 0.0
        %4071 = vmatpush1.msra.mxu0 0.0
        %4072 = vmatprep.subr.mxu0 0.0
        %4073 = vmatpush1.msra.mxu0 0.0
        %4074 = vmatprep.subr.mxu0 0.0
        %4075 = vmatpush1.msra.mxu0 0.0
        %4076 = vmatprep.subr.mxu0 0.0
        %4077 = vmatpush1.msra.mxu0 0.0
        %v4078 = vand.u32 %v3423, 4294901760
        %4079 = vmatprep.subr.mxu0 %v4078
        %v4080 = vand.u32 %v3422, 4294901760
        %4081 = vmatpush1.msra.mxu0 %v4080
        %v4082 = vand.u32 %v3421, 4294901760
        %4083 = vmatprep.subr.mxu0 %v4082
        %v4084 = vand.u32 %v3420, 4294901760
        %4085 = vmatpush1.msra.mxu0 %v4084
        %v4086 = vand.u32 %v3419, 4294901760
        %4087 = vmatprep.subr.mxu0 %v4086
        %v4088 = vand.u32 %v3418, 4294901760
        %4089 = vmatpush1.msra.mxu0 %v4088
        %v4090 = vand.u32 %v3417, 4294901760
        %4091 = vmatprep.subr.mxu0 %v4090
        %v4092 = vand.u32 %v3416, 4294901760
        %4093 = vmatpush1.msra.mxu0 %v4092
        %4094 = vmatprep.subr.mxu0 0.0
        %4095 = vmatpush2.msra.mxu0 0.0
        %4096 = vmatprep.subr.mxu0 0.0
        %4097 = vmatpush2.msra.mxu0 0.0
        %4098 = vmatprep.subr.mxu0 0.0
        %4099 = vmatpush2.msra.mxu0 0.0
        %4100 = vmatprep.subr.mxu0 0.0
        %4101 = vmatpush2.msra.mxu0 0.0
        %4102 = vmatprep.subr.mxu0 0.0
        %4103 = vmatpush2.msra.mxu0 0.0
        %4104 = vmatprep.subr.mxu0 0.0
        %4105 = vmatpush2.msra.mxu0 0.0
        %4106 = vmatprep.subr.mxu0 0.0
        %4107 = vmatpush2.msra.mxu0 0.0
        %4108 = vmatprep.subr.mxu0 0.0
        %4109 = vmatpush2.msra.mxu0 0.0
        %4110 = vmatprep.subr.mxu0 0.0
        %4111 = vmatpush2.msra.mxu0 0.0
        %4112 = vmatprep.subr.mxu0 0.0
        %4113 = vmatpush2.msra.mxu0 0.0
        %4114 = vmatprep.subr.mxu0 0.0
        %4115 = vmatpush2.msra.mxu0 0.0
        %4116 = vmatprep.subr.mxu0 0.0
        %4117 = vmatpush2.msra.mxu0 0.0
        %4118 = vmatprep.subr.mxu0 0.0
        %4119 = vmatpush2.msra.mxu0 0.0
        %4120 = vmatprep.subr.mxu0 0.0
        %4121 = vmatpush2.msra.mxu0 0.0
        %4122 = vmatprep.subr.mxu0 0.0
        %4123 = vmatpush2.msra.mxu0 0.0
        %4124 = vmatprep.subr.mxu0 0.0
        %4125 = vmatpush2.msra.mxu0 0.0
        %4126 = vmatprep.mubr.f32.mxu0 0.0
        %v4127 = vand.u32 %v3454, 4294901760
        %4128 = vmatmul.mubr.f32.gmra.mxu0 %v4127
        %v4129 = vpop.f32.mrf.mxu0
        %v4130 = vadd.f32 %v4029, %v4129
        %v4131 = vpop.f32.mrf.mxu0
        %v4132 = vadd.f32 %v4031, %v4131
        %4133 = vmatprep.mubr.f32.mxu0 0.0
        %v4134 = vand.u32 %v3457, 4294901760
        %4135 = vmatmul.mubr.f32.gmra.mxu0 %v4134
        %v4136 = vpop.f32.mrf.mxu0
        %v4137 = vadd.f32 %v4036, %v4136
        %v4138 = vpop.f32.mrf.mxu0
        %v4139 = vadd.f32 %v4038, %v4138
        %4140 = vmatprep.mubr.f32.mxu0 0.0
        %v4141 = vand.u32 %v3460, 4294901760
        %4142 = vmatmul.mubr.f32.gmra.mxu0 %v4141
        %v4143 = vpop.f32.mrf.mxu0
        %v4144 = vadd.f32 %v4043, %v4143
        %v4145 = vpop.f32.mrf.mxu0
        %v4146 = vadd.f32 %v4045, %v4145
        %4147 = vmatprep.mubr.f32.mxu0 0.0
        %v4148 = vand.u32 %v3463, 4294901760
        %4149 = vmatmul.mubr.f32.gmra.mxu0 %v4148
        %v4150 = vpop.f32.mrf.mxu0
        %v4151 = vadd.f32 %v4050, %v4150
        %v4152 = vpop.f32.mrf.mxu0
        %v4153 = vadd.f32 %v4052, %v4152
        %4154 = vdwg.mxu0
        %v4155 = vmax.f32 %v4130, 0.0
        %v4156 = vmax.f32 %v4132, 0.0
        %v4157 = vmax.f32 %v4137, 0.0
        %v4158 = vmax.f32 %v4139, 0.0
        %v4159 = vmax.f32 %v4144, 0.0
        %v4160 = vmax.f32 %v4146, 0.0
        %v4161 = vmax.f32 %v4151, 0.0
        %v4162 = vmax.f32 %v4153, 0.0
        %v4163 = vld [vmem:[%s6] sm:$0xf]
        %v4164 = vld [vmem:[%s7] sm:$0xf]
        %4166 = vset.pattern.permute.xlu0 0
        %4167 = vperm.xlu0 %4166, %v4164
        %v4168 = vpop.permute.xlu0 %4167
        %v4171 = vsel %vm3452, %v4163, 0
        %4173 = vmatprep.subr.mxu0 0.0
        %4174 = vmatpush1.msra.mxu0 0.0
        %4175 = vmatprep.subr.mxu0 0.0
        %4176 = vmatpush1.msra.mxu0 0.0
        %4177 = vmatprep.subr.mxu0 0.0
        %4178 = vmatpush1.msra.mxu0 0.0
        %4179 = vmatprep.subr.mxu0 0.0
        %4180 = vmatpush1.msra.mxu0 0.0
        %4181 = vmatprep.subr.mxu0 0.0
        %4182 = vmatpush1.msra.mxu0 0.0
        %4183 = vmatprep.subr.mxu0 0.0
        %4184 = vmatpush1.msra.mxu0 0.0
        %4185 = vmatprep.subr.mxu0 0.0
        %4186 = vmatpush1.msra.mxu0 0.0
        %4187 = vmatprep.subr.mxu0 0.0
        %4188 = vmatpush1.msra.mxu0 0.0
        %4189 = vmatprep.subr.mxu0 0.0
        %4190 = vmatpush1.msra.mxu0 0.0
        %4191 = vmatprep.subr.mxu0 0.0
        %4192 = vmatpush1.msra.mxu0 0.0
        %4193 = vmatprep.subr.mxu0 0.0
        %4194 = vmatpush1.msra.mxu0 0.0
        %4195 = vmatprep.subr.mxu0 0.0
        %4196 = vmatpush1.msra.mxu0 0.0
        %v4197 = vand.u32 %v4162, 4294901760
        %4198 = vmatprep.subr.mxu0 %v4197
        %v4199 = vand.u32 %v4161, 4294901760
        %4200 = vmatpush1.msra.mxu0 %v4199
        %v4201 = vand.u32 %v4160, 4294901760
        %4202 = vmatprep.subr.mxu0 %v4201
        %v4203 = vand.u32 %v4159, 4294901760
        %4204 = vmatpush1.msra.mxu0 %v4203
        %v4205 = vand.u32 %v4158, 4294901760
        %4206 = vmatprep.subr.mxu0 %v4205
        %v4207 = vand.u32 %v4157, 4294901760
        %4208 = vmatpush1.msra.mxu0 %v4207
        %v4209 = vand.u32 %v4156, 4294901760
        %4210 = vmatprep.subr.mxu0 %v4209
        %v4211 = vand.u32 %v4155, 4294901760
        %4212 = vmatpush1.msra.mxu0 %v4211
        %4213 = vmatprep.subr.mxu0 0.0
        %4214 = vmatpush2.msra.mxu0 0.0
        %4215 = vmatprep.subr.mxu0 0.0
        %4216 = vmatpush2.msra.mxu0 0.0
        %4217 = vmatprep.subr.mxu0 0.0
        %4218 = vmatpush2.msra.mxu0 0.0
        %4219 = vmatprep.subr.mxu0 0.0
        %4220 = vmatpush2.msra.mxu0 0.0
        %4221 = vmatprep.subr.mxu0 0.0
        %4222 = vmatpush2.msra.mxu0 0.0
        %4223 = vmatprep.subr.mxu0 0.0
        %4224 = vmatpush2.msra.mxu0 0.0
        %4225 = vmatprep.subr.mxu0 0.0
        %4226 = vmatpush2.msra.mxu0 0.0
        %4227 = vmatprep.subr.mxu0 0.0
        %4228 = vmatpush2.msra.mxu0 0.0
        %4229 = vmatprep.subr.mxu0 0.0
        %4230 = vmatpush2.msra.mxu0 0.0
        %4231 = vmatprep.subr.mxu0 0.0
        %4232 = vmatpush2.msra.mxu0 0.0
        %4233 = vmatprep.subr.mxu0 0.0
        %4234 = vmatpush2.msra.mxu0 0.0
        %4235 = vmatprep.subr.mxu0 0.0
        %4236 = vmatpush2.msra.mxu0 0.0
        %4237 = vmatprep.subr.mxu0 0.0
        %4238 = vmatpush2.msra.mxu0 0.0
        %4239 = vmatprep.subr.mxu0 0.0
        %4240 = vmatpush2.msra.mxu0 0.0
        %4241 = vmatprep.subr.mxu0 0.0
        %4242 = vmatpush2.msra.mxu0 0.0
        %4243 = vmatprep.subr.mxu0 0.0
        %4244 = vmatpush2.msra.mxu0 0.0
        %4245 = vmatprep.mubr.f32.mxu0 0.0
        %v4246 = vand.u32 %v4171, 4294901760
        %v4247 = vsub.f32 %v4171, %v4246
        %v4248 = vand.u32 %v4247, 4294901760
        %v4249 = vsub.f32 %v4247, %v4248
        %v4250 = vand.u32 %v4249, 4294901760
        %4251 = vmatmul.mubr.f32.gmra.mxu0 %v4250
        %v4252 = vpop.f32.mrf.mxu0
        %v4253 = vadd.f32 %v4168, %v4252
        %v4254 = vpop.f32.mrf.mxu0
        %v4255 = vadd.f32 %v4168, %v4254
        %4256 = vdwg.mxu0
        %4257 = vmatprep.subr.mxu0 0.0
        %4258 = vmatpush1.msra.mxu0 0.0
        %4259 = vmatprep.subr.mxu0 0.0
        %4260 = vmatpush1.msra.mxu0 0.0
        %4261 = vmatprep.subr.mxu0 0.0
        %4262 = vmatpush1.msra.mxu0 0.0
        %4263 = vmatprep.subr.mxu0 0.0
        %4264 = vmatpush1.msra.mxu0 0.0
        %4265 = vmatprep.subr.mxu0 0.0
        %4266 = vmatpush1.msra.mxu0 0.0
        %4267 = vmatprep.subr.mxu0 0.0
        %4268 = vmatpush1.msra.mxu0 0.0
        %4269 = vmatprep.subr.mxu0 0.0
        %4270 = vmatpush1.msra.mxu0 0.0
        %4271 = vmatprep.subr.mxu0 0.0
        %4272 = vmatpush1.msra.mxu0 0.0
        %4273 = vmatprep.subr.mxu0 0.0
        %4274 = vmatpush1.msra.mxu0 0.0
        %4275 = vmatprep.subr.mxu0 0.0
        %4276 = vmatpush1.msra.mxu0 0.0
        %4277 = vmatprep.subr.mxu0 0.0
        %4278 = vmatpush1.msra.mxu0 0.0
        %4279 = vmatprep.subr.mxu0 0.0
        %4280 = vmatpush1.msra.mxu0 0.0
        %v4281 = vand.u32 %v4162, 4294901760
        %v4282 = vsub.f32 %v4162, %v4281
        %v4283 = vand.u32 %v4282, 4294901760
        %v4284 = vsub.f32 %v4282, %v4283
        %v4285 = vand.u32 %v4284, 4294901760
        %4286 = vmatprep.subr.mxu0 %v4285
        %v4287 = vand.u32 %v4161, 4294901760
        %v4288 = vsub.f32 %v4161, %v4287
        %v4289 = vand.u32 %v4288, 4294901760
        %v4290 = vsub.f32 %v4288, %v4289
        %v4291 = vand.u32 %v4290, 4294901760
        %4292 = vmatpush1.msra.mxu0 %v4291
        %v4293 = vand.u32 %v4160, 4294901760
        %v4294 = vsub.f32 %v4160, %v4293
        %v4295 = vand.u32 %v4294, 4294901760
        %v4296 = vsub.f32 %v4294, %v4295
        %v4297 = vand.u32 %v4296, 4294901760
        %4298 = vmatprep.subr.mxu0 %v4297
        %v4299 = vand.u32 %v4159, 4294901760
        %v4300 = vsub.f32 %v4159, %v4299
        %v4301 = vand.u32 %v4300, 4294901760
        %v4302 = vsub.f32 %v4300, %v4301
        %v4303 = vand.u32 %v4302, 4294901760
        %4304 = vmatpush1.msra.mxu0 %v4303
        %v4305 = vand.u32 %v4158, 4294901760
        %v4306 = vsub.f32 %v4158, %v4305
        %v4307 = vand.u32 %v4306, 4294901760
        %v4308 = vsub.f32 %v4306, %v4307
        %v4309 = vand.u32 %v4308, 4294901760
        %4310 = vmatprep.subr.mxu0 %v4309
        %v4311 = vand.u32 %v4157, 4294901760
        %v4312 = vsub.f32 %v4157, %v4311
        %v4313 = vand.u32 %v4312, 4294901760
        %v4314 = vsub.f32 %v4312, %v4313
        %v4315 = vand.u32 %v4314, 4294901760
        %4316 = vmatpush1.msra.mxu0 %v4315
        %v4317 = vand.u32 %v4156, 4294901760
        %v4318 = vsub.f32 %v4156, %v4317
        %v4319 = vand.u32 %v4318, 4294901760
        %v4320 = vsub.f32 %v4318, %v4319
        %v4321 = vand.u32 %v4320, 4294901760
        %4322 = vmatprep.subr.mxu0 %v4321
        %v4323 = vand.u32 %v4155, 4294901760
        %v4324 = vsub.f32 %v4155, %v4323
        %v4325 = vand.u32 %v4324, 4294901760
        %v4326 = vsub.f32 %v4324, %v4325
        %v4327 = vand.u32 %v4326, 4294901760
        %4328 = vmatpush1.msra.mxu0 %v4327
        %4329 = vmatprep.subr.mxu0 0.0
        %4330 = vmatpush2.msra.mxu0 0.0
        %4331 = vmatprep.subr.mxu0 0.0
        %4332 = vmatpush2.msra.mxu0 0.0
        %4333 = vmatprep.subr.mxu0 0.0
        %4334 = vmatpush2.msra.mxu0 0.0
        %4335 = vmatprep.subr.mxu0 0.0
        %4336 = vmatpush2.msra.mxu0 0.0
        %4337 = vmatprep.subr.mxu0 0.0
        %4338 = vmatpush2.msra.mxu0 0.0
        %4339 = vmatprep.subr.mxu0 0.0
        %4340 = vmatpush2.msra.mxu0 0.0
        %4341 = vmatprep.subr.mxu0 0.0
        %4342 = vmatpush2.msra.mxu0 0.0
        %4343 = vmatprep.subr.mxu0 0.0
        %4344 = vmatpush2.msra.mxu0 0.0
        %4345 = vmatprep.subr.mxu0 0.0
        %4346 = vmatpush2.msra.mxu0 0.0
        %4347 = vmatprep.subr.mxu0 0.0
        %4348 = vmatpush2.msra.mxu0 0.0
        %4349 = vmatprep.subr.mxu0 0.0
        %4350 = vmatpush2.msra.mxu0 0.0
        %4351 = vmatprep.subr.mxu0 0.0
        %4352 = vmatpush2.msra.mxu0 0.0
        %4353 = vmatprep.subr.mxu0 0.0
        %4354 = vmatpush2.msra.mxu0 0.0
        %4355 = vmatprep.subr.mxu0 0.0
        %4356 = vmatpush2.msra.mxu0 0.0
        %4357 = vmatprep.subr.mxu0 0.0
        %4358 = vmatpush2.msra.mxu0 0.0
        %4359 = vmatprep.subr.mxu0 0.0
        %4360 = vmatpush2.msra.mxu0 0.0
        %4361 = vmatprep.mubr.f32.mxu0 0.0
        %v4362 = vand.u32 %v4171, 4294901760
        %4363 = vmatmul.mubr.f32.gmra.mxu0 %v4362
        %v4364 = vpop.f32.mrf.mxu0
        %v4365 = vadd.f32 %v4253, %v4364
        %v4366 = vpop.f32.mrf.mxu0
        %v4367 = vadd.f32 %v4255, %v4366
        %4368 = vdwg.mxu0
        %4369 = vmatprep.subr.mxu0 0.0
        %4370 = vmatpush1.msra.mxu0 0.0
        %4371 = vmatprep.subr.mxu0 0.0
        %4372 = vmatpush1.msra.mxu0 0.0
        %4373 = vmatprep.subr.mxu0 0.0
        %4374 = vmatpush1.msra.mxu0 0.0
        %4375 = vmatprep.subr.mxu0 0.0
        %4376 = vmatpush1.msra.mxu0 0.0
        %4377 = vmatprep.subr.mxu0 0.0
        %4378 = vmatpush1.msra.mxu0 0.0
        %4379 = vmatprep.subr.mxu0 0.0
        %4380 = vmatpush1.msra.mxu0 0.0
        %4381 = vmatprep.subr.mxu0 0.0
        %4382 = vmatpush1.msra.mxu0 0.0
        %4383 = vmatprep.subr.mxu0 0.0
        %4384 = vmatpush1.msra.mxu0 0.0
        %4385 = vmatprep.subr.mxu0 0.0
        %4386 = vmatpush1.msra.mxu0 0.0
        %4387 = vmatprep.subr.mxu0 0.0
        %4388 = vmatpush1.msra.mxu0 0.0
        %4389 = vmatprep.subr.mxu0 0.0
        %4390 = vmatpush1.msra.mxu0 0.0
        %4391 = vmatprep.subr.mxu0 0.0
        %4392 = vmatpush1.msra.mxu0 0.0
        %v4393 = vand.u32 %v4162, 4294901760
        %v4394 = vsub.f32 %v4162, %v4393
        %4395 = vmatprep.subr.mxu0 %v4394
        %v4396 = vand.u32 %v4161, 4294901760
        %v4397 = vsub.f32 %v4161, %v4396
        %4398 = vmatpush1.msra.mxu0 %v4397
        %v4399 = vand.u32 %v4160, 4294901760
        %v4400 = vsub.f32 %v4160, %v4399
        %4401 = vmatprep.subr.mxu0 %v4400
        %v4402 = vand.u32 %v4159, 4294901760
        %v4403 = vsub.f32 %v4159, %v4402
        %4404 = vmatpush1.msra.mxu0 %v4403
        %v4405 = vand.u32 %v4158, 4294901760
        %v4406 = vsub.f32 %v4158, %v4405
        %4407 = vmatprep.subr.mxu0 %v4406
        %v4408 = vand.u32 %v4157, 4294901760
        %v4409 = vsub.f32 %v4157, %v4408
        %4410 = vmatpush1.msra.mxu0 %v4409
        %v4411 = vand.u32 %v4156, 4294901760
        %v4412 = vsub.f32 %v4156, %v4411
        %4413 = vmatprep.subr.mxu0 %v4412
        %v4414 = vand.u32 %v4155, 4294901760
        %v4415 = vsub.f32 %v4155, %v4414
        %4416 = vmatpush1.msra.mxu0 %v4415
        %4417 = vmatprep.subr.mxu0 0.0
        %4418 = vmatpush2.msra.mxu0 0.0
        %4419 = vmatprep.subr.mxu0 0.0
        %4420 = vmatpush2.msra.mxu0 0.0
        %4421 = vmatprep.subr.mxu0 0.0
        %4422 = vmatpush2.msra.mxu0 0.0
        %4423 = vmatprep.subr.mxu0 0.0
        %4424 = vmatpush2.msra.mxu0 0.0
        %4425 = vmatprep.subr.mxu0 0.0
        %4426 = vmatpush2.msra.mxu0 0.0
        %4427 = vmatprep.subr.mxu0 0.0
        %4428 = vmatpush2.msra.mxu0 0.0
        %4429 = vmatprep.subr.mxu0 0.0
        %4430 = vmatpush2.msra.mxu0 0.0
        %4431 = vmatprep.subr.mxu0 0.0
        %4432 = vmatpush2.msra.mxu0 0.0
        %4433 = vmatprep.subr.mxu0 0.0
        %4434 = vmatpush2.msra.mxu0 0.0
        %4435 = vmatprep.subr.mxu0 0.0
        %4436 = vmatpush2.msra.mxu0 0.0
        %4437 = vmatprep.subr.mxu0 0.0
        %4438 = vmatpush2.msra.mxu0 0.0
        %4439 = vmatprep.subr.mxu0 0.0
        %4440 = vmatpush2.msra.mxu0 0.0
        %4441 = vmatprep.subr.mxu0 0.0
        %4442 = vmatpush2.msra.mxu0 0.0
        %4443 = vmatprep.subr.mxu0 0.0
        %4444 = vmatpush2.msra.mxu0 0.0
        %4445 = vmatprep.subr.mxu0 0.0
        %4446 = vmatpush2.msra.mxu0 0.0
        %4447 = vmatprep.subr.mxu0 0.0
        %4448 = vmatpush2.msra.mxu0 0.0
        %4449 = vmatprep.mubr.f32.mxu0 0.0
        %v4450 = vand.u32 %v4171, 4294901760
        %v4451 = vsub.f32 %v4171, %v4450
        %4452 = vmatmul.mubr.f32.gmra.mxu0 %v4451
        %v4453 = vpop.f32.mrf.mxu0
        %v4454 = vadd.f32 %v4365, %v4453
        %v4455 = vpop.f32.mrf.mxu0
        %v4456 = vadd.f32 %v4367, %v4455
        %4457 = vdwg.mxu0
        %4458 = vmatprep.subr.mxu0 0.0
        %4459 = vmatpush1.msra.mxu0 0.0
        %4460 = vmatprep.subr.mxu0 0.0
        %4461 = vmatpush1.msra.mxu0 0.0
        %4462 = vmatprep.subr.mxu0 0.0
        %4463 = vmatpush1.msra.mxu0 0.0
        %4464 = vmatprep.subr.mxu0 0.0
        %4465 = vmatpush1.msra.mxu0 0.0
        %4466 = vmatprep.subr.mxu0 0.0
        %4467 = vmatpush1.msra.mxu0 0.0
        %4468 = vmatprep.subr.mxu0 0.0
        %4469 = vmatpush1.msra.mxu0 0.0
        %4470 = vmatprep.subr.mxu0 0.0
        %4471 = vmatpush1.msra.mxu0 0.0
        %4472 = vmatprep.subr.mxu0 0.0
        %4473 = vmatpush1.msra.mxu0 0.0
        %4474 = vmatprep.subr.mxu0 0.0
        %4475 = vmatpush1.msra.mxu0 0.0
        %4476 = vmatprep.subr.mxu0 0.0
        %4477 = vmatpush1.msra.mxu0 0.0
        %4478 = vmatprep.subr.mxu0 0.0
        %4479 = vmatpush1.msra.mxu0 0.0
        %4480 = vmatprep.subr.mxu0 0.0
        %4481 = vmatpush1.msra.mxu0 0.0
        %v4482 = vand.u32 %v4162, 4294901760
        %4483 = vmatprep.subr.mxu0 %v4482
        %v4484 = vand.u32 %v4161, 4294901760
        %4485 = vmatpush1.msra.mxu0 %v4484
        %v4486 = vand.u32 %v4160, 4294901760
        %4487 = vmatprep.subr.mxu0 %v4486
        %v4488 = vand.u32 %v4159, 4294901760
        %4489 = vmatpush1.msra.mxu0 %v4488
        %v4490 = vand.u32 %v4158, 4294901760
        %4491 = vmatprep.subr.mxu0 %v4490
        %v4492 = vand.u32 %v4157, 4294901760
        %4493 = vmatpush1.msra.mxu0 %v4492
        %v4494 = vand.u32 %v4156, 4294901760
        %4495 = vmatprep.subr.mxu0 %v4494
        %v4496 = vand.u32 %v4155, 4294901760
        %4497 = vmatpush1.msra.mxu0 %v4496
        %4498 = vmatprep.subr.mxu0 0.0
        %4499 = vmatpush2.msra.mxu0 0.0
        %4500 = vmatprep.subr.mxu0 0.0
        %4501 = vmatpush2.msra.mxu0 0.0
        %4502 = vmatprep.subr.mxu0 0.0
        %4503 = vmatpush2.msra.mxu0 0.0
        %4504 = vmatprep.subr.mxu0 0.0
        %4505 = vmatpush2.msra.mxu0 0.0
        %4506 = vmatprep.subr.mxu0 0.0
        %4507 = vmatpush2.msra.mxu0 0.0
        %4508 = vmatprep.subr.mxu0 0.0
        %4509 = vmatpush2.msra.mxu0 0.0
        %4510 = vmatprep.subr.mxu0 0.0
        %4511 = vmatpush2.msra.mxu0 0.0
        %4512 = vmatprep.subr.mxu0 0.0
        %4513 = vmatpush2.msra.mxu0 0.0
        %4514 = vmatprep.subr.mxu0 0.0
        %4515 = vmatpush2.msra.mxu0 0.0
        %4516 = vmatprep.subr.mxu0 0.0
        %4517 = vmatpush2.msra.mxu0 0.0
        %4518 = vmatprep.subr.mxu0 0.0
        %4519 = vmatpush2.msra.mxu0 0.0
        %4520 = vmatprep.subr.mxu0 0.0
        %4521 = vmatpush2.msra.mxu0 0.0
        %4522 = vmatprep.subr.mxu0 0.0
        %4523 = vmatpush2.msra.mxu0 0.0
        %4524 = vmatprep.subr.mxu0 0.0
        %4525 = vmatpush2.msra.mxu0 0.0
        %4526 = vmatprep.subr.mxu0 0.0
        %4527 = vmatpush2.msra.mxu0 0.0
        %4528 = vmatprep.subr.mxu0 0.0
        %4529 = vmatpush2.msra.mxu0 0.0
        %4530 = vmatprep.mubr.f32.mxu0 0.0
        %v4531 = vand.u32 %v4171, 4294901760
        %v4532 = vsub.f32 %v4171, %v4531
        %v4533 = vand.u32 %v4532, 4294901760
        %4534 = vmatmul.mubr.f32.gmra.mxu0 %v4533
        %v4535 = vpop.f32.mrf.mxu0
        %v4536 = vadd.f32 %v4454, %v4535
        %v4537 = vpop.f32.mrf.mxu0
        %v4538 = vadd.f32 %v4456, %v4537
        %4539 = vdwg.mxu0
        %4540 = vmatprep.subr.mxu0 0.0
        %4541 = vmatpush1.msra.mxu0 0.0
        %4542 = vmatprep.subr.mxu0 0.0
        %4543 = vmatpush1.msra.mxu0 0.0
        %4544 = vmatprep.subr.mxu0 0.0
        %4545 = vmatpush1.msra.mxu0 0.0
        %4546 = vmatprep.subr.mxu0 0.0
        %4547 = vmatpush1.msra.mxu0 0.0
        %4548 = vmatprep.subr.mxu0 0.0
        %4549 = vmatpush1.msra.mxu0 0.0
        %4550 = vmatprep.subr.mxu0 0.0
        %4551 = vmatpush1.msra.mxu0 0.0
        %4552 = vmatprep.subr.mxu0 0.0
        %4553 = vmatpush1.msra.mxu0 0.0
        %4554 = vmatprep.subr.mxu0 0.0
        %4555 = vmatpush1.msra.mxu0 0.0
        %4556 = vmatprep.subr.mxu0 0.0
        %4557 = vmatpush1.msra.mxu0 0.0
        %4558 = vmatprep.subr.mxu0 0.0
        %4559 = vmatpush1.msra.mxu0 0.0
        %4560 = vmatprep.subr.mxu0 0.0
        %4561 = vmatpush1.msra.mxu0 0.0
        %4562 = vmatprep.subr.mxu0 0.0
        %4563 = vmatpush1.msra.mxu0 0.0
        %v4564 = vand.u32 %v4162, 4294901760
        %v4565 = vsub.f32 %v4162, %v4564
        %v4566 = vand.u32 %v4565, 4294901760
        %4567 = vmatprep.subr.mxu0 %v4566
        %v4568 = vand.u32 %v4161, 4294901760
        %v4569 = vsub.f32 %v4161, %v4568
        %v4570 = vand.u32 %v4569, 4294901760
        %4571 = vmatpush1.msra.mxu0 %v4570
        %v4572 = vand.u32 %v4160, 4294901760
        %v4573 = vsub.f32 %v4160, %v4572
        %v4574 = vand.u32 %v4573, 4294901760
        %4575 = vmatprep.subr.mxu0 %v4574
        %v4576 = vand.u32 %v4159, 4294901760
        %v4577 = vsub.f32 %v4159, %v4576
        %v4578 = vand.u32 %v4577, 4294901760
        %4579 = vmatpush1.msra.mxu0 %v4578
        %v4580 = vand.u32 %v4158, 4294901760
        %v4581 = vsub.f32 %v4158, %v4580
        %v4582 = vand.u32 %v4581, 4294901760
        %4583 = vmatprep.subr.mxu0 %v4582
        %v4584 = vand.u32 %v4157, 4294901760
        %v4585 = vsub.f32 %v4157, %v4584
        %v4586 = vand.u32 %v4585, 4294901760
        %4587 = vmatpush1.msra.mxu0 %v4586
        %v4588 = vand.u32 %v4156, 4294901760
        %v4589 = vsub.f32 %v4156, %v4588
        %v4590 = vand.u32 %v4589, 4294901760
        %4591 = vmatprep.subr.mxu0 %v4590
        %v4592 = vand.u32 %v4155, 4294901760
        %v4593 = vsub.f32 %v4155, %v4592
        %v4594 = vand.u32 %v4593, 4294901760
        %4595 = vmatpush1.msra.mxu0 %v4594
        %4596 = vmatprep.subr.mxu0 0.0
        %4597 = vmatpush2.msra.mxu0 0.0
        %4598 = vmatprep.subr.mxu0 0.0
        %4599 = vmatpush2.msra.mxu0 0.0
        %4600 = vmatprep.subr.mxu0 0.0
        %4601 = vmatpush2.msra.mxu0 0.0
        %4602 = vmatprep.subr.mxu0 0.0
        %4603 = vmatpush2.msra.mxu0 0.0
        %4604 = vmatprep.subr.mxu0 0.0
        %4605 = vmatpush2.msra.mxu0 0.0
        %4606 = vmatprep.subr.mxu0 0.0
        %4607 = vmatpush2.msra.mxu0 0.0
        %4608 = vmatprep.subr.mxu0 0.0
        %4609 = vmatpush2.msra.mxu0 0.0
        %4610 = vmatprep.subr.mxu0 0.0
        %4611 = vmatpush2.msra.mxu0 0.0
        %4612 = vmatprep.subr.mxu0 0.0
        %4613 = vmatpush2.msra.mxu0 0.0
        %4614 = vmatprep.subr.mxu0 0.0
        %4615 = vmatpush2.msra.mxu0 0.0
        %4616 = vmatprep.subr.mxu0 0.0
        %4617 = vmatpush2.msra.mxu0 0.0
        %4618 = vmatprep.subr.mxu0 0.0
        %4619 = vmatpush2.msra.mxu0 0.0
        %4620 = vmatprep.subr.mxu0 0.0
        %4621 = vmatpush2.msra.mxu0 0.0
        %4622 = vmatprep.subr.mxu0 0.0
        %4623 = vmatpush2.msra.mxu0 0.0
        %4624 = vmatprep.subr.mxu0 0.0
        %4625 = vmatpush2.msra.mxu0 0.0
        %4626 = vmatprep.subr.mxu0 0.0
        %4627 = vmatpush2.msra.mxu0 0.0
        %4628 = vmatprep.mubr.f32.mxu0 0.0
        %v4629 = vand.u32 %v4171, 4294901760
        %4630 = vmatmul.mubr.f32.gmra.mxu0 %v4629
        %v4631 = vpop.f32.mrf.mxu0
        %v4632 = vadd.f32 %v4536, %v4631
        %v4633 = vpop.f32.mrf.mxu0
        %v4634 = vadd.f32 %v4538, %v4633
        %4635 = vdwg.mxu0
        %4636 = vmatprep.subr.mxu0 0.0
        %4637 = vmatpush1.msra.mxu0 0.0
        %4638 = vmatprep.subr.mxu0 0.0
        %4639 = vmatpush1.msra.mxu0 0.0
        %4640 = vmatprep.subr.mxu0 0.0
        %4641 = vmatpush1.msra.mxu0 0.0
        %4642 = vmatprep.subr.mxu0 0.0
        %4643 = vmatpush1.msra.mxu0 0.0
        %4644 = vmatprep.subr.mxu0 0.0
        %4645 = vmatpush1.msra.mxu0 0.0
        %4646 = vmatprep.subr.mxu0 0.0
        %4647 = vmatpush1.msra.mxu0 0.0
        %4648 = vmatprep.subr.mxu0 0.0
        %4649 = vmatpush1.msra.mxu0 0.0
        %4650 = vmatprep.subr.mxu0 0.0
        %4651 = vmatpush1.msra.mxu0 0.0
        %4652 = vmatprep.subr.mxu0 0.0
        %4653 = vmatpush1.msra.mxu0 0.0
        %4654 = vmatprep.subr.mxu0 0.0
        %4655 = vmatpush1.msra.mxu0 0.0
        %4656 = vmatprep.subr.mxu0 0.0
        %4657 = vmatpush1.msra.mxu0 0.0
        %4658 = vmatprep.subr.mxu0 0.0
        %4659 = vmatpush1.msra.mxu0 0.0
        %v4660 = vand.u32 %v4162, 4294901760
        %4661 = vmatprep.subr.mxu0 %v4660
        %v4662 = vand.u32 %v4161, 4294901760
        %4663 = vmatpush1.msra.mxu0 %v4662
        %v4664 = vand.u32 %v4160, 4294901760
        %4665 = vmatprep.subr.mxu0 %v4664
        %v4666 = vand.u32 %v4159, 4294901760
        %4667 = vmatpush1.msra.mxu0 %v4666
        %v4668 = vand.u32 %v4158, 4294901760
        %4669 = vmatprep.subr.mxu0 %v4668
        %v4670 = vand.u32 %v4157, 4294901760
        %4671 = vmatpush1.msra.mxu0 %v4670
        %v4672 = vand.u32 %v4156, 4294901760
        %4673 = vmatprep.subr.mxu0 %v4672
        %v4674 = vand.u32 %v4155, 4294901760
        %4675 = vmatpush1.msra.mxu0 %v4674
        %4676 = vmatprep.subr.mxu0 0.0
        %4677 = vmatpush2.msra.mxu0 0.0
        %4678 = vmatprep.subr.mxu0 0.0
        %4679 = vmatpush2.msra.mxu0 0.0
        %4680 = vmatprep.subr.mxu0 0.0
        %4681 = vmatpush2.msra.mxu0 0.0
        %4682 = vmatprep.subr.mxu0 0.0
        %4683 = vmatpush2.msra.mxu0 0.0
        %4684 = vmatprep.subr.mxu0 0.0
        %4685 = vmatpush2.msra.mxu0 0.0
        %4686 = vmatprep.subr.mxu0 0.0
        %4687 = vmatpush2.msra.mxu0 0.0
        %4688 = vmatprep.subr.mxu0 0.0
        %4689 = vmatpush2.msra.mxu0 0.0
        %4690 = vmatprep.subr.mxu0 0.0
        %4691 = vmatpush2.msra.mxu0 0.0
        %4692 = vmatprep.subr.mxu0 0.0
        %4693 = vmatpush2.msra.mxu0 0.0
        %4694 = vmatprep.subr.mxu0 0.0
        %4695 = vmatpush2.msra.mxu0 0.0
        %4696 = vmatprep.subr.mxu0 0.0
        %4697 = vmatpush2.msra.mxu0 0.0
        %4698 = vmatprep.subr.mxu0 0.0
        %4699 = vmatpush2.msra.mxu0 0.0
        %4700 = vmatprep.subr.mxu0 0.0
        %4701 = vmatpush2.msra.mxu0 0.0
        %4702 = vmatprep.subr.mxu0 0.0
        %4703 = vmatpush2.msra.mxu0 0.0
        %4704 = vmatprep.subr.mxu0 0.0
        %4705 = vmatpush2.msra.mxu0 0.0
        %4706 = vmatprep.subr.mxu0 0.0
        %4707 = vmatpush2.msra.mxu0 0.0
        %4708 = vmatprep.mubr.f32.mxu0 0.0
        %v4709 = vand.u32 %v4171, 4294901760
        %4710 = vmatmul.mubr.f32.gmra.mxu0 %v4709
        %v4711 = vpop.f32.mrf.mxu0
        %v4712 = vadd.f32 %v4632, %v4711
        %v4713 = vpop.f32.mrf.mxu0
        %v4714 = vadd.f32 %v4634, %v4713
        %4715 = vdwg.mxu0
        %v4716 = vmul.f32 %v4712, %v344
        %v4717 = vmul.f32 %v4714, %v345
        %v4720 = vcombine.low %v4716, %v4717
        %4722 = vst [vmem:[%s342] sm:$0xff] %v4720
        %s4723 = sand.u32 %s202, 1
        %s4724 = sand.u32 %s202, 1
        %s4725 = smul.addr %s4724, 128
        %s4726 = scalar_lea.vmem [#allocation2], %s4725
        %s4727 = smul.u32 2, %s21
        %p4728 = scmp.lt.s32.totalorder %s4727, 3
        %s4729 = scalar_select %p4728, %s4727, 3
        %s4730 = smul.addr %s4729, 4
        %s4731 = scalar_lea.vmem %s9, %s4730
        // Predicated region
        $region53: #{lyapunov_forward.1} parent=51 // pred_check
          %p4732 = pneg %p212
        $region54: #{lyapunov_forward.1} parent=51 // pred_check_branch
          %4734 = sbr.rel (%p4732) target = $region56
        $region55: #{lyapunov_forward.1} parent=51 // pred_region
          %s4735 = smul.u32 2, %s21
          %s4736 = smul.addr %s4735, 8
          %s4737 = scalar_lea.vmem %s8, %s4736
          // Predicated region
          $region57: #{lyapunov_forward.1} parent=55 // pred_check
            _
          $region58: #{lyapunov_forward.1} parent=55 // pred_check_branch
            %4739 = sbr.rel (0) target = $region60
          $region59: #{lyapunov_forward.1} parent=55 // pred_region
            // Predicated region
            $region61: #{lyapunov_forward.1} parent=59 // pred_check
              _
            $region62: #{lyapunov_forward.1} parent=59 // pred_check_branch
              %4741 = sbr.rel (0) target = $region64
            $region63: #{lyapunov_forward.1} parent=59 // pred_region
              loop: start=0, step=1, limit=1
              $region65: #{lyapunov_forward.1} parent=63 // loop_pre_header
                _
              $region66: #{lyapunov_forward.1} parent=63 // loop_header
                %s4743 = sphi 0, %s4747
                %p4744 = scmp.ge.s32.totalorder %s4743, 1
                %s4748 = sphi %s4726, %s4726
                %s4749 = sphi %s4737, %s4737
              $region67: #{lyapunov_forward.1} parent=63 // loop_header_branch
                %4746 = sbr.rel (%p4744) target = $region71
              $region68: #{lyapunov_forward.1} parent=63 // loop_body
                %v4750 = vld [vmem:[%s4748] sm:$0xff]
                %4751 = vst [vmem:[%s4749] sm:$0xff] %v4750
                %v4752 = vld [vmem:[%s4748 + $0x8] sm:$0xff]
                %4753 = vst [vmem:[%s4749 + $0x8] sm:$0xff] %v4752
                %v4754 = vld [vmem:[%s4748 + $0x10] sm:$0xff]
                %4755 = vst [vmem:[%s4749 + $0x20] sm:$0xff] %v4754
                %v4756 = vld [vmem:[%s4748 + $0x18] sm:$0xff]
                %4757 = vst [vmem:[%s4749 + $0x28] sm:$0xff] %v4756
                %v4758 = vld [vmem:[%s4748 + $0x20] sm:$0xff]
                %4759 = vst [vmem:[%s4749 + $0x40] sm:$0xff] %v4758
                %v4760 = vld [vmem:[%s4748 + $0x28] sm:$0xff]
                %4761 = vst [vmem:[%s4749 + $0x48] sm:$0xff] %v4760
                %v4762 = vld [vmem:[%s4748 + $0x30] sm:$0xff]
                %4763 = vst [vmem:[%s4749 + $0x60] sm:$0xff] %v4762
                %v4764 = vld [vmem:[%s4748 + $0x38] sm:$0xff]
                %4765 = vst [vmem:[%s4749 + $0x68] sm:$0xff] %v4764
                %v4766 = vld [vmem:[%s4748 + $0x40] sm:$0xff]
                %4767 = vst [vmem:[%s4749 + $0x80] sm:$0xff] %v4766
                %v4768 = vld [vmem:[%s4748 + $0x48] sm:$0xff]
                %4769 = vst [vmem:[%s4749 + $0x88] sm:$0xff] %v4768
                %v4770 = vld [vmem:[%s4748 + $0x50] sm:$0xff]
                %4771 = vst [vmem:[%s4749 + $0xa0] sm:$0xff] %v4770
                %v4772 = vld [vmem:[%s4748 + $0x58] sm:$0xff]
                %4773 = vst [vmem:[%s4749 + $0xa8] sm:$0xff] %v4772
                %v4774 = vld [vmem:[%s4748 + $0x60] sm:$0xff]
                %4775 = vst [vmem:[%s4749 + $0xc0] sm:$0xff] %v4774
                %v4776 = vld [vmem:[%s4748 + $0x68] sm:$0xff]
                %4777 = vst [vmem:[%s4749 + $0xc8] sm:$0xff] %v4776
                %v4778 = vld [vmem:[%s4748 + $0x70] sm:$0xff]
                %4779 = vst [vmem:[%s4749 + $0xe0] sm:$0xff] %v4778
                %v4780 = vld [vmem:[%s4748 + $0x78] sm:$0xff]
                %4781 = vst [vmem:[%s4749 + $0xe8] sm:$0xff] %v4780
              $region69: #{lyapunov_forward.1} parent=63 // loop_footer
                %s4747 = sadd.s32 1, %s4743
              $region70: #{lyapunov_forward.1} parent=63 // loop_footer_branch
                %4742 = sbr.rel target = $region66
              $region71: #{lyapunov_forward.1} parent=63 // loop_exit
                _
            $region64: #{lyapunov_forward.1} parent=59 // pred_fallthru
              _
            // Predicated region
            $region72: #{lyapunov_forward.1} parent=59 // pred_check
              _
            $region73: #{lyapunov_forward.1} parent=59 // pred_check_branch
              %4783 = sbr.rel target = $region75
            $region74: #{lyapunov_forward.1} parent=59 // pred_region
              _
            $region75: #{lyapunov_forward.1} parent=59 // pred_fallthru
              _
          $region60: #{lyapunov_forward.1} parent=55 // pred_fallthru
            _
          %4784 = vnop
        $region56: #{lyapunov_forward.1} parent=51 // pred_fallthru
          _
        // Predicated region
        $region76: #{lyapunov_forward.1} parent=51 // pred_check
          %p4785 = pneg %p238
        $region77: #{lyapunov_forward.1} parent=51 // pred_check_branch
          %4787 = sbr.rel (%p4785) target = $region79
        $region78: #{lyapunov_forward.1} parent=51 // pred_region
          %s4788 = smul.u32 2, %s21
        $region79: #{lyapunov_forward.1} parent=51 // pred_fallthru
          _
      $region52: #{lyapunov_forward.1} parent=5 // pred_fallthru
        _
      %p4789 = scmp.le.s32.totalorder 2, %s16
      // Predicated region
      $region80: #{lyapunov_forward.1} parent=5 // pred_check
        %p4790 = pneg %p4789
      $region81: #{lyapunov_forward.1} parent=5 // pred_check_branch
        %4792 = sbr.rel (%p4790) target = $region83
      $region82: #{lyapunov_forward.1} parent=5 // pred_region
        %s4793 = ssub.s32 %s16, 2
        // Predicated region
        $region84: #{lyapunov_forward.1} parent=82 // pred_check
          %p4794 = pneg %p218
        $region85: #{lyapunov_forward.1} parent=82 // pred_check_branch
          %4796 = sbr.rel (%p4794) target = $region87
        $region86: #{lyapunov_forward.1} parent=82 // pred_region
          %s4797 = sand.u32 %s203, 1
          %s4798 = sand.u32 %s203, 1
          %s4799 = smul.addr %s4798, 128
          %s4800 = scalar_lea.vmem [#allocation2], %s4799
        $region87: #{lyapunov_forward.1} parent=82 // pred_fallthru
          _
        // Predicated region
        $region88: #{lyapunov_forward.1} parent=82 // pred_check
          %p4801 = pneg %p244
        $region89: #{lyapunov_forward.1} parent=82 // pred_check_branch
          %4803 = sbr.rel (%p4801) target = $region91
        $region90: #{lyapunov_forward.1} parent=82 // pred_region
          %s4804 = smul.u32 2, %s22
          %p4805 = scmp.lt.s32.totalorder %s4804, 3
          %s4806 = scalar_select %p4805, %s4804, 3
          %s4807 = smul.addr %s4806, 4
          %s4808 = scalar_lea.vmem %s9, %s4807
        $region91: #{lyapunov_forward.1} parent=82 // pred_fallthru
          _
      $region83: #{lyapunov_forward.1} parent=5 // pred_fallthru
        _
    $region6: #{lyapunov_forward.1} parent=1 // loop_footer
      %s20 = sadd.s32 1, %s16
    $region7: #{lyapunov_forward.1} parent=1 // loop_footer_branch
      %15 = sbr.rel target = $region3
    $region8: #{lyapunov_forward.1} parent=1 // loop_exit
      _

</llo_original>
